<compile_context>
chip_gen: v7x
topology: tpu7x:2x2x1
jax: 0.10.0
libtpu: 0.0.40
codegen_flags: <defaults>
</compile_context>

<pallas_src>
import functools

import jax
import jax.numpy as jnp
from jax.experimental import pallas as pl
from jax.experimental.pallas import tpu as pltpu


# ----------------------------------------------------------------------------
# BlockSpec helpers
# ----------------------------------------------------------------------------
def _const_block_spec(shape, single_buffer):
    """Grid-invariant block. Single-buffered (halves VMEM) when requested."""
    index_map = lambda g: (0,) * len(shape)
    if single_buffer:
        # pipeline_mode is the documented way to control buffer depth; fall back
        # cleanly if this jax version's BlockSpec does not take the kwarg.
        try:
            return pl.BlockSpec(shape, index_map, pipeline_mode=pl.Buffered(1))
        except TypeError:
            return pl.BlockSpec(shape, index_map)
    return pl.BlockSpec(shape, index_map)


def _vmem_limit_bytes(TT, B, E, H):
    """Explicit scoped-VMEM budget from the actual block/buffer sums (+headroom)."""
    f32, bf16 = 4, 2
    emb_blocks = 2 * 2 * TT * B * E * bf16                      # 2 streams x dbl buffer
    weights = (2 * E * 4 * H + 2 * H * 4 * H + 2 * 2 * H * H) * bf16 * 2   # conservative
    biases = (2 * 4 * H + 2 * H) * f32 * 2
    hs_out = 2 * 2 * TT * B * H * f32                           # 2 streams x dbl buffer
    fc_out = 2 * 2 * B * H * f32
    scratch = 4 * B * H * f32
    total = emb_blocks + weights + biases + hs_out + fc_out + scratch
    # 2x headroom for compiler temporaries; floor 16 MiB, cap at v7x physical 64 MiB.
    return int(max(16 << 20, min(2 * total + (4 << 20), 64 << 20)))


# ----------------------------------------------------------------------------
# Fused bidirectional-LSTM kernel (input projection + recurrence + FC heads).
#   emb_f_ref / emb_b_ref : (TT, B, E) bf16 embedding blocks; the backward
#                           stream's index_map delivers block G-1-g and it is
#                           reversed again inside the block.
#   wih_* (E,4H) bf16, whh_* (H,4H) bf16, b_* (1,4H) f32  — gate order [i,f,o,g].
#   fc_*_w (2H,H) bf16 pre-transposed, fc_*_b (1,H) f32.
# Outputs:
#   hs_f / hs_b : (T, B, H) per-direction hidden states, written as tiled
#                 (TT, B, H) blocks (lane-dense, pipelined writeback).
#   hfc / cfc   : (B, H) FC-head results, written at the last grid step.
# ----------------------------------------------------------------------------
def _encoder_kernel(emb_f_ref, emb_b_ref,
                    wih_f_ref, wih_b_ref, b_f_ref, b_b_ref,
                    whh_f_ref, whh_b_ref,
                    fc_h_w_ref, fc_h_b_ref, fc_c_w_ref, fc_c_b_ref,
                    hs_f_ref, hs_b_ref, hfc_ref, cfc_ref,
                    hf, cf, hb, cb, *, unroll):
    g = pl.program_id(0)
    G = pl.num_programs(0)
    TT, B, _ = emb_f_ref.shape
    H = whh_f_ref.shape[0]

    @pl.when(g == 0)
    def _():
        hf[...] = jnp.zeros_like(hf)
        cf[...] = jnp.zeros_like(cf)
        hb[...] = jnp.zeros_like(hb)
        cb[...] = jnp.zeros_like(cb)

    # Hoisted grid-step-invariant loads / broadcasts (no per-iteration broadcast_in_dim).
    wih_f = wih_f_ref[...]                                   # (E, 4H) bf16
    wih_b = wih_b_ref[...]
    whh_f = whh_f_ref[...]                                   # (H, 4H) bf16
    whh_b = whh_b_ref[...]
    b_f = jnp.broadcast_to(b_f_ref[...], (B, 4 * H))         # (B, 4H) f32
    b_b = jnp.broadcast_to(b_b_ref[...], (B, 4 * H))

    def lstm_update(gates, c):
        # Gate layout [i | f | o | g]: one contiguous sigmoid slab + one tanh slab.
        sig = jax.nn.sigmoid(gates[:, 0:3 * H])
        i = sig[:, 0 * H:1 * H]
        f = sig[:, 1 * H:2 * H]
        o = sig[:, 2 * H:3 * H]
        gg = jnp.tanh(gates[:, 3 * H:4 * H])
        c_new = f * c + i * gg
        h_new = o * jnp.tanh(c_new)
        return h_new, c_new

    def step(tt, carry):
        h_f, c_f, h_b, c_b = carry
        x_f = emb_f_ref[tt]                  # (B, E) bf16
        x_b = emb_b_ref[TT - 1 - tt]         # (B, E) bf16, reversed in-block

        # Fused input projection + recurrent projection (bf16 MXU, f32 accumulate).
        gates_f = (jnp.dot(x_f, wih_f, preferred_element_type=jnp.float32)
                   + jnp.dot(h_f.astype(jnp.bfloat16), whh_f,
                             preferred_element_type=jnp.float32) + b_f)
        gates_b = (jnp.dot(x_b, wih_b, preferred_element_type=jnp.float32)
                   + jnp.dot(h_b.astype(jnp.bfloat16), whh_b,
                             preferred_element_type=jnp.float32) + b_b)

        h_f, c_f = lstm_update(gates_f, c_f)
        h_b, c_b = lstm_update(gates_b, c_b)

        # Lane-dense full-row stores into the tiled per-direction output blocks.
        hs_f_ref[tt] = h_f
        hs_b_ref[TT - 1 - tt] = h_b
        return h_f, c_f, h_b, c_b

    carry0 = (hf[...], cf[...], hb[...], cb[...])
    h_f, c_f, h_b, c_b = jax.lax.fori_loop(0, TT, step, carry0, unroll=unroll)

    hf[...] = h_f
    cf[...] = c_f
    hb[...] = h_b
    cb[...] = c_b

    @pl.when(g == G - 1)
    def _():
        # Fused FC heads on the final states (still resident). Weights are
        # pre-transposed (2H, H); split rows to avoid a lane concat.
        bf = jnp.bfloat16
        hfc_ref[...] = (
            jnp.dot(h_f.astype(bf), fc_h_w_ref[0:H, :],
                    preferred_element_type=jnp.float32)
            + jnp.dot(h_b.astype(bf), fc_h_w_ref[H:2 * H, :],
                      preferred_element_type=jnp.float32)
            + fc_h_b_ref[...])
        cfc_ref[...] = (
            jnp.dot(c_f.astype(bf), fc_c_w_ref[0:H, :],
                    preferred_element_type=jnp.float32)
            + jnp.dot(c_b.astype(bf), fc_c_w_ref[H:2 * H, :],
                      preferred_element_type=jnp.float32)
            + fc_c_b_ref[...])


def _bilstm_call(emb_bf16, kp, time_block, single_buffer_weights):
    T, B, E = emb_bf16.shape
    H = kp["whh_f"].shape[0]

    TT = min(time_block, T)
    while T % TT:               # largest divisor of T not exceeding time_block
        TT -= 1
    G = T // TT
    unroll = TT if TT <= 8 else 8   # bounded unroll: LLO visibility w/o code bloat

    const = functools.partial(_const_block_spec, single_buffer=single_buffer_weights)

    grid_spec = pltpu.PrefetchScalarGridSpec(
        num_scalar_prefetch=0,
        grid=(G,),
        in_specs=[
            pl.BlockSpec((TT, B, E), lambda g: (g, 0, 0)),           # emb, forward order
            pl.BlockSpec((TT, B, E), lambda g: (G - 1 - g, 0, 0)),   # emb, backward order
            const((E, 4 * H)), const((E, 4 * H)),                    # Wih_f, Wih_b (bf16)
            const((1, 4 * H)), const((1, 4 * H)),                    # b_f, b_b (f32)
            const((H, 4 * H)), const((H, 4 * H)),                    # Whh_f, Whh_b (bf16)
            const((2 * H, H)), const((1, H)),                        # fc_hidden w / b
            const((2 * H, H)), const((1, H)),                        # fc_cell   w / b
        ],
        out_specs=[
            pl.BlockSpec((TT, B, H), lambda g: (g, 0, 0)),           # hs_f (tiled writeback)
            pl.BlockSpec((TT, B, H), lambda g: (G - 1 - g, 0, 0)),   # hs_b (tiled writeback)
            pl.BlockSpec((B, H), lambda g: (0, 0)),                  # hidden_fc
            pl.BlockSpec((B, H), lambda g: (0, 0)),                  # cell_fc
        ],
        scratch_shapes=[pltpu.VMEM((B, H), jnp.float32)] * 4,        # h/c carries, both dirs
    )

    out_shapes = (
        jax.ShapeDtypeStruct((T, B, H), jnp.float32),
        jax.ShapeDtypeStruct((T, B, H), jnp.float32),
        jax.ShapeDtypeStruct((B, H), jnp.float32),
        jax.ShapeDtypeStruct((B, H), jnp.float32),
    )

    return pl.pallas_call(
        functools.partial(_encoder_kernel, unroll=unroll),
        out_shape=out_shapes,
        grid_spec=grid_spec,
        compiler_params=pltpu.CompilerParams(
            dimension_semantics=("arbitrary",),          # sequential recurrence
            vmem_limit_bytes=_vmem_limit_bytes(TT, B, E, H)),
    )(emb_bf16, emb_bf16,
      kp["wih_f"], kp["wih_b"], kp["b_f"], kp["b_b"],
      kp["whh_f"], kp["whh_b"],
      kp["fc_h_w"], kp["fc_h_b"], kp["fc_c_w"], kp["fc_c_b"])


def bilstm_fused(emb_bf16, kp, time_block):
    try:
        return _bilstm_call(emb_bf16, kp, time_block, single_buffer_weights=True)
    except Exception:
        # pipeline_mode=pl.Buffered(1) not supported on this jax build — retry
        # with default (double-buffered) constant weight blocks.
        return _bilstm_call(emb_bf16, kp, time_block, single_buffer_weights=False)


# ----------------------------------------------------------------------------
# Encoder forward (glue in plain JAX: embedding gather, padding, lane concat)
# ----------------------------------------------------------------------------
def prepare_kernel_params(params):
    """Pre-cast matmul weights to bf16 once (accumulation stays f32 in-kernel)."""
    bf = jnp.bfloat16
    return {
        "embedding": params["embedding"],
        "wih_f": params["wih_f"].astype(bf), "wih_b": params["wih_b"].astype(bf),
        "whh_f": params["whh_f"].astype(bf), "whh_b": params["whh_b"].astype(bf),
        "b_f": params["b_f"], "b_b": params["b_b"],
        "fc_h_w": params["fc_h_w"].astype(bf), "fc_h_b": params["fc_h_b"],
        "fc_c_w": params["fc_c_w"].astype(bf), "fc_c_b": params["fc_c_b"],
    }


def encoder_forward(input_x, kernel_params, time_block=4):
    T, B = input_x.shape

    # Pad batch up to the sublane width (8) so (B, ·) ops/stores are unmasked.
    Bp = max(8, ((B + 7) // 8) * 8)
    if Bp != B:
        input_x = jnp.pad(input_x, ((0, 0), (0, Bp - B)))

    # Embedding lookup (gather) + dropout(identity, eval mode) — plain-JAX glue.
    emb = jnp.take(kernel_params["embedding"], input_x, axis=0)   # (T, Bp, E) f32
    emb = emb.astype(jnp.bfloat16)                                # bf16 activations

    hs_f, hs_b, hfc, cfc = bilstm_fused(emb, kernel_params, time_block)

    # Trivial layout pass: lane-concat the two directions, drop batch padding.
    encoder_states = jnp.concatenate([hs_f[:, :B], hs_b[:, :B]], axis=-1)   # (T, B, 2H)
    return encoder_states, hfc[None, :B], cfc[None, :B]          # (1, B, H) each


# ----------------------------------------------------------------------------
# Pure-JAX reference (f32 throughout) for validation
# ----------------------------------------------------------------------------
def encoder_reference(input_x, params):
    emb = jnp.take(params["embedding"], input_x, axis=0)
    T, B, _ = emb.shape
    H = params["whh_f"].shape[0]

    def run_dir(xs, wih, whh, b):
        def step(carry, x):
            h, c = carry
            gates = x @ wih + h @ whh + b          # (B, 4H), gate order [i,f,o,g]
            i = jax.nn.sigmoid(gates[:, 0 * H:1 * H])
            f = jax.nn.sigmoid(gates[:, 1 * H:2 * H])
            o = jax.nn.sigmoid(gates[:, 2 * H:3 * H])
            g = jnp.tanh(gates[:, 3 * H:4 * H])
            c = f * c + i * g
            h = o * jnp.tanh(c)
            return (h, c), h
        (h, c), hs = jax.lax.scan(step,
                                  (jnp.zeros((B, H)), jnp.zeros((B, H))), xs)
        return hs, h, c

    hs_f, h_f, c_f = run_dir(emb, params["wih_f"], params["whh_f"], params["b_f"])
    hs_b, h_b, c_b = run_dir(emb[::-1], params["wih_b"], params["whh_b"], params["b_b"])
    hs_b = hs_b[::-1]

    encoder_states = jnp.concatenate([hs_f, hs_b], axis=-1)
    h_cat = jnp.concatenate([h_f, h_b], axis=-1)
    c_cat = jnp.concatenate([c_f, c_b], axis=-1)
    hidden_fc = (h_cat @ params["fc_h_w"] + params["fc_h_b"])[None]
    cell_fc = (c_cat @ params["fc_c_w"] + params["fc_c_b"])[None]
    return encoder_states, hidden_fc, cell_fc


# ----------------------------------------------------------------------------
# Deterministic parameter init
#   LSTM weights stored gate-fused ([i|f|o|g]) and pre-transposed to (in, 4H);
#   Linear-head weights pre-transposed to (2H, H).
# ----------------------------------------------------------------------------
def init_params(key, vocab, emb_dim, hidden):
    ks = jax.random.split(key, 11)
    s = 0.1
    n = lambda k, shp: s * jax.random.normal(k, shp, jnp.float32)
    return {
        "embedding": n(ks[0], (vocab, emb_dim)),
        "wih_f": n(ks[1], (emb_dim, 4 * hidden)),
        "whh_f": n(ks[2], (hidden, 4 * hidden)),
        "b_f":   n(ks[3], (1, 4 * hidden)),
        "wih_b": n(ks[4], (emb_dim, 4 * hidden)),
        "whh_b": n(ks[5], (hidden, 4 * hidden)),
        "b_b":   n(ks[6], (1, 4 * hidden)),
        "fc_h_w": n(ks[7], (2 * hidden, hidden)),   # (in, out) — pre-transposed
        "fc_h_b": n(ks[8], (1, hidden)),
        "fc_c_w": n(ks[9], (2 * hidden, hidden)),
        "fc_c_b": n(ks[10], (1, hidden)),
    }


if __name__ == "__main__":
    vocab, emb_dim, hidden = 32, 32, 32
    seq_len, batch = 8, 2

    key = jax.random.PRNGKey(0)
    k_tok, k_par = jax.random.split(key)
    input_x = jax.random.randint(k_tok, (seq_len, batch), 0, vocab, dtype=jnp.int32)
    params = init_params(k_par, vocab, emb_dim, hidden)
    kparams = prepare_kernel_params(params)

    enc_states, hidden_fc, cell_fc = jax.block_until_ready(
        encoder_forward(input_x, kparams, time_block=4))

    ref_states, ref_hidden, ref_cell = encoder_reference(input_x, params)

    assert enc_states.shape == (seq_len, batch, 2 * hidden)
    assert hidden_fc.shape == (1, batch, hidden)
    assert cell_fc.shape == (1, batch, hidden)
    # bf16 matmul operands (f32 accumulation) vs f32 reference => looser tolerance.
    assert jnp.allclose(enc_states, ref_states, atol=2e-2, rtol=2e-2)
    assert jnp.allclose(hidden_fc, ref_hidden, atol=2e-2, rtol=2e-2)
    assert jnp.allclose(cell_fc, ref_cell, atol=2e-2, rtol=2e-2)

    print("KERNEL_OK")
</pallas_src>

<mosaic_0001>
module attributes {stable_mosaic.version = 11 : i64} {
  func.func @_encoder_kernel(%arg0: i32, %arg1: memref<4x8x32xbf16, #tpu.memory_space<vmem>>, %arg2: memref<4x8x32xbf16, #tpu.memory_space<vmem>>, %arg3: memref<32x128xbf16, #tpu.memory_space<vmem>>, %arg4: memref<32x128xbf16, #tpu.memory_space<vmem>>, %arg5: memref<1x128xf32, #tpu.memory_space<vmem>>, %arg6: memref<1x128xf32, #tpu.memory_space<vmem>>, %arg7: memref<32x128xbf16, #tpu.memory_space<vmem>>, %arg8: memref<32x128xbf16, #tpu.memory_space<vmem>>, %arg9: memref<64x32xbf16, #tpu.memory_space<vmem>>, %arg10: memref<1x32xf32, #tpu.memory_space<vmem>>, %arg11: memref<64x32xbf16, #tpu.memory_space<vmem>>, %arg12: memref<1x32xf32, #tpu.memory_space<vmem>>, %arg13: memref<4x8x32xf32, #tpu.memory_space<vmem>>, %arg14: memref<4x8x32xf32, #tpu.memory_space<vmem>>, %arg15: memref<8x32xf32, #tpu.memory_space<vmem>>, %arg16: memref<8x32xf32, #tpu.memory_space<vmem>>, %arg17: memref<8x32xf32, #tpu.memory_space<vmem>>, %arg18: memref<8x32xf32, #tpu.memory_space<vmem>>, %arg19: memref<8x32xf32, #tpu.memory_space<vmem>>, %arg20: memref<8x32xf32, #tpu.memory_space<vmem>>) attributes {dimension_semantics = [#tpu.dimension_semantics<arbitrary>], iteration_bounds = array<i64: 2>, scalar_prefetch = 0 : i64, scratch_operands = 4 : i64, tpu.core_type = #tpu.core_type<tc>, window_params = [{transform_indices = @transform_0, window_bounds = array<i64: 4, 8, 32>}, {transform_indices = @transform_1, window_bounds = array<i64: 4, 8, 32>}, {pipeline_mode = #tpu.pipeline_mode<synchronous>, transform_indices = @transform_2, window_bounds = array<i64: 32, 128>}, {pipeline_mode = #tpu.pipeline_mode<synchronous>, transform_indices = @transform_3, window_bounds = array<i64: 32, 128>}, {pipeline_mode = #tpu.pipeline_mode<synchronous>, transform_indices = @transform_4, window_bounds = array<i64: 1, 128>}, {pipeline_mode = #tpu.pipeline_mode<synchronous>, transform_indices = @transform_5, window_bounds = array<i64: 1, 128>}, {pipeline_mode = #tpu.pipeline_mode<synchronous>, transform_indices = @transform_6, window_bounds = array<i64: 32, 128>}, {pipeline_mode = #tpu.pipeline_mode<synchronous>, transform_indices = @transform_7, window_bounds = array<i64: 32, 128>}, {pipeline_mode = #tpu.pipeline_mode<synchronous>, transform_indices = @transform_8, window_bounds = array<i64: 64, 32>}, {pipeline_mode = #tpu.pipeline_mode<synchronous>, transform_indices = @transform_9, window_bounds = array<i64: 1, 32>}, {pipeline_mode = #tpu.pipeline_mode<synchronous>, transform_indices = @transform_10, window_bounds = array<i64: 64, 32>}, {pipeline_mode = #tpu.pipeline_mode<synchronous>, transform_indices = @transform_11, window_bounds = array<i64: 1, 32>}, {transform_indices = @transform_12, window_bounds = array<i64: 4, 8, 32>}, {transform_indices = @transform_13, window_bounds = array<i64: 4, 8, 32>}, {pipeline_mode = #tpu.pipeline_mode<synchronous>, transform_indices = @transform_14, window_bounds = array<i64: 8, 32>}, {pipeline_mode = #tpu.pipeline_mode<synchronous>, transform_indices = @transform_15, window_bounds = array<i64: 8, 32>}]} {
    %c0_i32 = arith.constant 0 : i32
    %0 = arith.cmpi eq, %arg0, %c0_i32 : i32
    %1 = arith.extui %0 : i1 to i32
    %c0_i32_0 = arith.constant 0 : i32
    %2 = arith.cmpi ne, %1, %c0_i32_0 : i32
    scf.if %2 {
      %cst_94 = arith.constant 0.000000e+00 : f32
      %256 = vector.broadcast %cst_94 : f32 to vector<8x32xf32>
      %c0_95 = arith.constant 0 : index
      %c0_96 = arith.constant 0 : index
      %257 = vector.load %arg17[%c0_95, %c0_96] : memref<8x32xf32, #tpu.memory_space<vmem>>, vector<8x32xf32>
      tpu.vector_store %arg17[%c0_95, %c0_96], %256 {strides = array<i32>} : memref<8x32xf32, #tpu.memory_space<vmem>>, vector<8x32xf32>,
      %cst_97 = arith.constant 0.000000e+00 : f32
      %258 = vector.broadcast %cst_97 : f32 to vector<8x32xf32>
      %c0_98 = arith.constant 0 : index
      %c0_99 = arith.constant 0 : index
      %259 = vector.load %arg18[%c0_98, %c0_99] : memref<8x32xf32, #tpu.memory_space<vmem>>, vector<8x32xf32>
      tpu.vector_store %arg18[%c0_98, %c0_99], %258 {strides = array<i32>} : memref<8x32xf32, #tpu.memory_space<vmem>>, vector<8x32xf32>,
      %cst_100 = arith.constant 0.000000e+00 : f32
      %260 = vector.broadcast %cst_100 : f32 to vector<8x32xf32>
      %c0_101 = arith.constant 0 : index
      %c0_102 = arith.constant 0 : index
      %261 = vector.load %arg19[%c0_101, %c0_102] : memref<8x32xf32, #tpu.memory_space<vmem>>, vector<8x32xf32>
      tpu.vector_store %arg19[%c0_101, %c0_102], %260 {strides = array<i32>} : memref<8x32xf32, #tpu.memory_space<vmem>>, vector<8x32xf32>,
      %cst_103 = arith.constant 0.000000e+00 : f32
      %262 = vector.broadcast %cst_103 : f32 to vector<8x32xf32>
      %c0_104 = arith.constant 0 : index
      %c0_105 = arith.constant 0 : index
      %263 = vector.load %arg20[%c0_104, %c0_105] : memref<8x32xf32, #tpu.memory_space<vmem>>, vector<8x32xf32>
      tpu.vector_store %arg20[%c0_104, %c0_105], %262 {strides = array<i32>} : memref<8x32xf32, #tpu.memory_space<vmem>>, vector<8x32xf32>,
    } else {
    }
    %c0 = arith.constant 0 : index
    %c0_1 = arith.constant 0 : index
    %3 = vector.load %arg3[%c0, %c0_1] : memref<32x128xbf16, #tpu.memory_space<vmem>>, vector<32x128xbf16>
    %c0_2 = arith.constant 0 : index
    %c0_3 = arith.constant 0 : index
    %4 = vector.load %arg4[%c0_2, %c0_3] : memref<32x128xbf16, #tpu.memory_space<vmem>>, vector<32x128xbf16>
    %c0_4 = arith.constant 0 : index
    %c0_5 = arith.constant 0 : index
    %5 = vector.load %arg7[%c0_4, %c0_5] : memref<32x128xbf16, #tpu.memory_space<vmem>>, vector<32x128xbf16>
    %c0_6 = arith.constant 0 : index
    %c0_7 = arith.constant 0 : index
    %6 = vector.load %arg8[%c0_6, %c0_7] : memref<32x128xbf16, #tpu.memory_space<vmem>>, vector<32x128xbf16>
    %c0_8 = arith.constant 0 : index
    %c0_9 = arith.constant 0 : index
    %7 = vector.load %arg5[%c0_8, %c0_9] : memref<1x128xf32, #tpu.memory_space<vmem>>, vector<1x128xf32>
    %8 = vector.shape_cast %7 : vector<1x128xf32> to vector<1x128xf32>
    %9 = vector.broadcast %8 : vector<1x128xf32> to vector<8x128xf32>
    %c0_10 = arith.constant 0 : index
    %c0_11 = arith.constant 0 : index
    %10 = vector.load %arg6[%c0_10, %c0_11] : memref<1x128xf32, #tpu.memory_space<vmem>>, vector<1x128xf32>
    %11 = vector.shape_cast %10 : vector<1x128xf32> to vector<1x128xf32>
    %12 = vector.broadcast %11 : vector<1x128xf32> to vector<8x128xf32>
    %c0_12 = arith.constant 0 : index
    %c0_13 = arith.constant 0 : index
    %13 = vector.load %arg17[%c0_12, %c0_13] : memref<8x32xf32, #tpu.memory_space<vmem>>, vector<8x32xf32>
    %c0_14 = arith.constant 0 : index
    %c0_15 = arith.constant 0 : index
    %14 = vector.load %arg18[%c0_14, %c0_15] : memref<8x32xf32, #tpu.memory_space<vmem>>, vector<8x32xf32>
    %c0_16 = arith.constant 0 : index
    %c0_17 = arith.constant 0 : index
    %15 = vector.load %arg19[%c0_16, %c0_17] : memref<8x32xf32, #tpu.memory_space<vmem>>, vector<8x32xf32>
    %c0_18 = arith.constant 0 : index
    %c0_19 = arith.constant 0 : index
    %16 = vector.load %arg20[%c0_18, %c0_19] : memref<8x32xf32, #tpu.memory_space<vmem>>, vector<8x32xf32>
    %c0_i32_20 = arith.constant 0 : i32
    %17 = arith.index_cast %c0_i32_20 : i32 to index
    %c0_21 = arith.constant 0 : index
    %c0_22 = arith.constant 0 : index
    %18 = vector.load %arg1[%17, %c0_21, %c0_22] : memref<4x8x32xbf16, #tpu.memory_space<vmem>>, vector<1x8x32xbf16>
    %19 = vector.shape_cast %18 : vector<1x8x32xbf16> to vector<8x32xbf16>
    %c3_i32 = arith.constant 3 : i32
    %20 = arith.subi %c3_i32, %c0_i32_20 : i32
    %21 = arith.index_cast %20 : i32 to index
    %c0_23 = arith.constant 0 : index
    %c0_24 = arith.constant 0 : index
    %22 = vector.load %arg2[%21, %c0_23, %c0_24] : memref<4x8x32xbf16, #tpu.memory_space<vmem>>, vector<1x8x32xbf16>
    %23 = vector.shape_cast %22 : vector<1x8x32xbf16> to vector<8x32xbf16>
    %cst = arith.constant dense<0.000000e+00> : vector<8x128xf32>
    %24 = tpu.matmul %19, %3, %cst {dimension_numbers = #tpu.dot_dimension_numbers<[1], [0], [0], [1], [0, 0, 1, 1], [], []>} : vector<8x32xbf16>, vector<32x128xbf16>, vector<8x128xf32> -> vector<8x128xf32>
    %25 = arith.truncf %13 : vector<8x32xf32> to vector<8x32xbf16>
    %cst_25 = arith.constant dense<0.000000e+00> : vector<8x128xf32>
    %26 = tpu.matmul %25, %5, %cst_25 {dimension_numbers = #tpu.dot_dimension_numbers<[1], [0], [0], [1], [0, 0, 1, 1], [], []>} : vector<8x32xbf16>, vector<32x128xbf16>, vector<8x128xf32> -> vector<8x128xf32>
    %27 = arith.addf %24, %26 : vector<8x128xf32>
    %28 = arith.addf %27, %9 : vector<8x128xf32>
    %cst_26 = arith.constant dense<0.000000e+00> : vector<8x128xf32>
    %29 = tpu.matmul %23, %4, %cst_26 {dimension_numbers = #tpu.dot_dimension_numbers<[1], [0], [0], [1], [0, 0, 1, 1], [], []>} : vector<8x32xbf16>, vector<32x128xbf16>, vector<8x128xf32> -> vector<8x128xf32>
    %30 = arith.truncf %15 : vector<8x32xf32> to vector<8x32xbf16>
    %cst_27 = arith.constant dense<0.000000e+00> : vector<8x128xf32>
    %31 = tpu.matmul %30, %6, %cst_27 {dimension_numbers = #tpu.dot_dimension_numbers<[1], [0], [0], [1], [0, 0, 1, 1], [], []>} : vector<8x32xbf16>, vector<32x128xbf16>, vector<8x128xf32> -> vector<8x128xf32>
    %32 = arith.addf %29, %31 : vector<8x128xf32>
    %33 = arith.addf %32, %12 : vector<8x128xf32>
    %34 = vector.extract_strided_slice %28 {offsets = [0, 0], sizes = [8, 96], strides = [1, 1]} : vector<8x128xf32> to vector<8x96xf32>
    %35 = arith.negf %34 : vector<8x96xf32>
    %36 = math.exp %35 : vector<8x96xf32>
    %cst_28 = arith.constant 1.000000e+00 : f32
    %37 = vector.broadcast %cst_28 : f32 to vector<8x96xf32>
    %38 = arith.addf %37, %36 : vector<8x96xf32>
    %39 = arith.divf %37, %38 : vector<8x96xf32>
    %40 = vector.extract_strided_slice %39 {offsets = [0, 0], sizes = [8, 32], strides = [1, 1]} : vector<8x96xf32> to vector<8x32xf32>
    %41 = vector.extract_strided_slice %39 {offsets = [0, 32], sizes = [8, 32], strides = [1, 1]} : vector<8x96xf32> to vector<8x32xf32>
    %42 = vector.extract_strided_slice %39 {offsets = [0, 64], sizes = [8, 32], strides = [1, 1]} : vector<8x96xf32> to vector<8x32xf32>
    %43 = vector.extract_strided_slice %28 {offsets = [0, 96], sizes = [8, 32], strides = [1, 1]} : vector<8x128xf32> to vector<8x32xf32>
    %44 = math.tanh %43 : vector<8x32xf32>
    %45 = arith.mulf %41, %14 : vector<8x32xf32>
    %46 = arith.mulf %40, %44 : vector<8x32xf32>
    %47 = arith.addf %45, %46 : vector<8x32xf32>
    %48 = math.tanh %47 : vector<8x32xf32>
    %49 = arith.mulf %42, %48 : vector<8x32xf32>
    %50 = vector.extract_strided_slice %33 {offsets = [0, 0], sizes = [8, 96], strides = [1, 1]} : vector<8x128xf32> to vector<8x96xf32>
    %51 = arith.negf %50 : vector<8x96xf32>
    %52 = math.exp %51 : vector<8x96xf32>
    %cst_29 = arith.constant 1.000000e+00 : f32
    %53 = vector.broadcast %cst_29 : f32 to vector<8x96xf32>
    %54 = arith.addf %53, %52 : vector<8x96xf32>
    %55 = arith.divf %53, %54 : vector<8x96xf32>
    %56 = vector.extract_strided_slice %55 {offsets = [0, 0], sizes = [8, 32], strides = [1, 1]} : vector<8x96xf32> to vector<8x32xf32>
    %57 = vector.extract_strided_slice %55 {offsets = [0, 32], sizes = [8, 32], strides = [1, 1]} : vector<8x96xf32> to vector<8x32xf32>
    %58 = vector.extract_strided_slice %55 {offsets = [0, 64], sizes = [8, 32], strides = [1, 1]} : vector<8x96xf32> to vector<8x32xf32>
    %59 = vector.extract_strided_slice %33 {offsets = [0, 96], sizes = [8, 32], strides = [1, 1]} : vector<8x128xf32> to vector<8x32xf32>
    %60 = math.tanh %59 : vector<8x32xf32>
    %61 = arith.mulf %57, %16 : vector<8x32xf32>
    %62 = arith.mulf %56, %60 : vector<8x32xf32>
    %63 = arith.addf %61, %62 : vector<8x32xf32>
    %64 = math.tanh %63 : vector<8x32xf32>
    %65 = arith.mulf %58, %64 : vector<8x32xf32>
    %66 = arith.index_cast %c0_i32_20 : i32 to index
    %c0_30 = arith.constant 0 : index
    %c0_31 = arith.constant 0 : index
    %67 = vector.load %arg13[%66, %c0_30, %c0_31] : memref<4x8x32xf32, #tpu.memory_space<vmem>>, vector<1x8x32xf32>
    %68 = vector.shape_cast %67 : vector<1x8x32xf32> to vector<8x32xf32>
    %69 = vector.shape_cast %49 : vector<8x32xf32> to vector<1x8x32xf32>
    tpu.vector_store %arg13[%66, %c0_30, %c0_31], %69 {strides = array<i32>} : memref<4x8x32xf32, #tpu.memory_space<vmem>>, vector<1x8x32xf32>,
    %c3_i32_32 = arith.constant 3 : i32
    %70 = arith.subi %c3_i32_32, %c0_i32_20 : i32
    %71 = arith.index_cast %70 : i32 to index
    %c0_33 = arith.constant 0 : index
    %c0_34 = arith.constant 0 : index
    %72 = vector.load %arg14[%71, %c0_33, %c0_34] : memref<4x8x32xf32, #tpu.memory_space<vmem>>, vector<1x8x32xf32>
    %73 = vector.shape_cast %72 : vector<1x8x32xf32> to vector<8x32xf32>
    %74 = vector.shape_cast %65 : vector<8x32xf32> to vector<1x8x32xf32>
    tpu.vector_store %arg14[%71, %c0_33, %c0_34], %74 {strides = array<i32>} : memref<4x8x32xf32, #tpu.memory_space<vmem>>, vector<1x8x32xf32>,
    %c1_i32 = arith.constant 1 : i32
    %75 = arith.index_cast %c1_i32 : i32 to index
    %c0_35 = arith.constant 0 : index
    %c0_36 = arith.constant 0 : index
    %76 = vector.load %arg1[%75, %c0_35, %c0_36] : memref<4x8x32xbf16, #tpu.memory_space<vmem>>, vector<1x8x32xbf16>
    %77 = vector.shape_cast %76 : vector<1x8x32xbf16> to vector<8x32xbf16>
    %c3_i32_37 = arith.constant 3 : i32
    %78 = arith.subi %c3_i32_37, %c1_i32 : i32
    %79 = arith.index_cast %78 : i32 to index
    %c0_38 = arith.constant 0 : index
    %c0_39 = arith.constant 0 : index
    %80 = vector.load %arg2[%79, %c0_38, %c0_39] : memref<4x8x32xbf16, #tpu.memory_space<vmem>>, vector<1x8x32xbf16>
    %81 = vector.shape_cast %80 : vector<1x8x32xbf16> to vector<8x32xbf16>
    %cst_40 = arith.constant dense<0.000000e+00> : vector<8x128xf32>
    %82 = tpu.matmul %77, %3, %cst_40 {dimension_numbers = #tpu.dot_dimension_numbers<[1], [0], [0], [1], [0, 0, 1, 1], [], []>} : vector<8x32xbf16>, vector<32x128xbf16>, vector<8x128xf32> -> vector<8x128xf32>
    %83 = arith.truncf %49 : vector<8x32xf32> to vector<8x32xbf16>
    %cst_41 = arith.constant dense<0.000000e+00> : vector<8x128xf32>
    %84 = tpu.matmul %83, %5, %cst_41 {dimension_numbers = #tpu.dot_dimension_numbers<[1], [0], [0], [1], [0, 0, 1, 1], [], []>} : vector<8x32xbf16>, vector<32x128xbf16>, vector<8x128xf32> -> vector<8x128xf32>
    %85 = arith.addf %82, %84 : vector<8x128xf32>
    %86 = arith.addf %85, %9 : vector<8x128xf32>
    %cst_42 = arith.constant dense<0.000000e+00> : vector<8x128xf32>
    %87 = tpu.matmul %81, %4, %cst_42 {dimension_numbers = #tpu.dot_dimension_numbers<[1], [0], [0], [1], [0, 0, 1, 1], [], []>} : vector<8x32xbf16>, vector<32x128xbf16>, vector<8x128xf32> -> vector<8x128xf32>
    %88 = arith.truncf %65 : vector<8x32xf32> to vector<8x32xbf16>
    %cst_43 = arith.constant dense<0.000000e+00> : vector<8x128xf32>
    %89 = tpu.matmul %88, %6, %cst_43 {dimension_numbers = #tpu.dot_dimension_numbers<[1], [0], [0], [1], [0, 0, 1, 1], [], []>} : vector<8x32xbf16>, vector<32x128xbf16>, vector<8x128xf32> -> vector<8x128xf32>
    %90 = arith.addf %87, %89 : vector<8x128xf32>
    %91 = arith.addf %90, %12 : vector<8x128xf32>
    %92 = vector.extract_strided_slice %86 {offsets = [0, 0], sizes = [8, 96], strides = [1, 1]} : vector<8x128xf32> to vector<8x96xf32>
    %93 = arith.negf %92 : vector<8x96xf32>
    %94 = math.exp %93 : vector<8x96xf32>
    %cst_44 = arith.constant 1.000000e+00 : f32
    %95 = vector.broadcast %cst_44 : f32 to vector<8x96xf32>
    %96 = arith.addf %95, %94 : vector<8x96xf32>
    %97 = arith.divf %95, %96 : vector<8x96xf32>
    %98 = vector.extract_strided_slice %97 {offsets = [0, 0], sizes = [8, 32], strides = [1, 1]} : vector<8x96xf32> to vector<8x32xf32>
    %99 = vector.extract_strided_slice %97 {offsets = [0, 32], sizes = [8, 32], strides = [1, 1]} : vector<8x96xf32> to vector<8x32xf32>
    %100 = vector.extract_strided_slice %97 {offsets = [0, 64], sizes = [8, 32], strides = [1, 1]} : vector<8x96xf32> to vector<8x32xf32>
    %101 = vector.extract_strided_slice %86 {offsets = [0, 96], sizes = [8, 32], strides = [1, 1]} : vector<8x128xf32> to vector<8x32xf32>
    %102 = math.tanh %101 : vector<8x32xf32>
    %103 = arith.mulf %99, %47 : vector<8x32xf32>
    %104 = arith.mulf %98, %102 : vector<8x32xf32>
    %105 = arith.addf %103, %104 : vector<8x32xf32>
    %106 = math.tanh %105 : vector<8x32xf32>
    %107 = arith.mulf %100, %106 : vector<8x32xf32>
    %108 = vector.extract_strided_slice %91 {offsets = [0, 0], sizes = [8, 96], strides = [1, 1]} : vector<8x128xf32> to vector<8x96xf32>
    %109 = arith.negf %108 : vector<8x96xf32>
    %110 = math.exp %109 : vector<8x96xf32>
    %cst_45 = arith.constant 1.000000e+00 : f32
    %111 = vector.broadcast %cst_45 : f32 to vector<8x96xf32>
    %112 = arith.addf %111, %110 : vector<8x96xf32>
    %113 = arith.divf %111, %112 : vector<8x96xf32>
    %114 = vector.extract_strided_slice %113 {offsets = [0, 0], sizes = [8, 32], strides = [1, 1]} : vector<8x96xf32> to vector<8x32xf32>
    %115 = vector.extract_strided_slice %113 {offsets = [0, 32], sizes = [8, 32], strides = [1, 1]} : vector<8x96xf32> to vector<8x32xf32>
    %116 = vector.extract_strided_slice %113 {offsets = [0, 64], sizes = [8, 32], strides = [1, 1]} : vector<8x96xf32> to vector<8x32xf32>
    %117 = vector.extract_strided_slice %91 {offsets = [0, 96], sizes = [8, 32], strides = [1, 1]} : vector<8x128xf32> to vector<8x32xf32>
    %118 = math.tanh %117 : vector<8x32xf32>
    %119 = arith.mulf %115, %63 : vector<8x32xf32>
    %120 = arith.mulf %114, %118 : vector<8x32xf32>
    %121 = arith.addf %119, %120 : vector<8x32xf32>
    %122 = math.tanh %121 : vector<8x32xf32>
    %123 = arith.mulf %116, %122 : vector<8x32xf32>
    %124 = arith.index_cast %c1_i32 : i32 to index
    %c0_46 = arith.constant 0 : index
    %c0_47 = arith.constant 0 : index
    %125 = vector.load %arg13[%124, %c0_46, %c0_47] : memref<4x8x32xf32, #tpu.memory_space<vmem>>, vector<1x8x32xf32>
    %126 = vector.shape_cast %125 : vector<1x8x32xf32> to vector<8x32xf32>
    %127 = vector.shape_cast %107 : vector<8x32xf32> to vector<1x8x32xf32>
    tpu.vector_store %arg13[%124, %c0_46, %c0_47], %127 {strides = array<i32>} : memref<4x8x32xf32, #tpu.memory_space<vmem>>, vector<1x8x32xf32>,
    %c3_i32_48 = arith.constant 3 : i32
    %128 = arith.subi %c3_i32_48, %c1_i32 : i32
    %129 = arith.index_cast %128 : i32 to index
    %c0_49 = arith.constant 0 : index
    %c0_50 = arith.constant 0 : index
    %130 = vector.load %arg14[%129, %c0_49, %c0_50] : memref<4x8x32xf32, #tpu.memory_space<vmem>>, vector<1x8x32xf32>
    %131 = vector.shape_cast %130 : vector<1x8x32xf32> to vector<8x32xf32>
    %132 = vector.shape_cast %123 : vector<8x32xf32> to vector<1x8x32xf32>
    tpu.vector_store %arg14[%129, %c0_49, %c0_50], %132 {strides = array<i32>} : memref<4x8x32xf32, #tpu.memory_space<vmem>>, vector<1x8x32xf32>,
    %c2_i32 = arith.constant 2 : i32
    %133 = arith.index_cast %c2_i32 : i32 to index
    %c0_51 = arith.constant 0 : index
    %c0_52 = arith.constant 0 : index
    %134 = vector.load %arg1[%133, %c0_51, %c0_52] : memref<4x8x32xbf16, #tpu.memory_space<vmem>>, vector<1x8x32xbf16>
    %135 = vector.shape_cast %134 : vector<1x8x32xbf16> to vector<8x32xbf16>
    %c3_i32_53 = arith.constant 3 : i32
    %136 = arith.subi %c3_i32_53, %c2_i32 : i32
    %137 = arith.index_cast %136 : i32 to index
    %c0_54 = arith.constant 0 : index
    %c0_55 = arith.constant 0 : index
    %138 = vector.load %arg2[%137, %c0_54, %c0_55] : memref<4x8x32xbf16, #tpu.memory_space<vmem>>, vector<1x8x32xbf16>
    %139 = vector.shape_cast %138 : vector<1x8x32xbf16> to vector<8x32xbf16>
    %cst_56 = arith.constant dense<0.000000e+00> : vector<8x128xf32>
    %140 = tpu.matmul %135, %3, %cst_56 {dimension_numbers = #tpu.dot_dimension_numbers<[1], [0], [0], [1], [0, 0, 1, 1], [], []>} : vector<8x32xbf16>, vector<32x128xbf16>, vector<8x128xf32> -> vector<8x128xf32>
    %141 = arith.truncf %107 : vector<8x32xf32> to vector<8x32xbf16>
    %cst_57 = arith.constant dense<0.000000e+00> : vector<8x128xf32>
    %142 = tpu.matmul %141, %5, %cst_57 {dimension_numbers = #tpu.dot_dimension_numbers<[1], [0], [0], [1], [0, 0, 1, 1], [], []>} : vector<8x32xbf16>, vector<32x128xbf16>, vector<8x128xf32> -> vector<8x128xf32>
    %143 = arith.addf %140, %142 : vector<8x128xf32>
    %144 = arith.addf %143, %9 : vector<8x128xf32>
    %cst_58 = arith.constant dense<0.000000e+00> : vector<8x128xf32>
    %145 = tpu.matmul %139, %4, %cst_58 {dimension_numbers = #tpu.dot_dimension_numbers<[1], [0], [0], [1], [0, 0, 1, 1], [], []>} : vector<8x32xbf16>, vector<32x128xbf16>, vector<8x128xf32> -> vector<8x128xf32>
    %146 = arith.truncf %123 : vector<8x32xf32> to vector<8x32xbf16>
    %cst_59 = arith.constant dense<0.000000e+00> : vector<8x128xf32>
    %147 = tpu.matmul %146, %6, %cst_59 {dimension_numbers = #tpu.dot_dimension_numbers<[1], [0], [0], [1], [0, 0, 1, 1], [], []>} : vector<8x32xbf16>, vector<32x128xbf16>, vector<8x128xf32> -> vector<8x128xf32>
    %148 = arith.addf %145, %147 : vector<8x128xf32>
    %149 = arith.addf %148, %12 : vector<8x128xf32>
    %150 = vector.extract_strided_slice %144 {offsets = [0, 0], sizes = [8, 96], strides = [1, 1]} : vector<8x128xf32> to vector<8x96xf32>
    %151 = arith.negf %150 : vector<8x96xf32>
    %152 = math.exp %151 : vector<8x96xf32>
    %cst_60 = arith.constant 1.000000e+00 : f32
    %153 = vector.broadcast %cst_60 : f32 to vector<8x96xf32>
    %154 = arith.addf %153, %152 : vector<8x96xf32>
    %155 = arith.divf %153, %154 : vector<8x96xf32>
    %156 = vector.extract_strided_slice %155 {offsets = [0, 0], sizes = [8, 32], strides = [1, 1]} : vector<8x96xf32> to vector<8x32xf32>
    %157 = vector.extract_strided_slice %155 {offsets = [0, 32], sizes = [8, 32], strides = [1, 1]} : vector<8x96xf32> to vector<8x32xf32>
    %158 = vector.extract_strided_slice %155 {offsets = [0, 64], sizes = [8, 32], strides = [1, 1]} : vector<8x96xf32> to vector<8x32xf32>
    %159 = vector.extract_strided_slice %144 {offsets = [0, 96], sizes = [8, 32], strides = [1, 1]} : vector<8x128xf32> to vector<8x32xf32>
    %160 = math.tanh %159 : vector<8x32xf32>
    %161 = arith.mulf %157, %105 : vector<8x32xf32>
    %162 = arith.mulf %156, %160 : vector<8x32xf32>
    %163 = arith.addf %161, %162 : vector<8x32xf32>
    %164 = math.tanh %163 : vector<8x32xf32>
    %165 = arith.mulf %158, %164 : vector<8x32xf32>
    %166 = vector.extract_strided_slice %149 {offsets = [0, 0], sizes = [8, 96], strides = [1, 1]} : vector<8x128xf32> to vector<8x96xf32>
    %167 = arith.negf %166 : vector<8x96xf32>
    %168 = math.exp %167 : vector<8x96xf32>
    %cst_61 = arith.constant 1.000000e+00 : f32
    %169 = vector.broadcast %cst_61 : f32 to vector<8x96xf32>
    %170 = arith.addf %169, %168 : vector<8x96xf32>
    %171 = arith.divf %169, %170 : vector<8x96xf32>
    %172 = vector.extract_strided_slice %171 {offsets = [0, 0], sizes = [8, 32], strides = [1, 1]} : vector<8x96xf32> to vector<8x32xf32>
    %173 = vector.extract_strided_slice %171 {offsets = [0, 32], sizes = [8, 32], strides = [1, 1]} : vector<8x96xf32> to vector<8x32xf32>
    %174 = vector.extract_strided_slice %171 {offsets = [0, 64], sizes = [8, 32], strides = [1, 1]} : vector<8x96xf32> to vector<8x32xf32>
    %175 = vector.extract_strided_slice %149 {offsets = [0, 96], sizes = [8, 32], strides = [1, 1]} : vector<8x128xf32> to vector<8x32xf32>
    %176 = math.tanh %175 : vector<8x32xf32>
    %177 = arith.mulf %173, %121 : vector<8x32xf32>
    %178 = arith.mulf %172, %176 : vector<8x32xf32>
    %179 = arith.addf %177, %178 : vector<8x32xf32>
    %180 = math.tanh %179 : vector<8x32xf32>
    %181 = arith.mulf %174, %180 : vector<8x32xf32>
    %182 = arith.index_cast %c2_i32 : i32 to index
    %c0_62 = arith.constant 0 : index
    %c0_63 = arith.constant 0 : index
    %183 = vector.load %arg13[%182, %c0_62, %c0_63] : memref<4x8x32xf32, #tpu.memory_space<vmem>>, vector<1x8x32xf32>
    %184 = vector.shape_cast %183 : vector<1x8x32xf32> to vector<8x32xf32>
    %185 = vector.shape_cast %165 : vector<8x32xf32> to vector<1x8x32xf32>
    tpu.vector_store %arg13[%182, %c0_62, %c0_63], %185 {strides = array<i32>} : memref<4x8x32xf32, #tpu.memory_space<vmem>>, vector<1x8x32xf32>,
    %c3_i32_64 = arith.constant 3 : i32
    %186 = arith.subi %c3_i32_64, %c2_i32 : i32
    %187 = arith.index_cast %186 : i32 to index
    %c0_65 = arith.constant 0 : index
    %c0_66 = arith.constant 0 : index
    %188 = vector.load %arg14[%187, %c0_65, %c0_66] : memref<4x8x32xf32, #tpu.memory_space<vmem>>, vector<1x8x32xf32>
    %189 = vector.shape_cast %188 : vector<1x8x32xf32> to vector<8x32xf32>
    %190 = vector.shape_cast %181 : vector<8x32xf32> to vector<1x8x32xf32>
    tpu.vector_store %arg14[%187, %c0_65, %c0_66], %190 {strides = array<i32>} : memref<4x8x32xf32, #tpu.memory_space<vmem>>, vector<1x8x32xf32>,
    %c3_i32_67 = arith.constant 3 : i32
    %191 = arith.index_cast %c3_i32_67 : i32 to index
    %c0_68 = arith.constant 0 : index
    %c0_69 = arith.constant 0 : index
    %192 = vector.load %arg1[%191, %c0_68, %c0_69] : memref<4x8x32xbf16, #tpu.memory_space<vmem>>, vector<1x8x32xbf16>
    %193 = vector.shape_cast %192 : vector<1x8x32xbf16> to vector<8x32xbf16>
    %c3_i32_70 = arith.constant 3 : i32
    %194 = arith.subi %c3_i32_70, %c3_i32_67 : i32
    %195 = arith.index_cast %194 : i32 to index
    %c0_71 = arith.constant 0 : index
    %c0_72 = arith.constant 0 : index
    %196 = vector.load %arg2[%195, %c0_71, %c0_72] : memref<4x8x32xbf16, #tpu.memory_space<vmem>>, vector<1x8x32xbf16>
    %197 = vector.shape_cast %196 : vector<1x8x32xbf16> to vector<8x32xbf16>
    %cst_73 = arith.constant dense<0.000000e+00> : vector<8x128xf32>
    %198 = tpu.matmul %193, %3, %cst_73 {dimension_numbers = #tpu.dot_dimension_numbers<[1], [0], [0], [1], [0, 0, 1, 1], [], []>} : vector<8x32xbf16>, vector<32x128xbf16>, vector<8x128xf32> -> vector<8x128xf32>
    %199 = arith.truncf %165 : vector<8x32xf32> to vector<8x32xbf16>
    %cst_74 = arith.constant dense<0.000000e+00> : vector<8x128xf32>
    %200 = tpu.matmul %199, %5, %cst_74 {dimension_numbers = #tpu.dot_dimension_numbers<[1], [0], [0], [1], [0, 0, 1, 1], [], []>} : vector<8x32xbf16>, vector<32x128xbf16>, vector<8x128xf32> -> vector<8x128xf32>
    %201 = arith.addf %198, %200 : vector<8x128xf32>
    %202 = arith.addf %201, %9 : vector<8x128xf32>
    %cst_75 = arith.constant dense<0.000000e+00> : vector<8x128xf32>
    %203 = tpu.matmul %197, %4, %cst_75 {dimension_numbers = #tpu.dot_dimension_numbers<[1], [0], [0], [1], [0, 0, 1, 1], [], []>} : vector<8x32xbf16>, vector<32x128xbf16>, vector<8x128xf32> -> vector<8x128xf32>
    %204 = arith.truncf %181 : vector<8x32xf32> to vector<8x32xbf16>
    %cst_76 = arith.constant dense<0.000000e+00> : vector<8x128xf32>
    %205 = tpu.matmul %204, %6, %cst_76 {dimension_numbers = #tpu.dot_dimension_numbers<[1], [0], [0], [1], [0, 0, 1, 1], [], []>} : vector<8x32xbf16>, vector<32x128xbf16>, vector<8x128xf32> -> vector<8x128xf32>
    %206 = arith.addf %203, %205 : vector<8x128xf32>
    %207 = arith.addf %206, %12 : vector<8x128xf32>
    %208 = vector.extract_strided_slice %202 {offsets = [0, 0], sizes = [8, 96], strides = [1, 1]} : vector<8x128xf32> to vector<8x96xf32>
    %209 = arith.negf %208 : vector<8x96xf32>
    %210 = math.exp %209 : vector<8x96xf32>
    %cst_77 = arith.constant 1.000000e+00 : f32
    %211 = vector.broadcast %cst_77 : f32 to vector<8x96xf32>
    %212 = arith.addf %211, %210 : vector<8x96xf32>
    %213 = arith.divf %211, %212 : vector<8x96xf32>
    %214 = vector.extract_strided_slice %213 {offsets = [0, 0], sizes = [8, 32], strides = [1, 1]} : vector<8x96xf32> to vector<8x32xf32>
    %215 = vector.extract_strided_slice %213 {offsets = [0, 32], sizes = [8, 32], strides = [1, 1]} : vector<8x96xf32> to vector<8x32xf32>
    %216 = vector.extract_strided_slice %213 {offsets = [0, 64], sizes = [8, 32], strides = [1, 1]} : vector<8x96xf32> to vector<8x32xf32>
    %217 = vector.extract_strided_slice %202 {offsets = [0, 96], sizes = [8, 32], strides = [1, 1]} : vector<8x128xf32> to vector<8x32xf32>
    %218 = math.tanh %217 : vector<8x32xf32>
    %219 = arith.mulf %215, %163 : vector<8x32xf32>
    %220 = arith.mulf %214, %218 : vector<8x32xf32>
    %221 = arith.addf %219, %220 : vector<8x32xf32>
    %222 = math.tanh %221 : vector<8x32xf32>
    %223 = arith.mulf %216, %222 : vector<8x32xf32>
    %224 = vector.extract_strided_slice %207 {offsets = [0, 0], sizes = [8, 96], strides = [1, 1]} : vector<8x128xf32> to vector<8x96xf32>
    %225 = arith.negf %224 : vector<8x96xf32>
    %226 = math.exp %225 : vector<8x96xf32>
    %cst_78 = arith.constant 1.000000e+00 : f32
    %227 = vector.broadcast %cst_78 : f32 to vector<8x96xf32>
    %228 = arith.addf %227, %226 : vector<8x96xf32>
    %229 = arith.divf %227, %228 : vector<8x96xf32>
    %230 = vector.extract_strided_slice %229 {offsets = [0, 0], sizes = [8, 32], strides = [1, 1]} : vector<8x96xf32> to vector<8x32xf32>
    %231 = vector.extract_strided_slice %229 {offsets = [0, 32], sizes = [8, 32], strides = [1, 1]} : vector<8x96xf32> to vector<8x32xf32>
    %232 = vector.extract_strided_slice %229 {offsets = [0, 64], sizes = [8, 32], strides = [1, 1]} : vector<8x96xf32> to vector<8x32xf32>
    %233 = vector.extract_strided_slice %207 {offsets = [0, 96], sizes = [8, 32], strides = [1, 1]} : vector<8x128xf32> to vector<8x32xf32>
    %234 = math.tanh %233 : vector<8x32xf32>
    %235 = arith.mulf %231, %179 : vector<8x32xf32>
    %236 = arith.mulf %230, %234 : vector<8x32xf32>
    %237 = arith.addf %235, %236 : vector<8x32xf32>
    %238 = math.tanh %237 : vector<8x32xf32>
    %239 = arith.mulf %232, %238 : vector<8x32xf32>
    %240 = arith.index_cast %c3_i32_67 : i32 to index
    %c0_79 = arith.constant 0 : index
    %c0_80 = arith.constant 0 : index
    %241 = vector.load %arg13[%240, %c0_79, %c0_80] : memref<4x8x32xf32, #tpu.memory_space<vmem>>, vector<1x8x32xf32>
    %242 = vector.shape_cast %241 : vector<1x8x32xf32> to vector<8x32xf32>
    %243 = vector.shape_cast %223 : vector<8x32xf32> to vector<1x8x32xf32>
    tpu.vector_store %arg13[%240, %c0_79, %c0_80], %243 {strides = array<i32>} : memref<4x8x32xf32, #tpu.memory_space<vmem>>, vector<1x8x32xf32>,
    %c3_i32_81 = arith.constant 3 : i32
    %244 = arith.subi %c3_i32_81, %c3_i32_67 : i32
    %245 = arith.index_cast %244 : i32 to index
    %c0_82 = arith.constant 0 : index
    %c0_83 = arith.constant 0 : index
    %246 = vector.load %arg14[%245, %c0_82, %c0_83] : memref<4x8x32xf32, #tpu.memory_space<vmem>>, vector<1x8x32xf32>
    %247 = vector.shape_cast %246 : vector<1x8x32xf32> to vector<8x32xf32>
    %248 = vector.shape_cast %239 : vector<8x32xf32> to vector<1x8x32xf32>
    tpu.vector_store %arg14[%245, %c0_82, %c0_83], %248 {strides = array<i32>} : memref<4x8x32xf32, #tpu.memory_space<vmem>>, vector<1x8x32xf32>,
    %c4_i32 = arith.constant 4 : i32
    %c0_84 = arith.constant 0 : index
    %c0_85 = arith.constant 0 : index
    %249 = vector.load %arg17[%c0_84, %c0_85] : memref<8x32xf32, #tpu.memory_space<vmem>>, vector<8x32xf32>
    tpu.vector_store %arg17[%c0_84, %c0_85], %223 {strides = array<i32>} : memref<8x32xf32, #tpu.memory_space<vmem>>, vector<8x32xf32>,
    %c0_86 = arith.constant 0 : index
    %c0_87 = arith.constant 0 : index
    %250 = vector.load %arg18[%c0_86, %c0_87] : memref<8x32xf32, #tpu.memory_space<vmem>>, vector<8x32xf32>
    tpu.vector_store %arg18[%c0_86, %c0_87], %221 {strides = array<i32>} : memref<8x32xf32, #tpu.memory_space<vmem>>, vector<8x32xf32>,
    %c0_88 = arith.constant 0 : index
    %c0_89 = arith.constant 0 : index
    %251 = vector.load %arg19[%c0_88, %c0_89] : memref<8x32xf32, #tpu.memory_space<vmem>>, vector<8x32xf32>
    tpu.vector_store %arg19[%c0_88, %c0_89], %239 {strides = array<i32>} : memref<8x32xf32, #tpu.memory_space<vmem>>, vector<8x32xf32>,
    %c0_90 = arith.constant 0 : index
    %c0_91 = arith.constant 0 : index
    %252 = vector.load %arg20[%c0_90, %c0_91] : memref<8x32xf32, #tpu.memory_space<vmem>>, vector<8x32xf32>
    tpu.vector_store %arg20[%c0_90, %c0_91], %237 {strides = array<i32>} : memref<8x32xf32, #tpu.memory_space<vmem>>, vector<8x32xf32>,
    %c1_i32_92 = arith.constant 1 : i32
    %253 = arith.cmpi eq, %arg0, %c1_i32_92 : i32
    %254 = arith.extui %253 : i1 to i32
    %c0_i32_93 = arith.constant 0 : i32
    %255 = arith.cmpi ne, %254, %c0_i32_93 : i32
    scf.if %255 {
      %256 = arith.truncf %223 : vector<8x32xf32> to vector<8x32xbf16>
      %c0_94 = arith.constant 0 : index
      %c0_95 = arith.constant 0 : index
      %257 = vector.load %arg9[%c0_94, %c0_95] : memref<64x32xbf16, #tpu.memory_space<vmem>>, vector<32x32xbf16>
      %cst_96 = arith.constant dense<0.000000e+00> : vector<8x32xf32>
      %258 = tpu.matmul %256, %257, %cst_96 {dimension_numbers = #tpu.dot_dimension_numbers<[1], [0], [0], [1], [0, 0, 1, 1], [], []>} : vector<8x32xbf16>, vector<32x32xbf16>, vector<8x32xf32> -> vector<8x32xf32>
      %259 = arith.truncf %239 : vector<8x32xf32> to vector<8x32xbf16>
      %c32 = arith.constant 32 : index
      %c0_97 = arith.constant 0 : index
      %260 = vector.load %arg9[%c32, %c0_97] : memref<64x32xbf16, #tpu.memory_space<vmem>>, vector<32x32xbf16>
      %cst_98 = arith.constant dense<0.000000e+00> : vector<8x32xf32>
      %261 = tpu.matmul %259, %260, %cst_98 {dimension_numbers = #tpu.dot_dimension_numbers<[1], [0], [0], [1], [0, 0, 1, 1], [], []>} : vector<8x32xbf16>, vector<32x32xbf16>, vector<8x32xf32> -> vector<8x32xf32>
      %262 = arith.addf %258, %261 : vector<8x32xf32>
      %c0_99 = arith.constant 0 : index
      %c0_100 = arith.constant 0 : index
      %263 = vector.load %arg10[%c0_99, %c0_100] : memref<1x32xf32, #tpu.memory_space<vmem>>, vector<1x32xf32>
      %264 = vector.broadcast %263 : vector<1x32xf32> to vector<8x32xf32>
      %265 = arith.addf %262, %264 : vector<8x32xf32>
      %c0_101 = arith.constant 0 : index
      %c0_102 = arith.constant 0 : index
      %266 = vector.load %arg15[%c0_101, %c0_102] : memref<8x32xf32, #tpu.memory_space<vmem>>, vector<8x32xf32>
      tpu.vector_store %arg15[%c0_101, %c0_102], %265 {strides = array<i32>} : memref<8x32xf32, #tpu.memory_space<vmem>>, vector<8x32xf32>,
      %267 = arith.truncf %221 : vector<8x32xf32> to vector<8x32xbf16>
      %c0_103 = arith.constant 0 : index
      %c0_104 = arith.constant 0 : index
      %268 = vector.load %arg11[%c0_103, %c0_104] : memref<64x32xbf16, #tpu.memory_space<vmem>>, vector<32x32xbf16>
      %cst_105 = arith.constant dense<0.000000e+00> : vector<8x32xf32>
      %269 = tpu.matmul %267, %268, %cst_105 {dimension_numbers = #tpu.dot_dimension_numbers<[1], [0], [0], [1], [0, 0, 1, 1], [], []>} : vector<8x32xbf16>, vector<32x32xbf16>, vector<8x32xf32> -> vector<8x32xf32>
      %270 = arith.truncf %237 : vector<8x32xf32> to vector<8x32xbf16>
      %c32_106 = arith.constant 32 : index
      %c0_107 = arith.constant 0 : index
      %271 = vector.load %arg11[%c32_106, %c0_107] : memref<64x32xbf16, #tpu.memory_space<vmem>>, vector<32x32xbf16>
      %cst_108 = arith.constant dense<0.000000e+00> : vector<8x32xf32>
      %272 = tpu.matmul %270, %271, %cst_108 {dimension_numbers = #tpu.dot_dimension_numbers<[1], [0], [0], [1], [0, 0, 1, 1], [], []>} : vector<8x32xbf16>, vector<32x32xbf16>, vector<8x32xf32> -> vector<8x32xf32>
      %273 = arith.addf %269, %272 : vector<8x32xf32>
      %c0_109 = arith.constant 0 : index
      %c0_110 = arith.constant 0 : index
      %274 = vector.load %arg12[%c0_109, %c0_110] : memref<1x32xf32, #tpu.memory_space<vmem>>, vector<1x32xf32>
      %275 = vector.broadcast %274 : vector<1x32xf32> to vector<8x32xf32>
      %276 = arith.addf %273, %275 : vector<8x32xf32>
      %c0_111 = arith.constant 0 : index
      %c0_112 = arith.constant 0 : index
      %277 = vector.load %arg16[%c0_111, %c0_112] : memref<8x32xf32, #tpu.memory_space<vmem>>, vector<8x32xf32>
      tpu.vector_store %arg16[%c0_111, %c0_112], %276 {strides = array<i32>} : memref<8x32xf32, #tpu.memory_space<vmem>>, vector<8x32xf32>,
    } else {
    }
    return
  }
  func.func @transform_0(%arg0: i32) -> (i32, i32, i32) {
    %c0_i32 = arith.constant 0 : i32
    %c0_i32_0 = arith.constant 0 : i32
    %c0_i32_1 = arith.constant 0 : i32
    return %arg0, %c0_i32, %c0_i32_0 : i32, i32, i32
  }
  func.func @transform_1(%arg0: i32) -> (i32, i32, i32) {
    %c1_i32 = arith.constant 1 : i32
    %0 = arith.subi %c1_i32, %arg0 : i32
    %c0_i32 = arith.constant 0 : i32
    %c0_i32_0 = arith.constant 0 : i32
    %c0_i32_1 = arith.constant 0 : i32
    return %0, %c0_i32, %c0_i32_0 : i32, i32, i32
  }
  func.func @transform_2(%arg0: i32) -> (i32, i32) {
    %c0_i32 = arith.constant 0 : i32
    %c0_i32_0 = arith.constant 0 : i32
    %c0_i32_1 = arith.constant 0 : i32
    return %c0_i32, %c0_i32_0 : i32, i32
  }
  func.func @transform_3(%arg0: i32) -> (i32, i32) {
    %c0_i32 = arith.constant 0 : i32
    %c0_i32_0 = arith.constant 0 : i32
    %c0_i32_1 = arith.constant 0 : i32
    return %c0_i32, %c0_i32_0 : i32, i32
  }
  func.func @transform_4(%arg0: i32) -> (i32, i32) {
    %c0_i32 = arith.constant 0 : i32
    %c0_i32_0 = arith.constant 0 : i32
    %c0_i32_1 = arith.constant 0 : i32
    return %c0_i32, %c0_i32_0 : i32, i32
  }
  func.func @transform_5(%arg0: i32) -> (i32, i32) {
    %c0_i32 = arith.constant 0 : i32
    %c0_i32_0 = arith.constant 0 : i32
    %c0_i32_1 = arith.constant 0 : i32
    return %c0_i32, %c0_i32_0 : i32, i32
  }
  func.func @transform_6(%arg0: i32) -> (i32, i32) {
    %c0_i32 = arith.constant 0 : i32
    %c0_i32_0 = arith.constant 0 : i32
    %c0_i32_1 = arith.constant 0 : i32
    return %c0_i32, %c0_i32_0 : i32, i32
  }
  func.func @transform_7(%arg0: i32) -> (i32, i32) {
    %c0_i32 = arith.constant 0 : i32
    %c0_i32_0 = arith.constant 0 : i32
    %c0_i32_1 = arith.constant 0 : i32
    return %c0_i32, %c0_i32_0 : i32, i32
  }
  func.func @transform_8(%arg0: i32) -> (i32, i32) {
    %c0_i32 = arith.constant 0 : i32
    %c0_i32_0 = arith.constant 0 : i32
    %c0_i32_1 = arith.constant 0 : i32
    return %c0_i32, %c0_i32_0 : i32, i32
  }
  func.func @transform_9(%arg0: i32) -> (i32, i32) {
    %c0_i32 = arith.constant 0 : i32
    %c0_i32_0 = arith.constant 0 : i32
    %c0_i32_1 = arith.constant 0 : i32
    return %c0_i32, %c0_i32_0 : i32, i32
  }
  func.func @transform_10(%arg0: i32) -> (i32, i32) {
    %c0_i32 = arith.constant 0 : i32
    %c0_i32_0 = arith.constant 0 : i32
    %c0_i32_1 = arith.constant 0 : i32
    return %c0_i32, %c0_i32_0 : i32, i32
  }
  func.func @transform_11(%arg0: i32) -> (i32, i32) {
    %c0_i32 = arith.constant 0 : i32
    %c0_i32_0 = arith.constant 0 : i32
    %c0_i32_1 = arith.constant 0 : i32
    return %c0_i32, %c0_i32_0 : i32, i32
  }
  func.func @transform_12(%arg0: i32) -> (i32, i32, i32) {
    %c0_i32 = arith.constant 0 : i32
    %c0_i32_0 = arith.constant 0 : i32
    %c0_i32_1 = arith.constant 0 : i32
    return %arg0, %c0_i32, %c0_i32_0 : i32, i32, i32
  }
  func.func @transform_13(%arg0: i32) -> (i32, i32, i32) {
    %c1_i32 = arith.constant 1 : i32
    %0 = arith.subi %c1_i32, %arg0 : i32
    %c0_i32 = arith.constant 0 : i32
    %c0_i32_0 = arith.constant 0 : i32
    %c0_i32_1 = arith.constant 0 : i32
    return %0, %c0_i32, %c0_i32_0 : i32, i32, i32
  }
  func.func @transform_14(%arg0: i32) -> (i32, i32) {
    %c0_i32 = arith.constant 0 : i32
    %c0_i32_0 = arith.constant 0 : i32
    %c0_i32_1 = arith.constant 0 : i32
    return %c0_i32, %c0_i32_0 : i32, i32
  }
  func.func @transform_15(%arg0: i32) -> (i32, i32) {
    %c0_i32 = arith.constant 0 : i32
    %c0_i32_0 = arith.constant 0 : i32
    %c0_i32_1 = arith.constant 0 : i32
    return %c0_i32, %c0_i32_0 : i32, i32
  }
}

module attributes {stable_mosaic.version = 11 : i64} {
  func.func @_encoder_kernel(%arg0: i32, %arg1: memref<4x8x32xbf16, #tpu.memory_space<vmem>>, %arg2: memref<4x8x32xbf16, #tpu.memory_space<vmem>>, %arg3: memref<32x128xbf16, #tpu.memory_space<vmem>>, %arg4: memref<32x128xbf16, #tpu.memory_space<vmem>>, %arg5: memref<1x128xf32, #tpu.memory_space<vmem>>, %arg6: memref<1x128xf32, #tpu.memory_space<vmem>>, %arg7: memref<32x128xbf16, #tpu.memory_space<vmem>>, %arg8: memref<32x128xbf16, #tpu.memory_space<vmem>>, %arg9: memref<64x32xbf16, #tpu.memory_space<vmem>>, %arg10: memref<1x32xf32, #tpu.memory_space<vmem>>, %arg11: memref<64x32xbf16, #tpu.memory_space<vmem>>, %arg12: memref<1x32xf32, #tpu.memory_space<vmem>>, %arg13: memref<4x8x32xf32, #tpu.memory_space<vmem>>, %arg14: memref<4x8x32xf32, #tpu.memory_space<vmem>>, %arg15: memref<8x32xf32, #tpu.memory_space<vmem>>, %arg16: memref<8x32xf32, #tpu.memory_space<vmem>>, %arg17: memref<8x32xf32, #tpu.memory_space<vmem>>, %arg18: memref<8x32xf32, #tpu.memory_space<vmem>>, %arg19: memref<8x32xf32, #tpu.memory_space<vmem>>, %arg20: memref<8x32xf32, #tpu.memory_space<vmem>>) attributes {dimension_semantics = [#tpu.dimension_semantics<arbitrary>], iteration_bounds = array<i64: 2>, scalar_prefetch = 0 : i64, scratch_operands = 4 : i64, tpu.core_type = #tpu.core_type<tc>, window_params = [{transform_indices = @transform_0, window_bounds = array<i64: 4, 8, 32>}, {transform_indices = @transform_1, window_bounds = array<i64: 4, 8, 32>}, {pipeline_mode = #tpu.pipeline_mode<synchronous>, transform_indices = @transform_2, window_bounds = array<i64: 32, 128>}, {pipeline_mode = #tpu.pipeline_mode<synchronous>, transform_indices = @transform_3, window_bounds = array<i64: 32, 128>}, {pipeline_mode = #tpu.pipeline_mode<synchronous>, transform_indices = @transform_4, window_bounds = array<i64: 1, 128>}, {pipeline_mode = #tpu.pipeline_mode<synchronous>, transform_indices = @transform_5, window_bounds = array<i64: 1, 128>}, {pipeline_mode = #tpu.pipeline_mode<synchronous>, transform_indices = @transform_6, window_bounds = array<i64: 32, 128>}, {pipeline_mode = #tpu.pipeline_mode<synchronous>, transform_indices = @transform_7, window_bounds = array<i64: 32, 128>}, {pipeline_mode = #tpu.pipeline_mode<synchronous>, transform_indices = @transform_8, window_bounds = array<i64: 64, 32>}, {pipeline_mode = #tpu.pipeline_mode<synchronous>, transform_indices = @transform_9, window_bounds = array<i64: 1, 32>}, {pipeline_mode = #tpu.pipeline_mode<synchronous>, transform_indices = @transform_10, window_bounds = array<i64: 64, 32>}, {pipeline_mode = #tpu.pipeline_mode<synchronous>, transform_indices = @transform_11, window_bounds = array<i64: 1, 32>}, {transform_indices = @transform_12, window_bounds = array<i64: 4, 8, 32>}, {transform_indices = @transform_13, window_bounds = array<i64: 4, 8, 32>}, {pipeline_mode = #tpu.pipeline_mode<synchronous>, transform_indices = @transform_14, window_bounds = array<i64: 8, 32>}, {pipeline_mode = #tpu.pipeline_mode<synchronous>, transform_indices = @transform_15, window_bounds = array<i64: 8, 32>}]} {
    %c0_i32 = arith.constant 0 : i32
    %0 = arith.cmpi eq, %arg0, %c0_i32 : i32
    %1 = arith.extui %0 : i1 to i32
    %c0_i32_0 = arith.constant 0 : i32
    %2 = arith.cmpi ne, %1, %c0_i32_0 : i32
    scf.if %2 {
      %cst_94 = arith.constant 0.000000e+00 : f32
      %256 = vector.broadcast %cst_94 : f32 to vector<8x32xf32>
      %c0_95 = arith.constant 0 : index
      %c0_96 = arith.constant 0 : index
      %257 = vector.load %arg17[%c0_95, %c0_96] : memref<8x32xf32, #tpu.memory_space<vmem>>, vector<8x32xf32>
      tpu.vector_store %arg17[%c0_95, %c0_96], %256 {strides = array<i32>} : memref<8x32xf32, #tpu.memory_space<vmem>>, vector<8x32xf32>,
      %cst_97 = arith.constant 0.000000e+00 : f32
      %258 = vector.broadcast %cst_97 : f32 to vector<8x32xf32>
      %c0_98 = arith.constant 0 : index
      %c0_99 = arith.constant 0 : index
      %259 = vector.load %arg18[%c0_98, %c0_99] : memref<8x32xf32, #tpu.memory_space<vmem>>, vector<8x32xf32>
      tpu.vector_store %arg18[%c0_98, %c0_99], %258 {strides = array<i32>} : memref<8x32xf32, #tpu.memory_space<vmem>>, vector<8x32xf32>,
      %cst_100 = arith.constant 0.000000e+00 : f32
      %260 = vector.broadcast %cst_100 : f32 to vector<8x32xf32>
      %c0_101 = arith.constant 0 : index
      %c0_102 = arith.constant 0 : index
      %261 = vector.load %arg19[%c0_101, %c0_102] : memref<8x32xf32, #tpu.memory_space<vmem>>, vector<8x32xf32>
      tpu.vector_store %arg19[%c0_101, %c0_102], %260 {strides = array<i32>} : memref<8x32xf32, #tpu.memory_space<vmem>>, vector<8x32xf32>,
      %cst_103 = arith.constant 0.000000e+00 : f32
      %262 = vector.broadcast %cst_103 : f32 to vector<8x32xf32>
      %c0_104 = arith.constant 0 : index
      %c0_105 = arith.constant 0 : index
      %263 = vector.load %arg20[%c0_104, %c0_105] : memref<8x32xf32, #tpu.memory_space<vmem>>, vector<8x32xf32>
      tpu.vector_store %arg20[%c0_104, %c0_105], %262 {strides = array<i32>} : memref<8x32xf32, #tpu.memory_space<vmem>>, vector<8x32xf32>,
    } else {
    }
    %c0 = arith.constant 0 : index
    %c0_1 = arith.constant 0 : index
    %3 = vector.load %arg3[%c0, %c0_1] : memref<32x128xbf16, #tpu.memory_space<vmem>>, vector<32x128xbf16>
    %c0_2 = arith.constant 0 : index
    %c0_3 = arith.constant 0 : index
    %4 = vector.load %arg4[%c0_2, %c0_3] : memref<32x128xbf16, #tpu.memory_space<vmem>>, vector<32x128xbf16>
    %c0_4 = arith.constant 0 : index
    %c0_5 = arith.constant 0 : index
    %5 = vector.load %arg7[%c0_4, %c0_5] : memref<32x128xbf16, #tpu.memory_space<vmem>>, vector<32x128xbf16>
    %c0_6 = arith.constant 0 : index
    %c0_7 = arith.constant 0 : index
    %6 = vector.load %arg8[%c0_6, %c0_7] : memref<32x128xbf16, #tpu.memory_space<vmem>>, vector<32x128xbf16>
    %c0_8 = arith.constant 0 : index
    %c0_9 = arith.constant 0 : index
    %7 = vector.load %arg5[%c0_8, %c0_9] : memref<1x128xf32, #tpu.memory_space<vmem>>, vector<1x128xf32>
    %8 = vector.shape_cast %7 : vector<1x128xf32> to vector<1x128xf32>
    %9 = vector.broadcast %8 : vector<1x128xf32> to vector<8x128xf32>
    %c0_10 = arith.constant 0 : index
    %c0_11 = arith.constant 0 : index
    %10 = vector.load %arg6[%c0_10, %c0_11] : memref<1x128xf32, #tpu.memory_space<vmem>>, vector<1x128xf32>
    %11 = vector.shape_cast %10 : vector<1x128xf32> to vector<1x128xf32>
    %12 = vector.broadcast %11 : vector<1x128xf32> to vector<8x128xf32>
    %c0_12 = arith.constant 0 : index
    %c0_13 = arith.constant 0 : index
    %13 = vector.load %arg17[%c0_12, %c0_13] : memref<8x32xf32, #tpu.memory_space<vmem>>, vector<8x32xf32>
    %c0_14 = arith.constant 0 : index
    %c0_15 = arith.constant 0 : index
    %14 = vector.load %arg18[%c0_14, %c0_15] : memref<8x32xf32, #tpu.memory_space<vmem>>, vector<8x32xf32>
    %c0_16 = arith.constant 0 : index
    %c0_17 = arith.constant 0 : index
    %15 = vector.load %arg19[%c0_16, %c0_17] : memref<8x32xf32, #tpu.memory_space<vmem>>, vector<8x32xf32>
    %c0_18 = arith.constant 0 : index
    %c0_19 = arith.constant 0 : index
    %16 = vector.load %arg20[%c0_18, %c0_19] : memref<8x32xf32, #tpu.memory_space<vmem>>, vector<8x32xf32>
    %c0_i32_20 = arith.constant 0 : i32
    %17 = arith.index_cast %c0_i32_20 : i32 to index
    %c0_21 = arith.constant 0 : index
    %c0_22 = arith.constant 0 : index
    %18 = vector.load %arg1[%17, %c0_21, %c0_22] : memref<4x8x32xbf16, #tpu.memory_space<vmem>>, vector<1x8x32xbf16>
    %19 = vector.shape_cast %18 : vector<1x8x32xbf16> to vector<8x32xbf16>
    %c3_i32 = arith.constant 3 : i32
    %20 = arith.subi %c3_i32, %c0_i32_20 : i32
    %21 = arith.index_cast %20 : i32 to index
    %c0_23 = arith.constant 0 : index
    %c0_24 = arith.constant 0 : index
    %22 = vector.load %arg2[%21, %c0_23, %c0_24] : memref<4x8x32xbf16, #tpu.memory_space<vmem>>, vector<1x8x32xbf16>
    %23 = vector.shape_cast %22 : vector<1x8x32xbf16> to vector<8x32xbf16>
    %cst = arith.constant dense<0.000000e+00> : vector<8x128xf32>
    %24 = tpu.matmul %19, %3, %cst {dimension_numbers = #tpu.dot_dimension_numbers<[1], [0], [0], [1], [0, 0, 1, 1], [], []>} : vector<8x32xbf16>, vector<32x128xbf16>, vector<8x128xf32> -> vector<8x128xf32>
    %25 = arith.truncf %13 : vector<8x32xf32> to vector<8x32xbf16>
    %cst_25 = arith.constant dense<0.000000e+00> : vector<8x128xf32>
    %26 = tpu.matmul %25, %5, %cst_25 {dimension_numbers = #tpu.dot_dimension_numbers<[1], [0], [0], [1], [0, 0, 1, 1], [], []>} : vector<8x32xbf16>, vector<32x128xbf16>, vector<8x128xf32> -> vector<8x128xf32>
    %27 = arith.addf %24, %26 : vector<8x128xf32>
    %28 = arith.addf %27, %9 : vector<8x128xf32>
    %cst_26 = arith.constant dense<0.000000e+00> : vector<8x128xf32>
    %29 = tpu.matmul %23, %4, %cst_26 {dimension_numbers = #tpu.dot_dimension_numbers<[1], [0], [0], [1], [0, 0, 1, 1], [], []>} : vector<8x32xbf16>, vector<32x128xbf16>, vector<8x128xf32> -> vector<8x128xf32>
    %30 = arith.truncf %15 : vector<8x32xf32> to vector<8x32xbf16>
    %cst_27 = arith.constant dense<0.000000e+00> : vector<8x128xf32>
    %31 = tpu.matmul %30, %6, %cst_27 {dimension_numbers = #tpu.dot_dimension_numbers<[1], [0], [0], [1], [0, 0, 1, 1], [], []>} : vector<8x32xbf16>, vector<32x128xbf16>, vector<8x128xf32> -> vector<8x128xf32>
    %32 = arith.addf %29, %31 : vector<8x128xf32>
    %33 = arith.addf %32, %12 : vector<8x128xf32>
    %34 = vector.extract_strided_slice %28 {offsets = [0, 0], sizes = [8, 96], strides = [1, 1]} : vector<8x128xf32> to vector<8x96xf32>
    %35 = arith.negf %34 : vector<8x96xf32>
    %36 = math.exp %35 : vector<8x96xf32>
    %cst_28 = arith.constant 1.000000e+00 : f32
    %37 = vector.broadcast %cst_28 : f32 to vector<8x96xf32>
    %38 = arith.addf %37, %36 : vector<8x96xf32>
    %39 = arith.divf %37, %38 : vector<8x96xf32>
    %40 = vector.extract_strided_slice %39 {offsets = [0, 0], sizes = [8, 32], strides = [1, 1]} : vector<8x96xf32> to vector<8x32xf32>
    %41 = vector.extract_strided_slice %39 {offsets = [0, 32], sizes = [8, 32], strides = [1, 1]} : vector<8x96xf32> to vector<8x32xf32>
    %42 = vector.extract_strided_slice %39 {offsets = [0, 64], sizes = [8, 32], strides = [1, 1]} : vector<8x96xf32> to vector<8x32xf32>
    %43 = vector.extract_strided_slice %28 {offsets = [0, 96], sizes = [8, 32], strides = [1, 1]} : vector<8x128xf32> to vector<8x32xf32>
    %44 = math.tanh %43 : vector<8x32xf32>
    %45 = arith.mulf %41, %14 : vector<8x32xf32>
    %46 = arith.mulf %40, %44 : vector<8x32xf32>
    %47 = arith.addf %45, %46 : vector<8x32xf32>
    %48 = math.tanh %47 : vector<8x32xf32>
    %49 = arith.mulf %42, %48 : vector<8x32xf32>
    %50 = vector.extract_strided_slice %33 {offsets = [0, 0], sizes = [8, 96], strides = [1, 1]} : vector<8x128xf32> to vector<8x96xf32>
    %51 = arith.negf %50 : vector<8x96xf32>
    %52 = math.exp %51 : vector<8x96xf32>
    %cst_29 = arith.constant 1.000000e+00 : f32
    %53 = vector.broadcast %cst_29 : f32 to vector<8x96xf32>
    %54 = arith.addf %53, %52 : vector<8x96xf32>
    %55 = arith.divf %53, %54 : vector<8x96xf32>
    %56 = vector.extract_strided_slice %55 {offsets = [0, 0], sizes = [8, 32], strides = [1, 1]} : vector<8x96xf32> to vector<8x32xf32>
    %57 = vector.extract_strided_slice %55 {offsets = [0, 32], sizes = [8, 32], strides = [1, 1]} : vector<8x96xf32> to vector<8x32xf32>
    %58 = vector.extract_strided_slice %55 {offsets = [0, 64], sizes = [8, 32], strides = [1, 1]} : vector<8x96xf32> to vector<8x32xf32>
    %59 = vector.extract_strided_slice %33 {offsets = [0, 96], sizes = [8, 32], strides = [1, 1]} : vector<8x128xf32> to vector<8x32xf32>
    %60 = math.tanh %59 : vector<8x32xf32>
    %61 = arith.mulf %57, %16 : vector<8x32xf32>
    %62 = arith.mulf %56, %60 : vector<8x32xf32>
    %63 = arith.addf %61, %62 : vector<8x32xf32>
    %64 = math.tanh %63 : vector<8x32xf32>
    %65 = arith.mulf %58, %64 : vector<8x32xf32>
    %66 = arith.index_cast %c0_i32_20 : i32 to index
    %c0_30 = arith.constant 0 : index
    %c0_31 = arith.constant 0 : index
    %67 = vector.load %arg13[%66, %c0_30, %c0_31] : memref<4x8x32xf32, #tpu.memory_space<vmem>>, vector<1x8x32xf32>
    %68 = vector.shape_cast %67 : vector<1x8x32xf32> to vector<8x32xf32>
    %69 = vector.shape_cast %49 : vector<8x32xf32> to vector<1x8x32xf32>
    tpu.vector_store %arg13[%66, %c0_30, %c0_31], %69 {strides = array<i32>} : memref<4x8x32xf32, #tpu.memory_space<vmem>>, vector<1x8x32xf32>,
    %c3_i32_32 = arith.constant 3 : i32
    %70 = arith.subi %c3_i32_32, %c0_i32_20 : i32
    %71 = arith.index_cast %70 : i32 to index
    %c0_33 = arith.constant 0 : index
    %c0_34 = arith.constant 0 : index
    %72 = vector.load %arg14[%71, %c0_33, %c0_34] : memref<4x8x32xf32, #tpu.memory_space<vmem>>, vector<1x8x32xf32>
    %73 = vector.shape_cast %72 : vector<1x8x32xf32> to vector<8x32xf32>
    %74 = vector.shape_cast %65 : vector<8x32xf32> to vector<1x8x32xf32>
    tpu.vector_store %arg14[%71, %c0_33, %c0_34], %74 {strides = array<i32>} : memref<4x8x32xf32, #tpu.memory_space<vmem>>, vector<1x8x32xf32>,
    %c1_i32 = arith.constant 1 : i32
    %75 = arith.index_cast %c1_i32 : i32 to index
    %c0_35 = arith.constant 0 : index
    %c0_36 = arith.constant 0 : index
    %76 = vector.load %arg1[%75, %c0_35, %c0_36] : memref<4x8x32xbf16, #tpu.memory_space<vmem>>, vector<1x8x32xbf16>
    %77 = vector.shape_cast %76 : vector<1x8x32xbf16> to vector<8x32xbf16>
    %c3_i32_37 = arith.constant 3 : i32
    %78 = arith.subi %c3_i32_37, %c1_i32 : i32
    %79 = arith.index_cast %78 : i32 to index
    %c0_38 = arith.constant 0 : index
    %c0_39 = arith.constant 0 : index
    %80 = vector.load %arg2[%79, %c0_38, %c0_39] : memref<4x8x32xbf16, #tpu.memory_space<vmem>>, vector<1x8x32xbf16>
    %81 = vector.shape_cast %80 : vector<1x8x32xbf16> to vector<8x32xbf16>
    %cst_40 = arith.constant dense<0.000000e+00> : vector<8x128xf32>
    %82 = tpu.matmul %77, %3, %cst_40 {dimension_numbers = #tpu.dot_dimension_numbers<[1], [0], [0], [1], [0, 0, 1, 1], [], []>} : vector<8x32xbf16>, vector<32x128xbf16>, vector<8x128xf32> -> vector<8x128xf32>
    %83 = arith.truncf %49 : vector<8x32xf32> to vector<8x32xbf16>
    %cst_41 = arith.constant dense<0.000000e+00> : vector<8x128xf32>
    %84 = tpu.matmul %83, %5, %cst_41 {dimension_numbers = #tpu.dot_dimension_numbers<[1], [0], [0], [1], [0, 0, 1, 1], [], []>} : vector<8x32xbf16>, vector<32x128xbf16>, vector<8x128xf32> -> vector<8x128xf32>
    %85 = arith.addf %82, %84 : vector<8x128xf32>
    %86 = arith.addf %85, %9 : vector<8x128xf32>
    %cst_42 = arith.constant dense<0.000000e+00> : vector<8x128xf32>
    %87 = tpu.matmul %81, %4, %cst_42 {dimension_numbers = #tpu.dot_dimension_numbers<[1], [0], [0], [1], [0, 0, 1, 1], [], []>} : vector<8x32xbf16>, vector<32x128xbf16>, vector<8x128xf32> -> vector<8x128xf32>
    %88 = arith.truncf %65 : vector<8x32xf32> to vector<8x32xbf16>
    %cst_43 = arith.constant dense<0.000000e+00> : vector<8x128xf32>
    %89 = tpu.matmul %88, %6, %cst_43 {dimension_numbers = #tpu.dot_dimension_numbers<[1], [0], [0], [1], [0, 0, 1, 1], [], []>} : vector<8x32xbf16>, vector<32x128xbf16>, vector<8x128xf32> -> vector<8x128xf32>
    %90 = arith.addf %87, %89 : vector<8x128xf32>
    %91 = arith.addf %90, %12 : vector<8x128xf32>
    %92 = vector.extract_strided_slice %86 {offsets = [0, 0], sizes = [8, 96], strides = [1, 1]} : vector<8x128xf32> to vector<8x96xf32>
    %93 = arith.negf %92 : vector<8x96xf32>
    %94 = math.exp %93 : vector<8x96xf32>
    %cst_44 = arith.constant 1.000000e+00 : f32
    %95 = vector.broadcast %cst_44 : f32 to vector<8x96xf32>
    %96 = arith.addf %95, %94 : vector<8x96xf32>
    %97 = arith.divf %95, %96 : vector<8x96xf32>
    %98 = vector.extract_strided_slice %97 {offsets = [0, 0], sizes = [8, 32], strides = [1, 1]} : vector<8x96xf32> to vector<8x32xf32>
    %99 = vector.extract_strided_slice %97 {offsets = [0, 32], sizes = [8, 32], strides = [1, 1]} : vector<8x96xf32> to vector<8x32xf32>
    %100 = vector.extract_strided_slice %97 {offsets = [0, 64], sizes = [8, 32], strides = [1, 1]} : vector<8x96xf32> to vector<8x32xf32>
    %101 = vector.extract_strided_slice %86 {offsets = [0, 96], sizes = [8, 32], strides = [1, 1]} : vector<8x128xf32> to vector<8x32xf32>
    %102 = math.tanh %101 : vector<8x32xf32>
    %103 = arith.mulf %99, %47 : vector<8x32xf32>
    %104 = arith.mulf %98, %102 : vector<8x32xf32>
    %105 = arith.addf %103, %104 : vector<8x32xf32>
    %106 = math.tanh %105 : vector<8x32xf32>
    %107 = arith.mulf %100, %106 : vector<8x32xf32>
    %108 = vector.extract_strided_slice %91 {offsets = [0, 0], sizes = [8, 96], strides = [1, 1]} : vector<8x128xf32> to vector<8x96xf32>
    %109 = arith.negf %108 : vector<8x96xf32>
    %110 = math.exp %109 : vector<8x96xf32>
    %cst_45 = arith.constant 1.000000e+00 : f32
    %111 = vector.broadcast %cst_45 : f32 to vector<8x96xf32>
    %112 = arith.addf %111, %110 : vector<8x96xf32>
    %113 = arith.divf %111, %112 : vector<8x96xf32>
    %114 = vector.extract_strided_slice %113 {offsets = [0, 0], sizes = [8, 32], strides = [1, 1]} : vector<8x96xf32> to vector<8x32xf32>
    %115 = vector.extract_strided_slice %113 {offsets = [0, 32], sizes = [8, 32], strides = [1, 1]} : vector<8x96xf32> to vector<8x32xf32>
    %116 = vector.extract_strided_slice %113 {offsets = [0, 64], sizes = [8, 32], strides = [1, 1]} : vector<8x96xf32> to vector<8x32xf32>
    %117 = vector.extract_strided_slice %91 {offsets = [0, 96], sizes = [8, 32], strides = [1, 1]} : vector<8x128xf32> to vector<8x32xf32>
    %118 = math.tanh %117 : vector<8x32xf32>
    %119 = arith.mulf %115, %63 : vector<8x32xf32>
    %120 = arith.mulf %114, %118 : vector<8x32xf32>
    %121 = arith.addf %119, %120 : vector<8x32xf32>
    %122 = math.tanh %121 : vector<8x32xf32>
    %123 = arith.mulf %116, %122 : vector<8x32xf32>
    %124 = arith.index_cast %c1_i32 : i32 to index
    %c0_46 = arith.constant 0 : index
    %c0_47 = arith.constant 0 : index
    %125 = vector.load %arg13[%124, %c0_46, %c0_47] : memref<4x8x32xf32, #tpu.memory_space<vmem>>, vector<1x8x32xf32>
    %126 = vector.shape_cast %125 : vector<1x8x32xf32> to vector<8x32xf32>
    %127 = vector.shape_cast %107 : vector<8x32xf32> to vector<1x8x32xf32>
    tpu.vector_store %arg13[%124, %c0_46, %c0_47], %127 {strides = array<i32>} : memref<4x8x32xf32, #tpu.memory_space<vmem>>, vector<1x8x32xf32>,
    %c3_i32_48 = arith.constant 3 : i32
    %128 = arith.subi %c3_i32_48, %c1_i32 : i32
    %129 = arith.index_cast %128 : i32 to index
    %c0_49 = arith.constant 0 : index
    %c0_50 = arith.constant 0 : index
    %130 = vector.load %arg14[%129, %c0_49, %c0_50] : memref<4x8x32xf32, #tpu.memory_space<vmem>>, vector<1x8x32xf32>
    %131 = vector.shape_cast %130 : vector<1x8x32xf32> to vector<8x32xf32>
    %132 = vector.shape_cast %123 : vector<8x32xf32> to vector<1x8x32xf32>
    tpu.vector_store %arg14[%129, %c0_49, %c0_50], %132 {strides = array<i32>} : memref<4x8x32xf32, #tpu.memory_space<vmem>>, vector<1x8x32xf32>,
    %c2_i32 = arith.constant 2 : i32
    %133 = arith.index_cast %c2_i32 : i32 to index
    %c0_51 = arith.constant 0 : index
    %c0_52 = arith.constant 0 : index
    %134 = vector.load %arg1[%133, %c0_51, %c0_52] : memref<4x8x32xbf16, #tpu.memory_space<vmem>>, vector<1x8x32xbf16>
    %135 = vector.shape_cast %134 : vector<1x8x32xbf16> to vector<8x32xbf16>
    %c3_i32_53 = arith.constant 3 : i32
    %136 = arith.subi %c3_i32_53, %c2_i32 : i32
    %137 = arith.index_cast %136 : i32 to index
    %c0_54 = arith.constant 0 : index
    %c0_55 = arith.constant 0 : index
    %138 = vector.load %arg2[%137, %c0_54, %c0_55] : memref<4x8x32xbf16, #tpu.memory_space<vmem>>, vector<1x8x32xbf16>
    %139 = vector.shape_cast %138 : vector<1x8x32xbf16> to vector<8x32xbf16>
    %cst_56 = arith.constant dense<0.000000e+00> : vector<8x128xf32>
    %140 = tpu.matmul %135, %3, %cst_56 {dimension_numbers = #tpu.dot_dimension_numbers<[1], [0], [0], [1], [0, 0, 1, 1], [], []>} : vector<8x32xbf16>, vector<32x128xbf16>, vector<8x128xf32> -> vector<8x128xf32>
    %141 = arith.truncf %107 : vector<8x32xf32> to vector<8x32xbf16>
    %cst_57 = arith.constant dense<0.000000e+00> : vector<8x128xf32>
    %142 = tpu.matmul %141, %5, %cst_57 {dimension_numbers = #tpu.dot_dimension_numbers<[1], [0], [0], [1], [0, 0, 1, 1], [], []>} : vector<8x32xbf16>, vector<32x128xbf16>, vector<8x128xf32> -> vector<8x128xf32>
    %143 = arith.addf %140, %142 : vector<8x128xf32>
    %144 = arith.addf %143, %9 : vector<8x128xf32>
    %cst_58 = arith.constant dense<0.000000e+00> : vector<8x128xf32>
    %145 = tpu.matmul %139, %4, %cst_58 {dimension_numbers = #tpu.dot_dimension_numbers<[1], [0], [0], [1], [0, 0, 1, 1], [], []>} : vector<8x32xbf16>, vector<32x128xbf16>, vector<8x128xf32> -> vector<8x128xf32>
    %146 = arith.truncf %123 : vector<8x32xf32> to vector<8x32xbf16>
    %cst_59 = arith.constant dense<0.000000e+00> : vector<8x128xf32>
    %147 = tpu.matmul %146, %6, %cst_59 {dimension_numbers = #tpu.dot_dimension_numbers<[1], [0], [0], [1], [0, 0, 1, 1], [], []>} : vector<8x32xbf16>, vector<32x128xbf16>, vector<8x128xf32> -> vector<8x128xf32>
    %148 = arith.addf %145, %147 : vector<8x128xf32>
    %149 = arith.addf %148, %12 : vector<8x128xf32>
    %150 = vector.extract_strided_slice %144 {offsets = [0, 0], sizes = [8, 96], strides = [1, 1]} : vector<8x128xf32> to vector<8x96xf32>
    %151 = arith.negf %150 : vector<8x96xf32>
    %152 = math.exp %151 : vector<8x96xf32>
    %cst_60 = arith.constant 1.000000e+00 : f32
    %153 = vector.broadcast %cst_60 : f32 to vector<8x96xf32>
    %154 = arith.addf %153, %152 : vector<8x96xf32>
    %155 = arith.divf %153, %154 : vector<8x96xf32>
    %156 = vector.extract_strided_slice %155 {offsets = [0, 0], sizes = [8, 32], strides = [1, 1]} : vector<8x96xf32> to vector<8x32xf32>
    %157 = vector.extract_strided_slice %155 {offsets = [0, 32], sizes = [8, 32], strides = [1, 1]} : vector<8x96xf32> to vector<8x32xf32>
    %158 = vector.extract_strided_slice %155 {offsets = [0, 64], sizes = [8, 32], strides = [1, 1]} : vector<8x96xf32> to vector<8x32xf32>
    %159 = vector.extract_strided_slice %144 {offsets = [0, 96], sizes = [8, 32], strides = [1, 1]} : vector<8x128xf32> to vector<8x32xf32>
    %160 = math.tanh %159 : vector<8x32xf32>
    %161 = arith.mulf %157, %105 : vector<8x32xf32>
    %162 = arith.mulf %156, %160 : vector<8x32xf32>
    %163 = arith.addf %161, %162 : vector<8x32xf32>
    %164 = math.tanh %163 : vector<8x32xf32>
    %165 = arith.mulf %158, %164 : vector<8x32xf32>
    %166 = vector.extract_strided_slice %149 {offsets = [0, 0], sizes = [8, 96], strides = [1, 1]} : vector<8x128xf32> to vector<8x96xf32>
    %167 = arith.negf %166 : vector<8x96xf32>
    %168 = math.exp %167 : vector<8x96xf32>
    %cst_61 = arith.constant 1.000000e+00 : f32
    %169 = vector.broadcast %cst_61 : f32 to vector<8x96xf32>
    %170 = arith.addf %169, %168 : vector<8x96xf32>
    %171 = arith.divf %169, %170 : vector<8x96xf32>
    %172 = vector.extract_strided_slice %171 {offsets = [0, 0], sizes = [8, 32], strides = [1, 1]} : vector<8x96xf32> to vector<8x32xf32>
    %173 = vector.extract_strided_slice %171 {offsets = [0, 32], sizes = [8, 32], strides = [1, 1]} : vector<8x96xf32> to vector<8x32xf32>
    %174 = vector.extract_strided_slice %171 {offsets = [0, 64], sizes = [8, 32], strides = [1, 1]} : vector<8x96xf32> to vector<8x32xf32>
    %175 = vector.extract_strided_slice %149 {offsets = [0, 96], sizes = [8, 32], strides = [1, 1]} : vector<8x128xf32> to vector<8x32xf32>
    %176 = math.tanh %175 : vector<8x32xf32>
    %177 = arith.mulf %173, %121 : vector<8x32xf32>
    %178 = arith.mulf %172, %176 : vector<8x32xf32>
    %179 = arith.addf %177, %178 : vector<8x32xf32>
    %180 = math.tanh %179 : vector<8x32xf32>
    %181 = arith.mulf %174, %180 : vector<8x32xf32>
    %182 = arith.index_cast %c2_i32 : i32 to index
    %c0_62 = arith.constant 0 : index
    %c0_63 = arith.constant 0 : index
    %183 = vector.load %arg13[%182, %c0_62, %c0_63] : memref<4x8x32xf32, #tpu.memory_space<vmem>>, vector<1x8x32xf32>
    %184 = vector.shape_cast %183 : vector<1x8x32xf32> to vector<8x32xf32>
    %185 = vector.shape_cast %165 : vector<8x32xf32> to vector<1x8x32xf32>
    tpu.vector_store %arg13[%182, %c0_62, %c0_63], %185 {strides = array<i32>} : memref<4x8x32xf32, #tpu.memory_space<vmem>>, vector<1x8x32xf32>,
    %c3_i32_64 = arith.constant 3 : i32
    %186 = arith.subi %c3_i32_64, %c2_i32 : i32
    %187 = arith.index_cast %186 : i32 to index
    %c0_65 = arith.constant 0 : index
    %c0_66 = arith.constant 0 : index
    %188 = vector.load %arg14[%187, %c0_65, %c0_66] : memref<4x8x32xf32, #tpu.memory_space<vmem>>, vector<1x8x32xf32>
    %189 = vector.shape_cast %188 : vector<1x8x32xf32> to vector<8x32xf32>
    %190 = vector.shape_cast %181 : vector<8x32xf32> to vector<1x8x32xf32>
    tpu.vector_store %arg14[%187, %c0_65, %c0_66], %190 {strides = array<i32>} : memref<4x8x32xf32, #tpu.memory_space<vmem>>, vector<1x8x32xf32>,
    %c3_i32_67 = arith.constant 3 : i32
    %191 = arith.index_cast %c3_i32_67 : i32 to index
    %c0_68 = arith.constant 0 : index
    %c0_69 = arith.constant 0 : index
    %192 = vector.load %arg1[%191, %c0_68, %c0_69] : memref<4x8x32xbf16, #tpu.memory_space<vmem>>, vector<1x8x32xbf16>
    %193 = vector.shape_cast %192 : vector<1x8x32xbf16> to vector<8x32xbf16>
    %c3_i32_70 = arith.constant 3 : i32
    %194 = arith.subi %c3_i32_70, %c3_i32_67 : i32
    %195 = arith.index_cast %194 : i32 to index
    %c0_71 = arith.constant 0 : index
    %c0_72 = arith.constant 0 : index
    %196 = vector.load %arg2[%195, %c0_71, %c0_72] : memref<4x8x32xbf16, #tpu.memory_space<vmem>>, vector<1x8x32xbf16>
    %197 = vector.shape_cast %196 : vector<1x8x32xbf16> to vector<8x32xbf16>
    %cst_73 = arith.constant dense<0.000000e+00> : vector<8x128xf32>
    %198 = tpu.matmul %193, %3, %cst_73 {dimension_numbers = #tpu.dot_dimension_numbers<[1], [0], [0], [1], [0, 0, 1, 1], [], []>} : vector<8x32xbf16>, vector<32x128xbf16>, vector<8x128xf32> -> vector<8x128xf32>
    %199 = arith.truncf %165 : vector<8x32xf32> to vector<8x32xbf16>
    %cst_74 = arith.constant dense<0.000000e+00> : vector<8x128xf32>
    %200 = tpu.matmul %199, %5, %cst_74 {dimension_numbers = #tpu.dot_dimension_numbers<[1], [0], [0], [1], [0, 0, 1, 1], [], []>} : vector<8x32xbf16>, vector<32x128xbf16>, vector<8x128xf32> -> vector<8x128xf32>
    %201 = arith.addf %198, %200 : vector<8x128xf32>
    %202 = arith.addf %201, %9 : vector<8x128xf32>
    %cst_75 = arith.constant dense<0.000000e+00> : vector<8x128xf32>
    %203 = tpu.matmul %197, %4, %cst_75 {dimension_numbers = #tpu.dot_dimension_numbers<[1], [0], [0], [1], [0, 0, 1, 1], [], []>} : vector<8x32xbf16>, vector<32x128xbf16>, vector<8x128xf32> -> vector<8x128xf32>
    %204 = arith.truncf %181 : vector<8x32xf32> to vector<8x32xbf16>
    %cst_76 = arith.constant dense<0.000000e+00> : vector<8x128xf32>
    %205 = tpu.matmul %204, %6, %cst_76 {dimension_numbers = #tpu.dot_dimension_numbers<[1], [0], [0], [1], [0, 0, 1, 1], [], []>} : vector<8x32xbf16>, vector<32x128xbf16>, vector<8x128xf32> -> vector<8x128xf32>
    %206 = arith.addf %203, %205 : vector<8x128xf32>
    %207 = arith.addf %206, %12 : vector<8x128xf32>
    %208 = vector.extract_strided_slice %202 {offsets = [0, 0], sizes = [8, 96], strides = [1, 1]} : vector<8x128xf32> to vector<8x96xf32>
    %209 = arith.negf %208 : vector<8x96xf32>
    %210 = math.exp %209 : vector<8x96xf32>
    %cst_77 = arith.constant 1.000000e+00 : f32
    %211 = vector.broadcast %cst_77 : f32 to vector<8x96xf32>
    %212 = arith.addf %211, %210 : vector<8x96xf32>
    %213 = arith.divf %211, %212 : vector<8x96xf32>
    %214 = vector.extract_strided_slice %213 {offsets = [0, 0], sizes = [8, 32], strides = [1, 1]} : vector<8x96xf32> to vector<8x32xf32>
    %215 = vector.extract_strided_slice %213 {offsets = [0, 32], sizes = [8, 32], strides = [1, 1]} : vector<8x96xf32> to vector<8x32xf32>
    %216 = vector.extract_strided_slice %213 {offsets = [0, 64], sizes = [8, 32], strides = [1, 1]} : vector<8x96xf32> to vector<8x32xf32>
    %217 = vector.extract_strided_slice %202 {offsets = [0, 96], sizes = [8, 32], strides = [1, 1]} : vector<8x128xf32> to vector<8x32xf32>
    %218 = math.tanh %217 : vector<8x32xf32>
    %219 = arith.mulf %215, %163 : vector<8x32xf32>
    %220 = arith.mulf %214, %218 : vector<8x32xf32>
    %221 = arith.addf %219, %220 : vector<8x32xf32>
    %222 = math.tanh %221 : vector<8x32xf32>
    %223 = arith.mulf %216, %222 : vector<8x32xf32>
    %224 = vector.extract_strided_slice %207 {offsets = [0, 0], sizes = [8, 96], strides = [1, 1]} : vector<8x128xf32> to vector<8x96xf32>
    %225 = arith.negf %224 : vector<8x96xf32>
    %226 = math.exp %225 : vector<8x96xf32>
    %cst_78 = arith.constant 1.000000e+00 : f32
    %227 = vector.broadcast %cst_78 : f32 to vector<8x96xf32>
    %228 = arith.addf %227, %226 : vector<8x96xf32>
    %229 = arith.divf %227, %228 : vector<8x96xf32>
    %230 = vector.extract_strided_slice %229 {offsets = [0, 0], sizes = [8, 32], strides = [1, 1]} : vector<8x96xf32> to vector<8x32xf32>
    %231 = vector.extract_strided_slice %229 {offsets = [0, 32], sizes = [8, 32], strides = [1, 1]} : vector<8x96xf32> to vector<8x32xf32>
    %232 = vector.extract_strided_slice %229 {offsets = [0, 64], sizes = [8, 32], strides = [1, 1]} : vector<8x96xf32> to vector<8x32xf32>
    %233 = vector.extract_strided_slice %207 {offsets = [0, 96], sizes = [8, 32], strides = [1, 1]} : vector<8x128xf32> to vector<8x32xf32>
    %234 = math.tanh %233 : vector<8x32xf32>
    %235 = arith.mulf %231, %179 : vector<8x32xf32>
    %236 = arith.mulf %230, %234 : vector<8x32xf32>
    %237 = arith.addf %235, %236 : vector<8x32xf32>
    %238 = math.tanh %237 : vector<8x32xf32>
    %239 = arith.mulf %232, %238 : vector<8x32xf32>
    %240 = arith.index_cast %c3_i32_67 : i32 to index
    %c0_79 = arith.constant 0 : index
    %c0_80 = arith.constant 0 : index
    %241 = vector.load %arg13[%240, %c0_79, %c0_80] : memref<4x8x32xf32, #tpu.memory_space<vmem>>, vector<1x8x32xf32>
    %242 = vector.shape_cast %241 : vector<1x8x32xf32> to vector<8x32xf32>
    %243 = vector.shape_cast %223 : vector<8x32xf32> to vector<1x8x32xf32>
    tpu.vector_store %arg13[%240, %c0_79, %c0_80], %243 {strides = array<i32>} : memref<4x8x32xf32, #tpu.memory_space<vmem>>, vector<1x8x32xf32>,
    %c3_i32_81 = arith.constant 3 : i32
    %244 = arith.subi %c3_i32_81, %c3_i32_67 : i32
    %245 = arith.index_cast %244 : i32 to index
    %c0_82 = arith.constant 0 : index
    %c0_83 = arith.constant 0 : index
    %246 = vector.load %arg14[%245, %c0_82, %c0_83] : memref<4x8x32xf32, #tpu.memory_space<vmem>>, vector<1x8x32xf32>
    %247 = vector.shape_cast %246 : vector<1x8x32xf32> to vector<8x32xf32>
    %248 = vector.shape_cast %239 : vector<8x32xf32> to vector<1x8x32xf32>
    tpu.vector_store %arg14[%245, %c0_82, %c0_83], %248 {strides = array<i32>} : memref<4x8x32xf32, #tpu.memory_space<vmem>>, vector<1x8x32xf32>,
    %c4_i32 = arith.constant 4 : i32
    %c0_84 = arith.constant 0 : index
    %c0_85 = arith.constant 0 : index
    %249 = vector.load %arg17[%c0_84, %c0_85] : memref<8x32xf32, #tpu.memory_space<vmem>>, vector<8x32xf32>
    tpu.vector_store %arg17[%c0_84, %c0_85], %223 {strides = array<i32>} : memref<8x32xf32, #tpu.memory_space<vmem>>, vector<8x32xf32>,
    %c0_86 = arith.constant 0 : index
    %c0_87 = arith.constant 0 : index
    %250 = vector.load %arg18[%c0_86, %c0_87] : memref<8x32xf32, #tpu.memory_space<vmem>>, vector<8x32xf32>
    tpu.vector_store %arg18[%c0_86, %c0_87], %221 {strides = array<i32>} : memref<8x32xf32, #tpu.memory_space<vmem>>, vector<8x32xf32>,
    %c0_88 = arith.constant 0 : index
    %c0_89 = arith.constant 0 : index
    %251 = vector.load %arg19[%c0_88, %c0_89] : memref<8x32xf32, #tpu.memory_space<vmem>>, vector<8x32xf32>
    tpu.vector_store %arg19[%c0_88, %c0_89], %239 {strides = array<i32>} : memref<8x32xf32, #tpu.memory_space<vmem>>, vector<8x32xf32>,
    %c0_90 = arith.constant 0 : index
    %c0_91 = arith.constant 0 : index
    %252 = vector.load %arg20[%c0_90, %c0_91] : memref<8x32xf32, #tpu.memory_space<vmem>>, vector<8x32xf32>
    tpu.vector_store %arg20[%c0_90, %c0_91], %237 {strides = array<i32>} : memref<8x32xf32, #tpu.memory_space<vmem>>, vector<8x32xf32>,
    %c1_i32_92 = arith.constant 1 : i32
    %253 = arith.cmpi eq, %arg0, %c1_i32_92 : i32
    %254 = arith.extui %253 : i1 to i32
    %c0_i32_93 = arith.constant 0 : i32
    %255 = arith.cmpi ne, %254, %c0_i32_93 : i32
    scf.if %255 {
      %256 = arith.truncf %223 : vector<8x32xf32> to vector<8x32xbf16>
      %c0_94 = arith.constant 0 : index
      %c0_95 = arith.constant 0 : index
      %257 = vector.load %arg9[%c0_94, %c0_95] : memref<64x32xbf16, #tpu.memory_space<vmem>>, vector<32x32xbf16>
      %cst_96 = arith.constant dense<0.000000e+00> : vector<8x32xf32>
      %258 = tpu.matmul %256, %257, %cst_96 {dimension_numbers = #tpu.dot_dimension_numbers<[1], [0], [0], [1], [0, 0, 1, 1], [], []>} : vector<8x32xbf16>, vector<32x32xbf16>, vector<8x32xf32> -> vector<8x32xf32>
      %259 = arith.truncf %239 : vector<8x32xf32> to vector<8x32xbf16>
      %c32 = arith.constant 32 : index
      %c0_97 = arith.constant 0 : index
      %260 = vector.load %arg9[%c32, %c0_97] : memref<64x32xbf16, #tpu.memory_space<vmem>>, vector<32x32xbf16>
      %cst_98 = arith.constant dense<0.000000e+00> : vector<8x32xf32>
      %261 = tpu.matmul %259, %260, %cst_98 {dimension_numbers = #tpu.dot_dimension_numbers<[1], [0], [0], [1], [0, 0, 1, 1], [], []>} : vector<8x32xbf16>, vector<32x32xbf16>, vector<8x32xf32> -> vector<8x32xf32>
      %262 = arith.addf %258, %261 : vector<8x32xf32>
      %c0_99 = arith.constant 0 : index
      %c0_100 = arith.constant 0 : index
      %263 = vector.load %arg10[%c0_99, %c0_100] : memref<1x32xf32, #tpu.memory_space<vmem>>, vector<1x32xf32>
      %264 = vector.broadcast %263 : vector<1x32xf32> to vector<8x32xf32>
      %265 = arith.addf %262, %264 : vector<8x32xf32>
      %c0_101 = arith.constant 0 : index
      %c0_102 = arith.constant 0 : index
      %266 = vector.load %arg15[%c0_101, %c0_102] : memref<8x32xf32, #tpu.memory_space<vmem>>, vector<8x32xf32>
      tpu.vector_store %arg15[%c0_101, %c0_102], %265 {strides = array<i32>} : memref<8x32xf32, #tpu.memory_space<vmem>>, vector<8x32xf32>,
      %267 = arith.truncf %221 : vector<8x32xf32> to vector<8x32xbf16>
      %c0_103 = arith.constant 0 : index
      %c0_104 = arith.constant 0 : index
      %268 = vector.load %arg11[%c0_103, %c0_104] : memref<64x32xbf16, #tpu.memory_space<vmem>>, vector<32x32xbf16>
      %cst_105 = arith.constant dense<0.000000e+00> : vector<8x32xf32>
      %269 = tpu.matmul %267, %268, %cst_105 {dimension_numbers = #tpu.dot_dimension_numbers<[1], [0], [0], [1], [0, 0, 1, 1], [], []>} : vector<8x32xbf16>, vector<32x32xbf16>, vector<8x32xf32> -> vector<8x32xf32>
      %270 = arith.truncf %237 : vector<8x32xf32> to vector<8x32xbf16>
      %c32_106 = arith.constant 32 : index
      %c0_107 = arith.constant 0 : index
      %271 = vector.load %arg11[%c32_106, %c0_107] : memref<64x32xbf16, #tpu.memory_space<vmem>>, vector<32x32xbf16>
      %cst_108 = arith.constant dense<0.000000e+00> : vector<8x32xf32>
      %272 = tpu.matmul %270, %271, %cst_108 {dimension_numbers = #tpu.dot_dimension_numbers<[1], [0], [0], [1], [0, 0, 1, 1], [], []>} : vector<8x32xbf16>, vector<32x32xbf16>, vector<8x32xf32> -> vector<8x32xf32>
      %273 = arith.addf %269, %272 : vector<8x32xf32>
      %c0_109 = arith.constant 0 : index
      %c0_110 = arith.constant 0 : index
      %274 = vector.load %arg12[%c0_109, %c0_110] : memref<1x32xf32, #tpu.memory_space<vmem>>, vector<1x32xf32>
      %275 = vector.broadcast %274 : vector<1x32xf32> to vector<8x32xf32>
      %276 = arith.addf %273, %275 : vector<8x32xf32>
      %c0_111 = arith.constant 0 : index
      %c0_112 = arith.constant 0 : index
      %277 = vector.load %arg16[%c0_111, %c0_112] : memref<8x32xf32, #tpu.memory_space<vmem>>, vector<8x32xf32>
      tpu.vector_store %arg16[%c0_111, %c0_112], %276 {strides = array<i32>} : memref<8x32xf32, #tpu.memory_space<vmem>>, vector<8x32xf32>,
    } else {
    }
    return
  }
  func.func @transform_0(%arg0: i32) -> (i32, i32, i32) {
    %c0_i32 = arith.constant 0 : i32
    %c0_i32_0 = arith.constant 0 : i32
    %c0_i32_1 = arith.constant 0 : i32
    return %arg0, %c0_i32, %c0_i32_0 : i32, i32, i32
  }
  func.func @transform_1(%arg0: i32) -> (i32, i32, i32) {
    %c1_i32 = arith.constant 1 : i32
    %0 = arith.subi %c1_i32, %arg0 : i32
    %c0_i32 = arith.constant 0 : i32
    %c0_i32_0 = arith.constant 0 : i32
    %c0_i32_1 = arith.constant 0 : i32
    return %0, %c0_i32, %c0_i32_0 : i32, i32, i32
  }
  func.func @transform_2(%arg0: i32) -> (i32, i32) {
    %c0_i32 = arith.constant 0 : i32
    %c0_i32_0 = arith.constant 0 : i32
    %c0_i32_1 = arith.constant 0 : i32
    return %c0_i32, %c0_i32_0 : i32, i32
  }
  func.func @transform_3(%arg0: i32) -> (i32, i32) {
    %c0_i32 = arith.constant 0 : i32
    %c0_i32_0 = arith.constant 0 : i32
    %c0_i32_1 = arith.constant 0 : i32
    return %c0_i32, %c0_i32_0 : i32, i32
  }
  func.func @transform_4(%arg0: i32) -> (i32, i32) {
    %c0_i32 = arith.constant 0 : i32
    %c0_i32_0 = arith.constant 0 : i32
    %c0_i32_1 = arith.constant 0 : i32
    return %c0_i32, %c0_i32_0 : i32, i32
  }
  func.func @transform_5(%arg0: i32) -> (i32, i32) {
    %c0_i32 = arith.constant 0 : i32
    %c0_i32_0 = arith.constant 0 : i32
    %c0_i32_1 = arith.constant 0 : i32
    return %c0_i32, %c0_i32_0 : i32, i32
  }
  func.func @transform_6(%arg0: i32) -> (i32, i32) {
    %c0_i32 = arith.constant 0 : i32
    %c0_i32_0 = arith.constant 0 : i32
    %c0_i32_1 = arith.constant 0 : i32
    return %c0_i32, %c0_i32_0 : i32, i32
  }
  func.func @transform_7(%arg0: i32) -> (i32, i32) {
    %c0_i32 = arith.constant 0 : i32
    %c0_i32_0 = arith.constant 0 : i32
    %c0_i32_1 = arith.constant 0 : i32
    return %c0_i32, %c0_i32_0 : i32, i32
  }
  func.func @transform_8(%arg0: i32) -> (i32, i32) {
    %c0_i32 = arith.constant 0 : i32
    %c0_i32_0 = arith.constant 0 : i32
    %c0_i32_1 = arith.constant 0 : i32
    return %c0_i32, %c0_i32_0 : i32, i32
  }
  func.func @transform_9(%arg0: i32) -> (i32, i32) {
    %c0_i32 = arith.constant 0 : i32
    %c0_i32_0 = arith.constant 0 : i32
    %c0_i32_1 = arith.constant 0 : i32
    return %c0_i32, %c0_i32_0 : i32, i32
  }
  func.func @transform_10(%arg0: i32) -> (i32, i32) {
    %c0_i32 = arith.constant 0 : i32
    %c0_i32_0 = arith.constant 0 : i32
    %c0_i32_1 = arith.constant 0 : i32
    return %c0_i32, %c0_i32_0 : i32, i32
  }
  func.func @transform_11(%arg0: i32) -> (i32, i32) {
    %c0_i32 = arith.constant 0 : i32
    %c0_i32_0 = arith.constant 0 : i32
    %c0_i32_1 = arith.constant 0 : i32
    return %c0_i32, %c0_i32_0 : i32, i32
  }
  func.func @transform_12(%arg0: i32) -> (i32, i32, i32) {
    %c0_i32 = arith.constant 0 : i32
    %c0_i32_0 = arith.constant 0 : i32
    %c0_i32_1 = arith.constant 0 : i32
    return %arg0, %c0_i32, %c0_i32_0 : i32, i32, i32
  }
  func.func @transform_13(%arg0: i32) -> (i32, i32, i32) {
    %c1_i32 = arith.constant 1 : i32
    %0 = arith.subi %c1_i32, %arg0 : i32
    %c0_i32 = arith.constant 0 : i32
    %c0_i32_0 = arith.constant 0 : i32
    %c0_i32_1 = arith.constant 0 : i32
    return %0, %c0_i32, %c0_i32_0 : i32, i32, i32
  }
  func.func @transform_14(%arg0: i32) -> (i32, i32) {
    %c0_i32 = arith.constant 0 : i32
    %c0_i32_0 = arith.constant 0 : i32
    %c0_i32_1 = arith.constant 0 : i32
    return %c0_i32, %c0_i32_0 : i32, i32
  }
  func.func @transform_15(%arg0: i32) -> (i32, i32) {
    %c0_i32 = arith.constant 0 : i32
    %c0_i32_0 = arith.constant 0 : i32
    %c0_i32_1 = arith.constant 0 : i32
    return %c0_i32, %c0_i32_0 : i32, i32
  }
}

</mosaic_0001>

<llo_original>
// kernel: tpu_custom_call.1
$region0: #{tpu_custom_call.1}
  #allocation0 [shape = 'u32[]', space=smem, size = 0x4, offset = 0x4, fixed_abs, tag = 'smem constant byte address 0x4 - core index']
  #allocation1 [shape = 'u32[144,128]{1,0:T(1,128)}', space=vmem, size = 0x12000, scoped, tag = 'internal scratch']
  #allocation2 [shape = 'f32[8,32]{1,0:T(8,128)}', space=vmem, size = 0x1000, scoped, tag = 'scratch operand']
  #allocation3 [shape = 'f32[8,32]{1,0:T(8,128)}', space=vmem, size = 0x1000, scoped, tag = 'scratch operand']
  #allocation4 [shape = 'f32[8,32]{1,0:T(8,128)}', space=vmem, size = 0x1000, scoped, tag = 'scratch operand']
  #allocation5 [shape = 'f32[8,32]{1,0:T(8,128)}', space=vmem, size = 0x1000, scoped, tag = 'scratch operand']
  %s0 = inlined_call_operand.vmem [shape: bf16[8,8,32], index: 0, kind: input, shape index: {}]
  %s1 = inlined_call_operand.vmem [shape: bf16[8,8,32], index: 1, kind: input, shape index: {}]
  %s2 = inlined_call_operand.vmem [shape: bf16[32,128], index: 2, kind: input, shape index: {}]
  %s3 = inlined_call_operand.hbm [shape: bf16[32,128], index: 3, kind: input, shape index: {}]
  %s4 = inlined_call_operand.vmem [shape: f32[1,128], index: 4, kind: input, shape index: {}]
  %s5 = inlined_call_operand.vmem [shape: f32[1,128], index: 5, kind: input, shape index: {}]
  %s6 = inlined_call_operand.hbm [shape: bf16[32,128], index: 6, kind: input, shape index: {}]
  %s7 = inlined_call_operand.hbm [shape: bf16[32,128], index: 7, kind: input, shape index: {}]
  %s8 = inlined_call_operand.vmem [shape: bf16[64,32], index: 8, kind: input, shape index: {}]
  %s9 = inlined_call_operand.vmem [shape: f32[1,32], index: 9, kind: input, shape index: {}]
  %s10 = inlined_call_operand.vmem [shape: bf16[64,32], index: 10, kind: input, shape index: {}]
  %s11 = inlined_call_operand.vmem [shape: f32[1,32], index: 11, kind: input, shape index: {}]
  %s12 = inlined_call_operand.hbm [shape: f32[8,8,32], index: 12, kind: output, shape index: {0}]
  %s13 = inlined_call_operand.hbm [shape: f32[8,8,32], index: 13, kind: output, shape index: {1}]
  %s14 = inlined_call_operand.hbm [shape: f32[8,32], index: 14, kind: output, shape index: {2}]
  %s15 = inlined_call_operand.hbm [shape: f32[8,32], index: 15, kind: output, shape index: {3}]
  %16 = xla_tuple %s12, %s13, %s14, %s15
  %s17 = sld [smem:[#allocation0]]
  $region125: #{tpu_custom_call.1} parent=0
    _
  %s19 = ssub.s32 1, %s17
  %s20 = scalar_select 0, %s19, %s17
  $region1: #{tpu_custom_call.1} parent=0
    #allocation6 [shape = 'u8[8192]{0}', space=vmem, size = 0x2000, scoped, tag = 'input window, operand 3, single buffered']
    #allocation7 [shape = 's32[2]{0}', space=sflag, size = 0x8, scoped, tag = 'scoped memory for tpu_custom_call.1']
    #allocation8 [shape = 's32[2]{0}', space=sflag, size = 0x8, scoped, tag = 'scoped memory for tpu_custom_call.1']
    #allocation9 [shape = 'u8[8192]{0}', space=vmem, size = 0x2000, scoped, tag = 'input window, operand 6, single buffered']
    #allocation10 [shape = 's32[1]{0}', space=sflag, size = 0x4, scoped, tag = 'scoped memory for tpu_custom_call.1']
    #allocation11 [shape = 'u8[8192]{0}', space=vmem, size = 0x2000, scoped, tag = 'input window, operand 7, single buffered']
    #allocation12 [shape = 'u8[32768]{0}', space=vmem, size = 0x8000, scoped, tag = 'output window, operand 0']
    #allocation13 [shape = 'u8[32768]{0}', space=vmem, size = 0x8000, scoped, tag = 'output window, operand 1']
    #allocation14 [shape = 's32[2]{0}', space=sflag, size = 0x8, scoped, tag = 'scoped memory for tpu_custom_call.1']
    #allocation15 [shape = 'u8[4096]{0}', space=vmem, size = 0x1000, scoped, tag = 'output window, operand 2, single buffered']
    #allocation16 [shape = 'u8[4096]{0}', space=vmem, size = 0x1000, scoped, tag = 'output window, operand 3, single buffered']
    #allocation17 [shape = 's32[1]{0}', space=sflag, size = 0x4, scoped, tag = 'scoped memory for tpu_custom_call.1']
    %21 = vsyncpa [#allocation7], 0
    %22 = vsyncpa [#allocation10], 0
    %23 = vsyncpa [#allocation8], 0
    %s24 = scalar_lea.sflag [#allocation8], 1
    %25 = vsyncpa %s24, 0
    %26 = vsyncpa [#allocation14], 0
    %s27 = scalar_lea.sflag [#allocation14], 1
    %28 = vsyncpa %s27, 0
    %29 = vsyncpa [#allocation17], 0
    loop: start=0, step=1, limit=4
    $region2: #{tpu_custom_call.1} parent=1 // loop_pre_header
      _
    $region3: #{tpu_custom_call.1} parent=1 // loop_header
      %s31 = sphi 0, %s35
      %p32 = scmp.ge.s32.totalorder %s31, 4
      %s41 = sphi 0, %s43
      %s44 = sphi 0, %s41
      %s45 = sphi 0, %s44
      %s61 = sphi 0, %s45
      %s69 = sphi 0, %s71
      %s72 = sphi 0, %s69
      %s73 = sphi 0, %s72
      %s89 = sphi 0, %s73
      %s93 = sphi 0, %s93
      %s95 = sphi 0, %s93
      %s96 = sphi 0, %s95
      %s110 = sphi 0, %s96
      %s114 = sphi 0, %s114
      %s116 = sphi 0, %s114
      %s117 = sphi 0, %s116
      %s131 = sphi 0, %s117
      %s135 = sphi 0, %s135
      %s137 = sphi 0, %s135
      %s138 = sphi 0, %s137
      %s152 = sphi 0, %s138
      %s156 = sphi 0, %s156
      %s158 = sphi 0, %s156
      %s159 = sphi 0, %s158
      %s173 = sphi 0, %s159
      %s177 = sphi 0, %s177
      %s179 = sphi 0, %s177
      %s180 = sphi 0, %s179
      %s194 = sphi 0, %s180
      %s198 = sphi 0, %s198
      %s200 = sphi 0, %s198
      %s201 = sphi 0, %s200
      %s215 = sphi 0, %s201
      %s219 = sphi 0, %s219
      %s221 = sphi 0, %s219
      %s222 = sphi 0, %s221
      %s236 = sphi 0, %s222
      %s240 = sphi 0, %s240
      %s242 = sphi 0, %s240
      %s243 = sphi 0, %s242
      %s257 = sphi 0, %s243
      %s261 = sphi 0, %s261
      %s263 = sphi 0, %s261
      %s264 = sphi 0, %s263
      %s278 = sphi 0, %s264
      %s282 = sphi 0, %s282
      %s284 = sphi 0, %s282
      %s285 = sphi 0, %s284
      %s299 = sphi 0, %s285
      %s305 = sphi 0, %s307
      %s308 = sphi 0, %s305
      %s309 = sphi 0, %s308
      %s325 = sphi 0, %s309
      %s333 = sphi 0, %s335
      %s336 = sphi 0, %s333
      %s337 = sphi 0, %s336
      %s353 = sphi 0, %s337
      %s357 = sphi 0, %s357
      %s359 = sphi 0, %s357
      %s360 = sphi 0, %s359
      %s374 = sphi 0, %s360
      %s378 = sphi 0, %s378
      %s380 = sphi 0, %s378
      %s381 = sphi 0, %s380
      %s395 = sphi 0, %s381
    $region4: #{tpu_custom_call.1} parent=1 // loop_header_branch
      %34 = sbr.rel (%p32) target = $region8
    $region5: #{tpu_custom_call.1} parent=1 // loop_body
      %s36 = ssub.s32 %s31, 1
      %s37 = ssub.s32 %s31, 2
      %s38 = sadd.s32 %s31, 1
      %s39 = ssub.s32 %s31, %s38
      %p40 = scmp.eq.s32.totalorder %s39, 0
      %s42 = sadd.s32 %s41, 1
      %s43 = scalar_select %p40, %s41, %s42
      %p46 = pneg %p40
      %p47 = scmp.eq.s32.totalorder %s31, 1
      %p48 = por %p46, %p47
      %p49 = scmp.ne.s32.totalorder %s41, %s44
      %p50 = scmp.eq.s32.totalorder %s31, 0
      %p51 = por %p49, %p50
      %p52 = scmp.ne.s32.totalorder %s41, %s44
      %p53 = scmp.eq.s32.totalorder %s36, 1
      %p54 = por %p52, %p53
      %p55 = scmp.ne.s32.totalorder %s44, %s45
      %p56 = scmp.eq.s32.totalorder %s36, 0
      %p57 = por %p55, %p56
      %p58 = scmp.ne.s32.totalorder %s44, %s45
      %p59 = scmp.eq.s32.totalorder %s37, 1
      %p60 = por %p58, %p59
      %p62 = scmp.ne.s32.totalorder %s45, %s61
      %p63 = scmp.eq.s32.totalorder %s37, 0
      %p64 = por %p62, %p63
      %s65 = ssub.s32 1, %s31
      %s66 = ssub.s32 1, %s38
      %s67 = ssub.s32 %s65, %s66
      %p68 = scmp.eq.s32.totalorder %s67, 0
      %s70 = sadd.s32 %s69, 1
      %s71 = scalar_select %p68, %s69, %s70
      %p74 = pneg %p68
      %p75 = scmp.eq.s32.totalorder %s31, 1
      %p76 = por %p74, %p75
      %p77 = scmp.ne.s32.totalorder %s69, %s72
      %p78 = scmp.eq.s32.totalorder %s31, 0
      %p79 = por %p77, %p78
      %p80 = scmp.ne.s32.totalorder %s69, %s72
      %p81 = scmp.eq.s32.totalorder %s36, 1
      %p82 = por %p80, %p81
      %p83 = scmp.ne.s32.totalorder %s72, %s73
      %p84 = scmp.eq.s32.totalorder %s36, 0
      %p85 = por %p83, %p84
      %p86 = scmp.ne.s32.totalorder %s72, %s73
      %p87 = scmp.eq.s32.totalorder %s37, 1
      %p88 = por %p86, %p87
      %p90 = scmp.ne.s32.totalorder %s73, %s89
      %p91 = scmp.eq.s32.totalorder %s37, 0
      %p92 = por %p90, %p91
      %s94 = sadd.s32 %s93, 1
      %p97 = scmp.eq.s32.totalorder %s31, 1
      %p98 = scmp.ne.s32.totalorder %s93, %s95
      %p99 = scmp.eq.s32.totalorder %s31, 0
      %p100 = por %p98, %p99
      %p101 = scmp.ne.s32.totalorder %s93, %s95
      %p102 = scmp.eq.s32.totalorder %s36, 1
      %p103 = por %p101, %p102
      %p104 = scmp.ne.s32.totalorder %s95, %s96
      %p105 = scmp.eq.s32.totalorder %s36, 0
      %p106 = por %p104, %p105
      %p107 = scmp.ne.s32.totalorder %s95, %s96
      %p108 = scmp.eq.s32.totalorder %s37, 1
      %p109 = por %p107, %p108
      %p111 = scmp.ne.s32.totalorder %s96, %s110
      %p112 = scmp.eq.s32.totalorder %s37, 0
      %p113 = por %p111, %p112
      %s115 = sadd.s32 %s114, 1
      %p118 = scmp.eq.s32.totalorder %s31, 1
      %p119 = scmp.ne.s32.totalorder %s114, %s116
      %p120 = scmp.eq.s32.totalorder %s31, 0
      %p121 = por %p119, %p120
      %p122 = scmp.ne.s32.totalorder %s114, %s116
      %p123 = scmp.eq.s32.totalorder %s36, 1
      %p124 = por %p122, %p123
      %p125 = scmp.ne.s32.totalorder %s116, %s117
      %p126 = scmp.eq.s32.totalorder %s36, 0
      %p127 = por %p125, %p126
      %p128 = scmp.ne.s32.totalorder %s116, %s117
      %p129 = scmp.eq.s32.totalorder %s37, 1
      %p130 = por %p128, %p129
      %p132 = scmp.ne.s32.totalorder %s117, %s131
      %p133 = scmp.eq.s32.totalorder %s37, 0
      %p134 = por %p132, %p133
      %s136 = sadd.s32 %s135, 1
      %p139 = scmp.eq.s32.totalorder %s31, 1
      %p140 = scmp.ne.s32.totalorder %s135, %s137
      %p141 = scmp.eq.s32.totalorder %s31, 0
      %p142 = por %p140, %p141
      %p143 = scmp.ne.s32.totalorder %s135, %s137
      %p144 = scmp.eq.s32.totalorder %s36, 1
      %p145 = por %p143, %p144
      %p146 = scmp.ne.s32.totalorder %s137, %s138
      %p147 = scmp.eq.s32.totalorder %s36, 0
      %p148 = por %p146, %p147
      %p149 = scmp.ne.s32.totalorder %s137, %s138
      %p150 = scmp.eq.s32.totalorder %s37, 1
      %p151 = por %p149, %p150
      %p153 = scmp.ne.s32.totalorder %s138, %s152
      %p154 = scmp.eq.s32.totalorder %s37, 0
      %p155 = por %p153, %p154
      %s157 = sadd.s32 %s156, 1
      %p160 = scmp.eq.s32.totalorder %s31, 1
      %p161 = scmp.ne.s32.totalorder %s156, %s158
      %p162 = scmp.eq.s32.totalorder %s31, 0
      %p163 = por %p161, %p162
      %p164 = scmp.ne.s32.totalorder %s156, %s158
      %p165 = scmp.eq.s32.totalorder %s36, 1
      %p166 = por %p164, %p165
      %p167 = scmp.ne.s32.totalorder %s158, %s159
      %p168 = scmp.eq.s32.totalorder %s36, 0
      %p169 = por %p167, %p168
      %p170 = scmp.ne.s32.totalorder %s158, %s159
      %p171 = scmp.eq.s32.totalorder %s37, 1
      %p172 = por %p170, %p171
      %p174 = scmp.ne.s32.totalorder %s159, %s173
      %p175 = scmp.eq.s32.totalorder %s37, 0
      %p176 = por %p174, %p175
      %s178 = sadd.s32 %s177, 1
      %p181 = scmp.eq.s32.totalorder %s31, 1
      %p182 = scmp.ne.s32.totalorder %s177, %s179
      %p183 = scmp.eq.s32.totalorder %s31, 0
      %p184 = por %p182, %p183
      %p185 = scmp.ne.s32.totalorder %s177, %s179
      %p186 = scmp.eq.s32.totalorder %s36, 1
      %p187 = por %p185, %p186
      %p188 = scmp.ne.s32.totalorder %s179, %s180
      %p189 = scmp.eq.s32.totalorder %s36, 0
      %p190 = por %p188, %p189
      %p191 = scmp.ne.s32.totalorder %s179, %s180
      %p192 = scmp.eq.s32.totalorder %s37, 1
      %p193 = por %p191, %p192
      %p195 = scmp.ne.s32.totalorder %s180, %s194
      %p196 = scmp.eq.s32.totalorder %s37, 0
      %p197 = por %p195, %p196
      %s199 = sadd.s32 %s198, 1
      %p202 = scmp.eq.s32.totalorder %s31, 1
      %p203 = scmp.ne.s32.totalorder %s198, %s200
      %p204 = scmp.eq.s32.totalorder %s31, 0
      %p205 = por %p203, %p204
      %p206 = scmp.ne.s32.totalorder %s198, %s200
      %p207 = scmp.eq.s32.totalorder %s36, 1
      %p208 = por %p206, %p207
      %p209 = scmp.ne.s32.totalorder %s200, %s201
      %p210 = scmp.eq.s32.totalorder %s36, 0
      %p211 = por %p209, %p210
      %p212 = scmp.ne.s32.totalorder %s200, %s201
      %p213 = scmp.eq.s32.totalorder %s37, 1
      %p214 = por %p212, %p213
      %p216 = scmp.ne.s32.totalorder %s201, %s215
      %p217 = scmp.eq.s32.totalorder %s37, 0
      %p218 = por %p216, %p217
      %s220 = sadd.s32 %s219, 1
      %p223 = scmp.eq.s32.totalorder %s31, 1
      %p224 = scmp.ne.s32.totalorder %s219, %s221
      %p225 = scmp.eq.s32.totalorder %s31, 0
      %p226 = por %p224, %p225
      %p227 = scmp.ne.s32.totalorder %s219, %s221
      %p228 = scmp.eq.s32.totalorder %s36, 1
      %p229 = por %p227, %p228
      %p230 = scmp.ne.s32.totalorder %s221, %s222
      %p231 = scmp.eq.s32.totalorder %s36, 0
      %p232 = por %p230, %p231
      %p233 = scmp.ne.s32.totalorder %s221, %s222
      %p234 = scmp.eq.s32.totalorder %s37, 1
      %p235 = por %p233, %p234
      %p237 = scmp.ne.s32.totalorder %s222, %s236
      %p238 = scmp.eq.s32.totalorder %s37, 0
      %p239 = por %p237, %p238
      %s241 = sadd.s32 %s240, 1
      %p244 = scmp.eq.s32.totalorder %s31, 1
      %p245 = scmp.ne.s32.totalorder %s240, %s242
      %p246 = scmp.eq.s32.totalorder %s31, 0
      %p247 = por %p245, %p246
      %p248 = scmp.ne.s32.totalorder %s240, %s242
      %p249 = scmp.eq.s32.totalorder %s36, 1
      %p250 = por %p248, %p249
      %p251 = scmp.ne.s32.totalorder %s242, %s243
      %p252 = scmp.eq.s32.totalorder %s36, 0
      %p253 = por %p251, %p252
      %p254 = scmp.ne.s32.totalorder %s242, %s243
      %p255 = scmp.eq.s32.totalorder %s37, 1
      %p256 = por %p254, %p255
      %p258 = scmp.ne.s32.totalorder %s243, %s257
      %p259 = scmp.eq.s32.totalorder %s37, 0
      %p260 = por %p258, %p259
      %s262 = sadd.s32 %s261, 1
      %p265 = scmp.eq.s32.totalorder %s31, 1
      %p266 = scmp.ne.s32.totalorder %s261, %s263
      %p267 = scmp.eq.s32.totalorder %s31, 0
      %p268 = por %p266, %p267
      %p269 = scmp.ne.s32.totalorder %s261, %s263
      %p270 = scmp.eq.s32.totalorder %s36, 1
      %p271 = por %p269, %p270
      %p272 = scmp.ne.s32.totalorder %s263, %s264
      %p273 = scmp.eq.s32.totalorder %s36, 0
      %p274 = por %p272, %p273
      %p275 = scmp.ne.s32.totalorder %s263, %s264
      %p276 = scmp.eq.s32.totalorder %s37, 1
      %p277 = por %p275, %p276
      %p279 = scmp.ne.s32.totalorder %s264, %s278
      %p280 = scmp.eq.s32.totalorder %s37, 0
      %p281 = por %p279, %p280
      %s283 = sadd.s32 %s282, 1
      %p286 = scmp.eq.s32.totalorder %s31, 1
      %p287 = scmp.ne.s32.totalorder %s282, %s284
      %p288 = scmp.eq.s32.totalorder %s31, 0
      %p289 = por %p287, %p288
      %p290 = scmp.ne.s32.totalorder %s282, %s284
      %p291 = scmp.eq.s32.totalorder %s36, 1
      %p292 = por %p290, %p291
      %p293 = scmp.ne.s32.totalorder %s284, %s285
      %p294 = scmp.eq.s32.totalorder %s36, 0
      %p295 = por %p293, %p294
      %p296 = scmp.ne.s32.totalorder %s284, %s285
      %p297 = scmp.eq.s32.totalorder %s37, 1
      %p298 = por %p296, %p297
      %p300 = scmp.ne.s32.totalorder %s285, %s299
      %p301 = scmp.eq.s32.totalorder %s37, 0
      %p302 = por %p300, %p301
      %s303 = ssub.s32 %s31, %s38
      %p304 = scmp.eq.s32.totalorder %s303, 0
      %s306 = sadd.s32 %s305, 1
      %s307 = scalar_select %p304, %s305, %s306
      %p310 = pneg %p304
      %p311 = scmp.eq.s32.totalorder %s31, 1
      %p312 = por %p310, %p311
      %p313 = scmp.ne.s32.totalorder %s305, %s308
      %p314 = scmp.eq.s32.totalorder %s31, 0
      %p315 = por %p313, %p314
      %p316 = scmp.ne.s32.totalorder %s305, %s308
      %p317 = scmp.eq.s32.totalorder %s36, 1
      %p318 = por %p316, %p317
      %p319 = scmp.ne.s32.totalorder %s308, %s309
      %p320 = scmp.eq.s32.totalorder %s36, 0
      %p321 = por %p319, %p320
      %p322 = scmp.ne.s32.totalorder %s308, %s309
      %p323 = scmp.eq.s32.totalorder %s37, 1
      %p324 = por %p322, %p323
      %p326 = scmp.ne.s32.totalorder %s309, %s325
      %p327 = scmp.eq.s32.totalorder %s37, 0
      %p328 = por %p326, %p327
      %s329 = ssub.s32 1, %s31
      %s330 = ssub.s32 1, %s38
      %s331 = ssub.s32 %s329, %s330
      %p332 = scmp.eq.s32.totalorder %s331, 0
      %s334 = sadd.s32 %s333, 1
      %s335 = scalar_select %p332, %s333, %s334
      %p338 = pneg %p332
      %p339 = scmp.eq.s32.totalorder %s31, 1
      %p340 = por %p338, %p339
      %p341 = scmp.ne.s32.totalorder %s333, %s336
      %p342 = scmp.eq.s32.totalorder %s31, 0
      %p343 = por %p341, %p342
      %p344 = scmp.ne.s32.totalorder %s333, %s336
      %p345 = scmp.eq.s32.totalorder %s36, 1
      %p346 = por %p344, %p345
      %p347 = scmp.ne.s32.totalorder %s336, %s337
      %p348 = scmp.eq.s32.totalorder %s36, 0
      %p349 = por %p347, %p348
      %p350 = scmp.ne.s32.totalorder %s336, %s337
      %p351 = scmp.eq.s32.totalorder %s37, 1
      %p352 = por %p350, %p351
      %p354 = scmp.ne.s32.totalorder %s337, %s353
      %p355 = scmp.eq.s32.totalorder %s37, 0
      %p356 = por %p354, %p355
      %s358 = sadd.s32 %s357, 1
      %p361 = scmp.eq.s32.totalorder %s31, 1
      %p362 = scmp.ne.s32.totalorder %s357, %s359
      %p363 = scmp.eq.s32.totalorder %s31, 0
      %p364 = por %p362, %p363
      %p365 = scmp.ne.s32.totalorder %s357, %s359
      %p366 = scmp.eq.s32.totalorder %s36, 1
      %p367 = por %p365, %p366
      %p368 = scmp.ne.s32.totalorder %s359, %s360
      %p369 = scmp.eq.s32.totalorder %s36, 0
      %p370 = por %p368, %p369
      %p371 = scmp.ne.s32.totalorder %s359, %s360
      %p372 = scmp.eq.s32.totalorder %s37, 1
      %p373 = por %p371, %p372
      %p375 = scmp.ne.s32.totalorder %s360, %s374
      %p376 = scmp.eq.s32.totalorder %s37, 0
      %p377 = por %p375, %p376
      %s379 = sadd.s32 %s378, 1
      %p382 = scmp.eq.s32.totalorder %s31, 1
      %p383 = scmp.ne.s32.totalorder %s378, %s380
      %p384 = scmp.eq.s32.totalorder %s31, 0
      %p385 = por %p383, %p384
      %p386 = scmp.ne.s32.totalorder %s378, %s380
      %p387 = scmp.eq.s32.totalorder %s36, 1
      %p388 = por %p386, %p387
      %p389 = scmp.ne.s32.totalorder %s380, %s381
      %p390 = scmp.eq.s32.totalorder %s36, 0
      %p391 = por %p389, %p390
      %p392 = scmp.ne.s32.totalorder %s380, %s381
      %p393 = scmp.eq.s32.totalorder %s37, 1
      %p394 = por %p392, %p393
      %p396 = scmp.ne.s32.totalorder %s381, %s395
      %p397 = scmp.eq.s32.totalorder %s37, 0
      %p398 = por %p396, %p397
      %p399 = scmp.le.s32.totalorder 1, %s31
      %p400 = scmp.lt.s32.totalorder %s31, 3
      %p401 = pnand %p399, %p400
      %p402 = pneg %p401
      // Predicated region
      $region9: #{tpu_custom_call.1} parent=5 // pred_check
        _
      $region10: #{tpu_custom_call.1} parent=5 // pred_check_branch
        %404 = sbr.rel (%p401) target = $region12
      $region11: #{tpu_custom_call.1} parent=5 // pred_region
        %s405 = ssub.s32 %s31, 1
        // Predicated region
        $region13: #{tpu_custom_call.1} parent=11 // pred_check
          %p406 = pneg %p106
        $region14: #{tpu_custom_call.1} parent=11 // pred_check_branch
          %408 = sbr.rel (%p406) target = $region16
        $region15: #{tpu_custom_call.1} parent=11 // pred_region
          _
        $region16: #{tpu_custom_call.1} parent=11 // pred_fallthru
          _
        // Predicated region
        $region17: #{tpu_custom_call.1} parent=11 // pred_check
          %p409 = pneg %p127
        $region18: #{tpu_custom_call.1} parent=11 // pred_check_branch
          %411 = sbr.rel (%p409) target = $region20
        $region19: #{tpu_custom_call.1} parent=11 // pred_region
          %s413 = ssub.s32 256, 256
          %414 = vsyncadd [#allocation7], %s413
          %s415 = sshll.u32 [#allocation6], 4
          %s416 = int_to_ptr.vmem [resolvable:$true] %s415
          %421 = dma.hbm_to_vmem [thread:$0]  %s3, 256, %s416, [#allocation7], 64, 64, 4
        $region20: #{tpu_custom_call.1} parent=11 // pred_fallthru
          _
        // Predicated region
        $region21: #{tpu_custom_call.1} parent=11 // pred_check
          %p422 = pneg %p148
        $region22: #{tpu_custom_call.1} parent=11 // pred_check_branch
          %424 = sbr.rel (%p422) target = $region24
        $region23: #{tpu_custom_call.1} parent=11 // pred_region
          _
        $region24: #{tpu_custom_call.1} parent=11 // pred_fallthru
          _
        // Predicated region
        $region25: #{tpu_custom_call.1} parent=11 // pred_check
          %p425 = pneg %p169
        $region26: #{tpu_custom_call.1} parent=11 // pred_check_branch
          %427 = sbr.rel (%p425) target = $region28
        $region27: #{tpu_custom_call.1} parent=11 // pred_region
          _
        $region28: #{tpu_custom_call.1} parent=11 // pred_fallthru
          _
        // Predicated region
        $region29: #{tpu_custom_call.1} parent=11 // pred_check
          %p428 = pneg %p190
        $region30: #{tpu_custom_call.1} parent=11 // pred_check_branch
          %430 = sbr.rel (%p428) target = $region32
        $region31: #{tpu_custom_call.1} parent=11 // pred_region
          %s432 = ssub.s32 256, 256
          %433 = vsyncadd [#allocation10], %s432
          %s434 = sshll.u32 [#allocation9], 4
          %s435 = int_to_ptr.vmem [resolvable:$true] %s434
          %440 = dma.hbm_to_vmem [thread:$0]  %s6, 256, %s435, [#allocation10], 64, 64, 4
        $region32: #{tpu_custom_call.1} parent=11 // pred_fallthru
          _
        // Predicated region
        $region33: #{tpu_custom_call.1} parent=11 // pred_check
          %p441 = pneg %p211
        $region34: #{tpu_custom_call.1} parent=11 // pred_check_branch
          %443 = sbr.rel (%p441) target = $region36
        $region35: #{tpu_custom_call.1} parent=11 // pred_region
          %s445 = ssub.s32 256, 256
          %446 = vsyncadd [#allocation10], %s445
          %s447 = sshll.u32 [#allocation11], 4
          %s448 = int_to_ptr.vmem [resolvable:$true] %s447
          %453 = dma.hbm_to_vmem [thread:$0]  %s7, 256, %s448, [#allocation10], 64, 64, 4
        $region36: #{tpu_custom_call.1} parent=11 // pred_fallthru
          _
        // Predicated region
        $region37: #{tpu_custom_call.1} parent=11 // pred_check
          %p454 = pneg %p232
        $region38: #{tpu_custom_call.1} parent=11 // pred_check_branch
          %456 = sbr.rel (%p454) target = $region40
        $region39: #{tpu_custom_call.1} parent=11 // pred_region
          _
        $region40: #{tpu_custom_call.1} parent=11 // pred_fallthru
          _
        // Predicated region
        $region41: #{tpu_custom_call.1} parent=11 // pred_check
          %p457 = pneg %p253
        $region42: #{tpu_custom_call.1} parent=11 // pred_check_branch
          %459 = sbr.rel (%p457) target = $region44
        $region43: #{tpu_custom_call.1} parent=11 // pred_region
          _
        $region44: #{tpu_custom_call.1} parent=11 // pred_fallthru
          _
        // Predicated region
        $region45: #{tpu_custom_call.1} parent=11 // pred_check
          %p460 = pneg %p274
        $region46: #{tpu_custom_call.1} parent=11 // pred_check_branch
          %462 = sbr.rel (%p460) target = $region48
        $region47: #{tpu_custom_call.1} parent=11 // pred_region
          _
        $region48: #{tpu_custom_call.1} parent=11 // pred_fallthru
          _
        // Predicated region
        $region49: #{tpu_custom_call.1} parent=11 // pred_check
          %p463 = pneg %p295
        $region50: #{tpu_custom_call.1} parent=11 // pred_check_branch
          %465 = sbr.rel (%p463) target = $region52
        $region51: #{tpu_custom_call.1} parent=11 // pred_region
          _
        $region52: #{tpu_custom_call.1} parent=11 // pred_fallthru
          _
      $region12: #{tpu_custom_call.1} parent=5 // pred_fallthru
        _
      %p466 = scmp.lt.s32.totalorder %s31, 2
      // Predicated region
      $region53: #{tpu_custom_call.1} parent=5 // pred_check
        %p467 = pneg %p466
      $region54: #{tpu_custom_call.1} parent=5 // pred_check_branch
        %469 = sbr.rel (%p467) target = $region56
      $region55: #{tpu_custom_call.1} parent=5 // pred_region
        // Predicated region
        $region57: #{tpu_custom_call.1} parent=55 // pred_check
          %p470 = pneg %p51
        $region58: #{tpu_custom_call.1} parent=55 // pred_check_branch
          %472 = sbr.rel (%p470) target = $region60
        $region59: #{tpu_custom_call.1} parent=55 // pred_region
          %s473 = smul.u32 4, %s31
          %p474 = scmp.lt.s32.totalorder %s473, 7
          %s475 = scalar_select %p474, %s473, 7
          %s476 = smul.addr %s475, 4
          %s477 = scalar_lea.vmem %s0, %s476
          %s478 = smul.u32 4, %s31
        $region60: #{tpu_custom_call.1} parent=55 // pred_fallthru
          _
        // Predicated region
        $region61: #{tpu_custom_call.1} parent=55 // pred_check
          %p479 = pneg %p79
        $region62: #{tpu_custom_call.1} parent=55 // pred_check_branch
          %481 = sbr.rel (%p479) target = $region64
        $region63: #{tpu_custom_call.1} parent=55 // pred_region
          %s482 = ssub.s32 1, %s31
          %s483 = smul.u32 4, %s482
          %p484 = scmp.lt.s32.totalorder %s483, 7
          %s485 = scalar_select %p484, %s483, 7
          %s486 = smul.addr %s485, 4
          %s487 = scalar_lea.vmem %s1, %s486
          %s488 = ssub.s32 1, %s31
          %s489 = smul.u32 4, %s488
        $region64: #{tpu_custom_call.1} parent=55 // pred_fallthru
          _
      $region56: #{tpu_custom_call.1} parent=5 // pred_fallthru
        _
      %p490 = scmp.le.s32.totalorder 1, %s31
      %p491 = scmp.lt.s32.totalorder %s31, 3
      %p492 = pnand %p490, %p491
      %p493 = pneg %p492
      // Predicated region
      $region65: #{tpu_custom_call.1} parent=5 // pred_check
        _
      $region66: #{tpu_custom_call.1} parent=5 // pred_check_branch
        %495 = sbr.rel (%p492) target = $region68
      $region67: #{tpu_custom_call.1} parent=5 // pred_region
        %s496 = ssub.s32 %s31, 1
        // Predicated region
        $region69: #{tpu_custom_call.1} parent=67 // pred_check
          %p497 = pneg %p127
        $region70: #{tpu_custom_call.1} parent=67 // pred_check_branch
          %499 = sbr.rel (%p497) target = $region72
        $region71: #{tpu_custom_call.1} parent=67 // pred_region
          %500 = dma.done [#allocation7], 256
        $region72: #{tpu_custom_call.1} parent=67 // pred_fallthru
          _
        // Predicated region
        $region73: #{tpu_custom_call.1} parent=67 // pred_check
          %p501 = pneg %p190
        $region74: #{tpu_custom_call.1} parent=67 // pred_check_branch
          %503 = sbr.rel (%p501) target = $region76
        $region75: #{tpu_custom_call.1} parent=67 // pred_region
          %504 = dma.done [#allocation10], 256
        $region76: #{tpu_custom_call.1} parent=67 // pred_fallthru
          _
        // Predicated region
        $region77: #{tpu_custom_call.1} parent=67 // pred_check
          %p505 = pneg %p211
        $region78: #{tpu_custom_call.1} parent=67 // pred_check_branch
          %507 = sbr.rel (%p505) target = $region80
        $region79: #{tpu_custom_call.1} parent=67 // pred_region
          %508 = dma.done [#allocation10], 256
        $region80: #{tpu_custom_call.1} parent=67 // pred_fallthru
          _
        %s509 = smul.u32 4, %s36
        %p510 = scmp.lt.s32.totalorder %s509, 7
        %s511 = scalar_select %p510, %s509, 7
        %s512 = smul.addr %s511, 4
        %s513 = scalar_lea.vmem %s0, %s512
        %p514 = pneg %p57
        %p515 = pneg %p54
        %s516 = ssub.s32 1, %s36
        %s517 = smul.u32 4, %s516
        %p518 = scmp.lt.s32.totalorder %s517, 7
        %s519 = scalar_select %p518, %s517, 7
        %s520 = smul.addr %s519, 4
        %s521 = scalar_lea.vmem %s1, %s520
        %p522 = pneg %p85
        %p523 = pneg %p82
        %p524 = pneg %p106
        %p525 = pneg %p103
        %p526 = pneg %p127
        %p527 = pneg %p124
        %p528 = pneg %p148
        %p529 = pneg %p145
        %p530 = pneg %p169
        %p531 = pneg %p166
        %p532 = pneg %p190
        %p533 = pneg %p187
        %p534 = pneg %p211
        %p535 = pneg %p208
        %p536 = pneg %p232
        %p537 = pneg %p229
        %p538 = pneg %p253
        %p539 = pneg %p250
        %p540 = pneg %p274
        %p541 = pneg %p271
        %p542 = pneg %p295
        %p543 = pneg %p292
        %p544 = pneg %p321
        %p545 = pneg %p318
        %s546 = sand.u32 %s308, 1
        %s547 = scalar_lea.sflag [#allocation8], %s546
        %s548 = sand.u32 %s308, 1
        %s549 = smul.addr %s548, 32
        %s550 = scalar_lea.vmem [#allocation12], %s549
        %p551 = pneg %p349
        %p552 = pneg %p346
        %s553 = sand.u32 %s36, 1
        %s554 = scalar_lea.sflag [#allocation14], %s553
        %s555 = sand.u32 %s336, 1
        %s556 = smul.addr %s555, 32
        %s557 = scalar_lea.vmem [#allocation13], %s556
        %p558 = pneg %p370
        %p559 = pneg %p367
        %p560 = pneg %p391
        %p561 = pneg %p388
        %s562 = smul.u32 4, %s36
        %p563 = scmp.lt.s32.totalorder %s562, 7
        %s564 = scalar_select %p563, %s562, 7
        %s565 = smul.addr %s564, 4
        %s566 = scalar_lea.vmem %s0, %s565
        %s567 = smul.u32 4, %s36
        %s568 = ssub.s32 1, %s36
        %s569 = smul.u32 4, %s568
        %p570 = scmp.lt.s32.totalorder %s569, 7
        %s571 = scalar_select %p570, %s569, 7
        %s572 = smul.addr %s571, 4
        %s573 = scalar_lea.vmem %s1, %s572
        %s574 = ssub.s32 1, %s36
        %s575 = smul.u32 4, %s574
        %s576 = smul.u32 4, %s36
        %s577 = ssub.s32 1, %s36
        %s578 = smul.u32 4, %s577
        %p580 = scmp.eq.s32.totalorder %s36, 0
        // Predicated region
        $region81: #{tpu_custom_call.1} parent=67 // pred_check
          %p581 = pneg %p580
        $region82: #{tpu_custom_call.1} parent=67 // pred_check_branch
          %583 = sbr.rel (%p581) target = $region84
        $region83: #{tpu_custom_call.1} parent=67 // pred_region
          %vm584 = vcmask 261120
          %585 = vst.msk [vmem:[#allocation2] sm:$0xff] %vm584, 0.0
          %586 = vst.msk [vmem:[#allocation3] sm:$0xff] %vm584, 0.0
          %587 = vst.msk [vmem:[#allocation4] sm:$0xff] %vm584, 0.0
          %588 = vst.msk [vmem:[#allocation5] sm:$0xff] %vm584, 0.0
        $region84: #{tpu_custom_call.1} parent=67 // pred_fallthru
          _
        %v589 = vld [vmem:[%s2] sm:$0xf]
        %v590 = vld [vmem:[%s2 + $0x4] sm:$0xf]
        %v591 = vld [vmem:[%s2 + $0x8] sm:$0xf]
        %v592 = vld [vmem:[%s2 + $0xc] sm:$0xf]
        %v593 = vld [vmem:[#allocation6] sm:$0xf]
        %v594 = vld [vmem:[#allocation6 + $0x4] sm:$0xf]
        %v595 = vld [vmem:[#allocation6 + $0x8] sm:$0xf]
        %v596 = vld [vmem:[#allocation6 + $0xc] sm:$0xf]
        %v597 = vld [vmem:[#allocation9] sm:$0xf]
        %v598 = vld [vmem:[#allocation9 + $0x4] sm:$0xf]
        %v599 = vld [vmem:[#allocation9 + $0x8] sm:$0xf]
        %v600 = vld [vmem:[#allocation9 + $0xc] sm:$0xf]
        %v601 = vld [vmem:[#allocation11] sm:$0xf]
        %v602 = vld [vmem:[#allocation11 + $0x4] sm:$0xf]
        %v603 = vld [vmem:[#allocation11 + $0x8] sm:$0xf]
        %v604 = vld [vmem:[#allocation11 + $0xc] sm:$0xf]
        %v605 = vld [vmem:[%s4] sm:$0x1]
        %v607 = vlaneseq
        %v608 = vshrl.u32 %v607, 7
        %v609 = vsub.s32 0, %v608
        %v610 = vrot.slane %v605, %v609
        %v612 = vld [vmem:[%s5] sm:$0x1]
        %v614 = vlaneseq
        %v615 = vshrl.u32 %v614, 7
        %v616 = vsub.s32 0, %v615
        %v617 = vrot.slane %v612, %v616
        %v619 = vld [vmem:[#allocation2] sm:$0xff]
        %v620 = vld [vmem:[#allocation3] sm:$0xff]
        %v621 = vld [vmem:[#allocation4] sm:$0xff]
        %v622 = vld [vmem:[#allocation5] sm:$0xff]
        %v623 = vld [vmem:[%s566] sm:$0xf]
        %s624 = scalar_lea.vmem %s573, 12
        %v625 = vld [vmem:[%s624] sm:$0xf]
        %v626 = vpack.c.bf16 %v619, %v619
        %v631 = vunpack.c.l.b16 %v597
        %v632 = vunpack.c.l.b16 %v598
        %v633 = vunpack.c.l.b16 %v599
        %v634 = vunpack.c.l.b16 %v600
        %v635 = vpack.c.b16 %v632, %v631
        %v636 = vpack.c.b16 %v634, %v633
        %vm639 = vcmask 261120
        %v641 = vsel %vm639, %v626, 0
        %643 = vmatprep.subr.bf16.mxu0 0
        %644 = vmatpush1.bf16.msra.mxu0 %v635
        %645 = vmatprep.subr.bf16.mxu0 0
        %646 = vmatpush1.bf16.msra.mxu0 %v636
        %647 = vmatprep.subr.bf16.mxu0 0
        %648 = vmatpush1.bf16.msra.mxu0 0
        %649 = vmatprep.subr.bf16.mxu0 0
        %650 = vmatpush1.bf16.msra.mxu0 0
        %651 = vmatprep.subr.bf16.mxu0 0
        %652 = vmatpush1.bf16.msra.mxu0 0
        %653 = vmatprep.subr.bf16.mxu0 0
        %654 = vmatpush1.bf16.msra.mxu0 0
        %655 = vmatprep.subr.bf16.mxu0 0
        %656 = vmatpush1.bf16.msra.mxu0 0
        %657 = vmatprep.subr.bf16.mxu0 0
        %658 = vmatpush1.bf16.msra.mxu0 0
        %659 = vmatprep.subr.bf16.mxu0 0
        %660 = vmatpush1.bf16.msra.mxu0 0
        %661 = vmatprep.subr.bf16.mxu0 0
        %662 = vmatpush1.bf16.msra.mxu0 0
        %663 = vmatprep.subr.bf16.mxu0 0
        %664 = vmatpush1.bf16.msra.mxu0 0
        %665 = vmatprep.subr.bf16.mxu0 0
        %666 = vmatpush1.bf16.msra.mxu0 0
        %667 = vmatprep.subr.bf16.mxu0 0
        %668 = vmatpush1.bf16.msra.mxu0 0
        %669 = vmatprep.subr.bf16.mxu0 0
        %670 = vmatpush1.bf16.msra.mxu0 0
        %671 = vmatprep.subr.bf16.mxu0 0
        %672 = vmatpush1.bf16.msra.mxu0 0
        %673 = vmatprep.subr.bf16.mxu0 0
        %674 = vmatpush1.bf16.msra.mxu0 0
        %675 = vmatprep.mubr.bf16.mxu0 0
        %676 = vmatmul.mubr.bf16.gmra.mrb[0].mxu0 %v641
        %v677 = vpop.f32.mrb[0].mxu0
        %v678 = vadd.f32 0.0, %v677
        %v679 = vpop.f32.mrb[0].mxu0
        %v680 = vpop.f32.mrb[0].mxu0
        %v681 = vpop.f32.mrb[0].mxu0
        %682 = vdwg.mxu0
        %v687 = vunpack.c.l.b16 %v589
        %v688 = vunpack.c.l.b16 %v590
        %v689 = vunpack.c.l.b16 %v591
        %v690 = vunpack.c.l.b16 %v592
        %v691 = vpack.c.b16 %v688, %v687
        %v692 = vpack.c.b16 %v690, %v689
        %v696 = vsel %vm639, %v623, 0
        %698 = vmatprep.subr.bf16.mxu0 0
        %699 = vmatpush1.bf16.msra.mxu0 %v691
        %700 = vmatprep.subr.bf16.mxu0 0
        %701 = vmatpush1.bf16.msra.mxu0 %v692
        %702 = vmatprep.subr.bf16.mxu0 0
        %703 = vmatpush1.bf16.msra.mxu0 0
        %704 = vmatprep.subr.bf16.mxu0 0
        %705 = vmatpush1.bf16.msra.mxu0 0
        %706 = vmatprep.subr.bf16.mxu0 0
        %707 = vmatpush1.bf16.msra.mxu0 0
        %708 = vmatprep.subr.bf16.mxu0 0
        %709 = vmatpush1.bf16.msra.mxu0 0
        %710 = vmatprep.subr.bf16.mxu0 0
        %711 = vmatpush1.bf16.msra.mxu0 0
        %712 = vmatprep.subr.bf16.mxu0 0
        %713 = vmatpush1.bf16.msra.mxu0 0
        %714 = vmatprep.subr.bf16.mxu0 0
        %715 = vmatpush1.bf16.msra.mxu0 0
        %716 = vmatprep.subr.bf16.mxu0 0
        %717 = vmatpush1.bf16.msra.mxu0 0
        %718 = vmatprep.subr.bf16.mxu0 0
        %719 = vmatpush1.bf16.msra.mxu0 0
        %720 = vmatprep.subr.bf16.mxu0 0
        %721 = vmatpush1.bf16.msra.mxu0 0
        %722 = vmatprep.subr.bf16.mxu0 0
        %723 = vmatpush1.bf16.msra.mxu0 0
        %724 = vmatprep.subr.bf16.mxu0 0
        %725 = vmatpush1.bf16.msra.mxu0 0
        %726 = vmatprep.subr.bf16.mxu0 0
        %727 = vmatpush1.bf16.msra.mxu0 0
        %728 = vmatprep.subr.bf16.mxu0 0
        %729 = vmatpush1.bf16.msra.mxu0 0
        %730 = vmatprep.mubr.bf16.mxu0 0
        %731 = vmatmul.mubr.bf16.gmra.mrb[0].mxu0 %v696
        %v732 = vpop.f32.mrb[0].mxu0
        %v733 = vadd.f32 %v678, %v732
        %v734 = vpop.f32.mrb[0].mxu0
        %v735 = vpop.f32.mrb[0].mxu0
        %v736 = vpop.f32.mrb[0].mxu0
        %737 = vdwg.mxu0
        %v738 = vadd.f32 %v733, %v610
        %v739 = vpack.c.bf16 %v621, %v621
        %v744 = vunpack.c.l.b16 %v601
        %v745 = vunpack.c.l.b16 %v602
        %v746 = vunpack.c.l.b16 %v603
        %v747 = vunpack.c.l.b16 %v604
        %v748 = vpack.c.b16 %v745, %v744
        %v749 = vpack.c.b16 %v747, %v746
        %v753 = vsel %vm639, %v739, 0
        %755 = vmatprep.subr.bf16.mxu0 0
        %756 = vmatpush1.bf16.msra.mxu0 %v748
        %757 = vmatprep.subr.bf16.mxu0 0
        %758 = vmatpush1.bf16.msra.mxu0 %v749
        %759 = vmatprep.subr.bf16.mxu0 0
        %760 = vmatpush1.bf16.msra.mxu0 0
        %761 = vmatprep.subr.bf16.mxu0 0
        %762 = vmatpush1.bf16.msra.mxu0 0
        %763 = vmatprep.subr.bf16.mxu0 0
        %764 = vmatpush1.bf16.msra.mxu0 0
        %765 = vmatprep.subr.bf16.mxu0 0
        %766 = vmatpush1.bf16.msra.mxu0 0
        %767 = vmatprep.subr.bf16.mxu0 0
        %768 = vmatpush1.bf16.msra.mxu0 0
        %769 = vmatprep.subr.bf16.mxu0 0
        %770 = vmatpush1.bf16.msra.mxu0 0
        %771 = vmatprep.subr.bf16.mxu0 0
        %772 = vmatpush1.bf16.msra.mxu0 0
        %773 = vmatprep.subr.bf16.mxu0 0
        %774 = vmatpush1.bf16.msra.mxu0 0
        %775 = vmatprep.subr.bf16.mxu0 0
        %776 = vmatpush1.bf16.msra.mxu0 0
        %777 = vmatprep.subr.bf16.mxu0 0
        %778 = vmatpush1.bf16.msra.mxu0 0
        %779 = vmatprep.subr.bf16.mxu0 0
        %780 = vmatpush1.bf16.msra.mxu0 0
        %781 = vmatprep.subr.bf16.mxu0 0
        %782 = vmatpush1.bf16.msra.mxu0 0
        %783 = vmatprep.subr.bf16.mxu0 0
        %784 = vmatpush1.bf16.msra.mxu0 0
        %785 = vmatprep.subr.bf16.mxu0 0
        %786 = vmatpush1.bf16.msra.mxu0 0
        %787 = vmatprep.mubr.bf16.mxu0 0
        %788 = vmatmul.mubr.bf16.gmra.mrb[0].mxu0 %v753
        %v789 = vpop.f32.mrb[0].mxu0
        %v790 = vadd.f32 0.0, %v789
        %v791 = vpop.f32.mrb[0].mxu0
        %v792 = vpop.f32.mrb[0].mxu0
        %v793 = vpop.f32.mrb[0].mxu0
        %794 = vdwg.mxu0
        %v799 = vunpack.c.l.b16 %v593
        %v800 = vunpack.c.l.b16 %v594
        %v801 = vunpack.c.l.b16 %v595
        %v802 = vunpack.c.l.b16 %v596
        %v803 = vpack.c.b16 %v800, %v799
        %v804 = vpack.c.b16 %v802, %v801
        %v808 = vsel %vm639, %v625, 0
        %810 = vmatprep.subr.bf16.mxu0 0
        %811 = vmatpush1.bf16.msra.mxu0 %v803
        %812 = vmatprep.subr.bf16.mxu0 0
        %813 = vmatpush1.bf16.msra.mxu0 %v804
        %814 = vmatprep.subr.bf16.mxu0 0
        %815 = vmatpush1.bf16.msra.mxu0 0
        %816 = vmatprep.subr.bf16.mxu0 0
        %817 = vmatpush1.bf16.msra.mxu0 0
        %818 = vmatprep.subr.bf16.mxu0 0
        %819 = vmatpush1.bf16.msra.mxu0 0
        %820 = vmatprep.subr.bf16.mxu0 0
        %821 = vmatpush1.bf16.msra.mxu0 0
        %822 = vmatprep.subr.bf16.mxu0 0
        %823 = vmatpush1.bf16.msra.mxu0 0
        %824 = vmatprep.subr.bf16.mxu0 0
        %825 = vmatpush1.bf16.msra.mxu0 0
        %826 = vmatprep.subr.bf16.mxu0 0
        %827 = vmatpush1.bf16.msra.mxu0 0
        %828 = vmatprep.subr.bf16.mxu0 0
        %829 = vmatpush1.bf16.msra.mxu0 0
        %830 = vmatprep.subr.bf16.mxu0 0
        %831 = vmatpush1.bf16.msra.mxu0 0
        %832 = vmatprep.subr.bf16.mxu0 0
        %833 = vmatpush1.bf16.msra.mxu0 0
        %834 = vmatprep.subr.bf16.mxu0 0
        %835 = vmatpush1.bf16.msra.mxu0 0
        %836 = vmatprep.subr.bf16.mxu0 0
        %837 = vmatpush1.bf16.msra.mxu0 0
        %838 = vmatprep.subr.bf16.mxu0 0
        %839 = vmatpush1.bf16.msra.mxu0 0
        %840 = vmatprep.subr.bf16.mxu0 0
        %841 = vmatpush1.bf16.msra.mxu0 0
        %842 = vmatprep.mubr.bf16.mxu0 0
        %843 = vmatmul.mubr.bf16.gmra.mrb[0].mxu0 %v808
        %v844 = vpop.f32.mrb[0].mxu0
        %v845 = vadd.f32 %v790, %v844
        %v846 = vpop.f32.mrb[0].mxu0
        %v847 = vpop.f32.mrb[0].mxu0
        %v848 = vpop.f32.mrb[0].mxu0
        %849 = vdwg.mxu0
        %v850 = vadd.f32 %v845, %v617
        %v851 = vxor.u32 %v738, 2147483648
        %v852 = vmul.f32 %v851, 1.442695
        %v853 = vpow.pop %v852
        %v854 = vadd.f32 %v853, 1.0
        %v855 = vrcp.pop %v854
        %v856 = vmul.f32 1.0, %v855
        %v857 = vtanh.pop %v738
        %859 = vrot.lane.b32.xlu0 %v620, 32
        %v860 = vpop.permute.xlu0 %859
        %v862 = vmul.f32 %v856, %v860
        %864 = vrot.lane.b32.xlu0 %v857, 32
        %v865 = vpop.permute.xlu0 %864
        %v867 = vmul.f32 %v856, %v865
        %869 = vrot.lane.b32.xlu0 %v867, 32
        %v870 = vpop.permute.xlu0 %869
        %v872 = vadd.f32 %v862, %v870
        %v873 = vtanh.pop %v872
        %875 = vrot.lane.b32.xlu0 %v873, 32
        %v876 = vpop.permute.xlu0 %875
        %v878 = vmul.f32 %v856, %v876
        %v879 = vxor.u32 %v850, 2147483648
        %v880 = vmul.f32 %v879, 1.442695
        %v881 = vpow.pop %v880
        %v882 = vadd.f32 %v881, 1.0
        %v883 = vrcp.pop %v882
        %v884 = vmul.f32 1.0, %v883
        %v885 = vtanh.pop %v850
        %887 = vrot.lane.b32.xlu0 %v622, 32
        %v888 = vpop.permute.xlu0 %887
        %v890 = vmul.f32 %v884, %v888
        %892 = vrot.lane.b32.xlu0 %v885, 32
        %v893 = vpop.permute.xlu0 %892
        %v895 = vmul.f32 %v884, %v893
        %897 = vrot.lane.b32.xlu0 %v895, 32
        %v898 = vpop.permute.xlu0 %897
        %v900 = vadd.f32 %v890, %v898
        %v901 = vtanh.pop %v900
        %903 = vrot.lane.b32.xlu0 %v901, 32
        %v904 = vpop.permute.xlu0 %903
        %v906 = vmul.f32 %v884, %v904
        %908 = vrot.lane.b32.xlu0 %v878, 64
        %v909 = vpop.permute.xlu0 %908
        %911 = vst.msk [vmem:[%s550] sm:$0xff] %vm639, %v909
        %913 = vrot.lane.b32.xlu0 %v906, 64
        %v914 = vpop.permute.xlu0 %913
        %s916 = scalar_lea.vmem %s557, 24 [#allocation13]
        %917 = vst.msk [vmem:[%s916] sm:$0xff] %vm639, %v914
        %s918 = scalar_lea.vmem %s566, 4
        %v919 = vld [vmem:[%s918] sm:$0xf]
        %s920 = scalar_lea.vmem %s573, 8
        %v921 = vld [vmem:[%s920] sm:$0xf]
        %v922 = vpack.c.bf16 %v878, %v878
        %924 = vrot.lane.b32.xlu0 %v922, 64
        %v925 = vpop.permute.xlu0 %924
        %v927 = vsel %vm639, %v925, 0
        %929 = vmatprep.subr.bf16.mxu0 0
        %930 = vmatpush1.bf16.msra.mxu0 %v635
        %931 = vmatprep.subr.bf16.mxu0 0
        %932 = vmatpush1.bf16.msra.mxu0 %v636
        %933 = vmatprep.subr.bf16.mxu0 0
        %934 = vmatpush1.bf16.msra.mxu0 0
        %935 = vmatprep.subr.bf16.mxu0 0
        %936 = vmatpush1.bf16.msra.mxu0 0
        %937 = vmatprep.subr.bf16.mxu0 0
        %938 = vmatpush1.bf16.msra.mxu0 0
        %939 = vmatprep.subr.bf16.mxu0 0
        %940 = vmatpush1.bf16.msra.mxu0 0
        %941 = vmatprep.subr.bf16.mxu0 0
        %942 = vmatpush1.bf16.msra.mxu0 0
        %943 = vmatprep.subr.bf16.mxu0 0
        %944 = vmatpush1.bf16.msra.mxu0 0
        %945 = vmatprep.subr.bf16.mxu0 0
        %946 = vmatpush1.bf16.msra.mxu0 0
        %947 = vmatprep.subr.bf16.mxu0 0
        %948 = vmatpush1.bf16.msra.mxu0 0
        %949 = vmatprep.subr.bf16.mxu0 0
        %950 = vmatpush1.bf16.msra.mxu0 0
        %951 = vmatprep.subr.bf16.mxu0 0
        %952 = vmatpush1.bf16.msra.mxu0 0
        %953 = vmatprep.subr.bf16.mxu0 0
        %954 = vmatpush1.bf16.msra.mxu0 0
        %955 = vmatprep.subr.bf16.mxu0 0
        %956 = vmatpush1.bf16.msra.mxu0 0
        %957 = vmatprep.subr.bf16.mxu0 0
        %958 = vmatpush1.bf16.msra.mxu0 0
        %959 = vmatprep.subr.bf16.mxu0 0
        %960 = vmatpush1.bf16.msra.mxu0 0
        %961 = vmatprep.mubr.bf16.mxu0 0
        %962 = vmatmul.mubr.bf16.gmra.mrb[0].mxu0 %v927
        %v963 = vpop.f32.mrb[0].mxu0
        %v964 = vadd.f32 0.0, %v963
        %v965 = vpop.f32.mrb[0].mxu0
        %v966 = vpop.f32.mrb[0].mxu0
        %v967 = vpop.f32.mrb[0].mxu0
        %968 = vdwg.mxu0
        %v970 = vsel %vm639, %v919, 0
        %972 = vmatprep.subr.bf16.mxu0 0
        %973 = vmatpush1.bf16.msra.mxu0 %v691
        %974 = vmatprep.subr.bf16.mxu0 0
        %975 = vmatpush1.bf16.msra.mxu0 %v692
        %976 = vmatprep.subr.bf16.mxu0 0
        %977 = vmatpush1.bf16.msra.mxu0 0
        %978 = vmatprep.subr.bf16.mxu0 0
        %979 = vmatpush1.bf16.msra.mxu0 0
        %980 = vmatprep.subr.bf16.mxu0 0
        %981 = vmatpush1.bf16.msra.mxu0 0
        %982 = vmatprep.subr.bf16.mxu0 0
        %983 = vmatpush1.bf16.msra.mxu0 0
        %984 = vmatprep.subr.bf16.mxu0 0
        %985 = vmatpush1.bf16.msra.mxu0 0
        %986 = vmatprep.subr.bf16.mxu0 0
        %987 = vmatpush1.bf16.msra.mxu0 0
        %988 = vmatprep.subr.bf16.mxu0 0
        %989 = vmatpush1.bf16.msra.mxu0 0
        %990 = vmatprep.subr.bf16.mxu0 0
        %991 = vmatpush1.bf16.msra.mxu0 0
        %992 = vmatprep.subr.bf16.mxu0 0
        %993 = vmatpush1.bf16.msra.mxu0 0
        %994 = vmatprep.subr.bf16.mxu0 0
        %995 = vmatpush1.bf16.msra.mxu0 0
        %996 = vmatprep.subr.bf16.mxu0 0
        %997 = vmatpush1.bf16.msra.mxu0 0
        %998 = vmatprep.subr.bf16.mxu0 0
        %999 = vmatpush1.bf16.msra.mxu0 0
        %1000 = vmatprep.subr.bf16.mxu0 0
        %1001 = vmatpush1.bf16.msra.mxu0 0
        %1002 = vmatprep.subr.bf16.mxu0 0
        %1003 = vmatpush1.bf16.msra.mxu0 0
        %1004 = vmatprep.mubr.bf16.mxu0 0
        %1005 = vmatmul.mubr.bf16.gmra.mrb[0].mxu0 %v970
        %v1006 = vpop.f32.mrb[0].mxu0
        %v1007 = vadd.f32 %v964, %v1006
        %v1008 = vpop.f32.mrb[0].mxu0
        %v1009 = vpop.f32.mrb[0].mxu0
        %v1010 = vpop.f32.mrb[0].mxu0
        %1011 = vdwg.mxu0
        %v1012 = vadd.f32 %v1007, %v610
        %v1013 = vpack.c.bf16 %v906, %v906
        %1015 = vrot.lane.b32.xlu0 %v1013, 64
        %v1016 = vpop.permute.xlu0 %1015
        %v1018 = vsel %vm639, %v1016, 0
        %1020 = vmatprep.subr.bf16.mxu0 0
        %1021 = vmatpush1.bf16.msra.mxu0 %v748
        %1022 = vmatprep.subr.bf16.mxu0 0
        %1023 = vmatpush1.bf16.msra.mxu0 %v749
        %1024 = vmatprep.subr.bf16.mxu0 0
        %1025 = vmatpush1.bf16.msra.mxu0 0
        %1026 = vmatprep.subr.bf16.mxu0 0
        %1027 = vmatpush1.bf16.msra.mxu0 0
        %1028 = vmatprep.subr.bf16.mxu0 0
        %1029 = vmatpush1.bf16.msra.mxu0 0
        %1030 = vmatprep.subr.bf16.mxu0 0
        %1031 = vmatpush1.bf16.msra.mxu0 0
        %1032 = vmatprep.subr.bf16.mxu0 0
        %1033 = vmatpush1.bf16.msra.mxu0 0
        %1034 = vmatprep.subr.bf16.mxu0 0
        %1035 = vmatpush1.bf16.msra.mxu0 0
        %1036 = vmatprep.subr.bf16.mxu0 0
        %1037 = vmatpush1.bf16.msra.mxu0 0
        %1038 = vmatprep.subr.bf16.mxu0 0
        %1039 = vmatpush1.bf16.msra.mxu0 0
        %1040 = vmatprep.subr.bf16.mxu0 0
        %1041 = vmatpush1.bf16.msra.mxu0 0
        %1042 = vmatprep.subr.bf16.mxu0 0
        %1043 = vmatpush1.bf16.msra.mxu0 0
        %1044 = vmatprep.subr.bf16.mxu0 0
        %1045 = vmatpush1.bf16.msra.mxu0 0
        %1046 = vmatprep.subr.bf16.mxu0 0
        %1047 = vmatpush1.bf16.msra.mxu0 0
        %1048 = vmatprep.subr.bf16.mxu0 0
        %1049 = vmatpush1.bf16.msra.mxu0 0
        %1050 = vmatprep.subr.bf16.mxu0 0
        %1051 = vmatpush1.bf16.msra.mxu0 0
        %1052 = vmatprep.mubr.bf16.mxu0 0
        %1053 = vmatmul.mubr.bf16.gmra.mrb[0].mxu0 %v1018
        %v1054 = vpop.f32.mrb[0].mxu0
        %v1055 = vadd.f32 0.0, %v1054
        %v1056 = vpop.f32.mrb[0].mxu0
        %v1057 = vpop.f32.mrb[0].mxu0
        %v1058 = vpop.f32.mrb[0].mxu0
        %1059 = vdwg.mxu0
        %v1061 = vsel %vm639, %v921, 0
        %1063 = vmatprep.subr.bf16.mxu0 0
        %1064 = vmatpush1.bf16.msra.mxu0 %v803
        %1065 = vmatprep.subr.bf16.mxu0 0
        %1066 = vmatpush1.bf16.msra.mxu0 %v804
        %1067 = vmatprep.subr.bf16.mxu0 0
        %1068 = vmatpush1.bf16.msra.mxu0 0
        %1069 = vmatprep.subr.bf16.mxu0 0
        %1070 = vmatpush1.bf16.msra.mxu0 0
        %1071 = vmatprep.subr.bf16.mxu0 0
        %1072 = vmatpush1.bf16.msra.mxu0 0
        %1073 = vmatprep.subr.bf16.mxu0 0
        %1074 = vmatpush1.bf16.msra.mxu0 0
        %1075 = vmatprep.subr.bf16.mxu0 0
        %1076 = vmatpush1.bf16.msra.mxu0 0
        %1077 = vmatprep.subr.bf16.mxu0 0
        %1078 = vmatpush1.bf16.msra.mxu0 0
        %1079 = vmatprep.subr.bf16.mxu0 0
        %1080 = vmatpush1.bf16.msra.mxu0 0
        %1081 = vmatprep.subr.bf16.mxu0 0
        %1082 = vmatpush1.bf16.msra.mxu0 0
        %1083 = vmatprep.subr.bf16.mxu0 0
        %1084 = vmatpush1.bf16.msra.mxu0 0
        %1085 = vmatprep.subr.bf16.mxu0 0
        %1086 = vmatpush1.bf16.msra.mxu0 0
        %1087 = vmatprep.subr.bf16.mxu0 0
        %1088 = vmatpush1.bf16.msra.mxu0 0
        %1089 = vmatprep.subr.bf16.mxu0 0
        %1090 = vmatpush1.bf16.msra.mxu0 0
        %1091 = vmatprep.subr.bf16.mxu0 0
        %1092 = vmatpush1.bf16.msra.mxu0 0
        %1093 = vmatprep.subr.bf16.mxu0 0
        %1094 = vmatpush1.bf16.msra.mxu0 0
        %1095 = vmatprep.mubr.bf16.mxu0 0
        %1096 = vmatmul.mubr.bf16.gmra.mrb[0].mxu0 %v1061
        %v1097 = vpop.f32.mrb[0].mxu0
        %v1098 = vadd.f32 %v1055, %v1097
        %v1099 = vpop.f32.mrb[0].mxu0
        %v1100 = vpop.f32.mrb[0].mxu0
        %v1101 = vpop.f32.mrb[0].mxu0
        %1102 = vdwg.mxu0
        %v1103 = vadd.f32 %v1098, %v617
        %v1104 = vxor.u32 %v1012, 2147483648
        %v1105 = vmul.f32 %v1104, 1.442695
        %v1106 = vpow.pop %v1105
        %v1107 = vadd.f32 %v1106, 1.0
        %v1108 = vrcp.pop %v1107
        %v1109 = vmul.f32 1.0, %v1108
        %v1110 = vtanh.pop %v1012
        %v1111 = vmul.f32 %v1109, %v872
        %1113 = vrot.lane.b32.xlu0 %v1110, 32
        %v1114 = vpop.permute.xlu0 %1113
        %v1116 = vmul.f32 %v1109, %v1114
        %1118 = vrot.lane.b32.xlu0 %v1116, 32
        %v1119 = vpop.permute.xlu0 %1118
        %v1121 = vadd.f32 %v1111, %v1119
        %v1122 = vtanh.pop %v1121
        %1124 = vrot.lane.b32.xlu0 %v1122, 32
        %v1125 = vpop.permute.xlu0 %1124
        %v1127 = vmul.f32 %v1109, %v1125
        %v1128 = vxor.u32 %v1103, 2147483648
        %v1129 = vmul.f32 %v1128, 1.442695
        %v1130 = vpow.pop %v1129
        %v1131 = vadd.f32 %v1130, 1.0
        %v1132 = vrcp.pop %v1131
        %v1133 = vmul.f32 1.0, %v1132
        %v1134 = vtanh.pop %v1103
        %v1135 = vmul.f32 %v1133, %v900
        %1137 = vrot.lane.b32.xlu0 %v1134, 32
        %v1138 = vpop.permute.xlu0 %1137
        %v1140 = vmul.f32 %v1133, %v1138
        %1142 = vrot.lane.b32.xlu0 %v1140, 32
        %v1143 = vpop.permute.xlu0 %1142
        %v1145 = vadd.f32 %v1135, %v1143
        %v1146 = vtanh.pop %v1145
        %1148 = vrot.lane.b32.xlu0 %v1146, 32
        %v1149 = vpop.permute.xlu0 %1148
        %v1151 = vmul.f32 %v1133, %v1149
        %1153 = vrot.lane.b32.xlu0 %v1127, 64
        %v1154 = vpop.permute.xlu0 %1153
        %s1156 = scalar_lea.vmem %s550, 8 [#allocation12]
        %1157 = vst.msk [vmem:[%s1156] sm:$0xff] %vm639, %v1154
        %1159 = vrot.lane.b32.xlu0 %v1151, 64
        %v1160 = vpop.permute.xlu0 %1159
        %s1162 = scalar_lea.vmem %s557, 16 [#allocation13]
        %1163 = vst.msk [vmem:[%s1162] sm:$0xff] %vm639, %v1160
        %s1164 = scalar_lea.vmem %s566, 8
        %v1165 = vld [vmem:[%s1164] sm:$0xf]
        %s1166 = scalar_lea.vmem %s573, 4
        %v1167 = vld [vmem:[%s1166] sm:$0xf]
        %v1168 = vpack.c.bf16 %v1127, %v1127
        %1170 = vrot.lane.b32.xlu0 %v1168, 64
        %v1171 = vpop.permute.xlu0 %1170
        %v1173 = vsel %vm639, %v1171, 0
        %1175 = vmatprep.subr.bf16.mxu0 0
        %1176 = vmatpush1.bf16.msra.mxu0 %v635
        %1177 = vmatprep.subr.bf16.mxu0 0
        %1178 = vmatpush1.bf16.msra.mxu0 %v636
        %1179 = vmatprep.subr.bf16.mxu0 0
        %1180 = vmatpush1.bf16.msra.mxu0 0
        %1181 = vmatprep.subr.bf16.mxu0 0
        %1182 = vmatpush1.bf16.msra.mxu0 0
        %1183 = vmatprep.subr.bf16.mxu0 0
        %1184 = vmatpush1.bf16.msra.mxu0 0
        %1185 = vmatprep.subr.bf16.mxu0 0
        %1186 = vmatpush1.bf16.msra.mxu0 0
        %1187 = vmatprep.subr.bf16.mxu0 0
        %1188 = vmatpush1.bf16.msra.mxu0 0
        %1189 = vmatprep.subr.bf16.mxu0 0
        %1190 = vmatpush1.bf16.msra.mxu0 0
        %1191 = vmatprep.subr.bf16.mxu0 0
        %1192 = vmatpush1.bf16.msra.mxu0 0
        %1193 = vmatprep.subr.bf16.mxu0 0
        %1194 = vmatpush1.bf16.msra.mxu0 0
        %1195 = vmatprep.subr.bf16.mxu0 0
        %1196 = vmatpush1.bf16.msra.mxu0 0
        %1197 = vmatprep.subr.bf16.mxu0 0
        %1198 = vmatpush1.bf16.msra.mxu0 0
        %1199 = vmatprep.subr.bf16.mxu0 0
        %1200 = vmatpush1.bf16.msra.mxu0 0
        %1201 = vmatprep.subr.bf16.mxu0 0
        %1202 = vmatpush1.bf16.msra.mxu0 0
        %1203 = vmatprep.subr.bf16.mxu0 0
        %1204 = vmatpush1.bf16.msra.mxu0 0
        %1205 = vmatprep.subr.bf16.mxu0 0
        %1206 = vmatpush1.bf16.msra.mxu0 0
        %1207 = vmatprep.mubr.bf16.mxu0 0
        %1208 = vmatmul.mubr.bf16.gmra.mrb[0].mxu0 %v1173
        %v1209 = vpop.f32.mrb[0].mxu0
        %v1210 = vadd.f32 0.0, %v1209
        %v1211 = vpop.f32.mrb[0].mxu0
        %v1212 = vpop.f32.mrb[0].mxu0
        %v1213 = vpop.f32.mrb[0].mxu0
        %1214 = vdwg.mxu0
        %v1216 = vsel %vm639, %v1165, 0
        %1218 = vmatprep.subr.bf16.mxu0 0
        %1219 = vmatpush1.bf16.msra.mxu0 %v691
        %1220 = vmatprep.subr.bf16.mxu0 0
        %1221 = vmatpush1.bf16.msra.mxu0 %v692
        %1222 = vmatprep.subr.bf16.mxu0 0
        %1223 = vmatpush1.bf16.msra.mxu0 0
        %1224 = vmatprep.subr.bf16.mxu0 0
        %1225 = vmatpush1.bf16.msra.mxu0 0
        %1226 = vmatprep.subr.bf16.mxu0 0
        %1227 = vmatpush1.bf16.msra.mxu0 0
        %1228 = vmatprep.subr.bf16.mxu0 0
        %1229 = vmatpush1.bf16.msra.mxu0 0
        %1230 = vmatprep.subr.bf16.mxu0 0
        %1231 = vmatpush1.bf16.msra.mxu0 0
        %1232 = vmatprep.subr.bf16.mxu0 0
        %1233 = vmatpush1.bf16.msra.mxu0 0
        %1234 = vmatprep.subr.bf16.mxu0 0
        %1235 = vmatpush1.bf16.msra.mxu0 0
        %1236 = vmatprep.subr.bf16.mxu0 0
        %1237 = vmatpush1.bf16.msra.mxu0 0
        %1238 = vmatprep.subr.bf16.mxu0 0
        %1239 = vmatpush1.bf16.msra.mxu0 0
        %1240 = vmatprep.subr.bf16.mxu0 0
        %1241 = vmatpush1.bf16.msra.mxu0 0
        %1242 = vmatprep.subr.bf16.mxu0 0
        %1243 = vmatpush1.bf16.msra.mxu0 0
        %1244 = vmatprep.subr.bf16.mxu0 0
        %1245 = vmatpush1.bf16.msra.mxu0 0
        %1246 = vmatprep.subr.bf16.mxu0 0
        %1247 = vmatpush1.bf16.msra.mxu0 0
        %1248 = vmatprep.subr.bf16.mxu0 0
        %1249 = vmatpush1.bf16.msra.mxu0 0
        %1250 = vmatprep.mubr.bf16.mxu0 0
        %1251 = vmatmul.mubr.bf16.gmra.mrb[0].mxu0 %v1216
        %v1252 = vpop.f32.mrb[0].mxu0
        %v1253 = vadd.f32 %v1210, %v1252
        %v1254 = vpop.f32.mrb[0].mxu0
        %v1255 = vpop.f32.mrb[0].mxu0
        %v1256 = vpop.f32.mrb[0].mxu0
        %1257 = vdwg.mxu0
        %v1258 = vadd.f32 %v1253, %v610
        %v1259 = vpack.c.bf16 %v1151, %v1151
        %1261 = vrot.lane.b32.xlu0 %v1259, 64
        %v1262 = vpop.permute.xlu0 %1261
        %v1264 = vsel %vm639, %v1262, 0
        %1266 = vmatprep.subr.bf16.mxu0 0
        %1267 = vmatpush1.bf16.msra.mxu0 %v748
        %1268 = vmatprep.subr.bf16.mxu0 0
        %1269 = vmatpush1.bf16.msra.mxu0 %v749
        %1270 = vmatprep.subr.bf16.mxu0 0
        %1271 = vmatpush1.bf16.msra.mxu0 0
        %1272 = vmatprep.subr.bf16.mxu0 0
        %1273 = vmatpush1.bf16.msra.mxu0 0
        %1274 = vmatprep.subr.bf16.mxu0 0
        %1275 = vmatpush1.bf16.msra.mxu0 0
        %1276 = vmatprep.subr.bf16.mxu0 0
        %1277 = vmatpush1.bf16.msra.mxu0 0
        %1278 = vmatprep.subr.bf16.mxu0 0
        %1279 = vmatpush1.bf16.msra.mxu0 0
        %1280 = vmatprep.subr.bf16.mxu0 0
        %1281 = vmatpush1.bf16.msra.mxu0 0
        %1282 = vmatprep.subr.bf16.mxu0 0
        %1283 = vmatpush1.bf16.msra.mxu0 0
        %1284 = vmatprep.subr.bf16.mxu0 0
        %1285 = vmatpush1.bf16.msra.mxu0 0
        %1286 = vmatprep.subr.bf16.mxu0 0
        %1287 = vmatpush1.bf16.msra.mxu0 0
        %1288 = vmatprep.subr.bf16.mxu0 0
        %1289 = vmatpush1.bf16.msra.mxu0 0
        %1290 = vmatprep.subr.bf16.mxu0 0
        %1291 = vmatpush1.bf16.msra.mxu0 0
        %1292 = vmatprep.subr.bf16.mxu0 0
        %1293 = vmatpush1.bf16.msra.mxu0 0
        %1294 = vmatprep.subr.bf16.mxu0 0
        %1295 = vmatpush1.bf16.msra.mxu0 0
        %1296 = vmatprep.subr.bf16.mxu0 0
        %1297 = vmatpush1.bf16.msra.mxu0 0
        %1298 = vmatprep.mubr.bf16.mxu0 0
        %1299 = vmatmul.mubr.bf16.gmra.mrb[0].mxu0 %v1264
        %v1300 = vpop.f32.mrb[0].mxu0
        %v1301 = vadd.f32 0.0, %v1300
        %v1302 = vpop.f32.mrb[0].mxu0
        %v1303 = vpop.f32.mrb[0].mxu0
        %v1304 = vpop.f32.mrb[0].mxu0
        %1305 = vdwg.mxu0
        %v1307 = vsel %vm639, %v1167, 0
        %1309 = vmatprep.subr.bf16.mxu0 0
        %1310 = vmatpush1.bf16.msra.mxu0 %v803
        %1311 = vmatprep.subr.bf16.mxu0 0
        %1312 = vmatpush1.bf16.msra.mxu0 %v804
        %1313 = vmatprep.subr.bf16.mxu0 0
        %1314 = vmatpush1.bf16.msra.mxu0 0
        %1315 = vmatprep.subr.bf16.mxu0 0
        %1316 = vmatpush1.bf16.msra.mxu0 0
        %1317 = vmatprep.subr.bf16.mxu0 0
        %1318 = vmatpush1.bf16.msra.mxu0 0
        %1319 = vmatprep.subr.bf16.mxu0 0
        %1320 = vmatpush1.bf16.msra.mxu0 0
        %1321 = vmatprep.subr.bf16.mxu0 0
        %1322 = vmatpush1.bf16.msra.mxu0 0
        %1323 = vmatprep.subr.bf16.mxu0 0
        %1324 = vmatpush1.bf16.msra.mxu0 0
        %1325 = vmatprep.subr.bf16.mxu0 0
        %1326 = vmatpush1.bf16.msra.mxu0 0
        %1327 = vmatprep.subr.bf16.mxu0 0
        %1328 = vmatpush1.bf16.msra.mxu0 0
        %1329 = vmatprep.subr.bf16.mxu0 0
        %1330 = vmatpush1.bf16.msra.mxu0 0
        %1331 = vmatprep.subr.bf16.mxu0 0
        %1332 = vmatpush1.bf16.msra.mxu0 0
        %1333 = vmatprep.subr.bf16.mxu0 0
        %1334 = vmatpush1.bf16.msra.mxu0 0
        %1335 = vmatprep.subr.bf16.mxu0 0
        %1336 = vmatpush1.bf16.msra.mxu0 0
        %1337 = vmatprep.subr.bf16.mxu0 0
        %1338 = vmatpush1.bf16.msra.mxu0 0
        %1339 = vmatprep.subr.bf16.mxu0 0
        %1340 = vmatpush1.bf16.msra.mxu0 0
        %1341 = vmatprep.mubr.bf16.mxu0 0
        %1342 = vmatmul.mubr.bf16.gmra.mrb[0].mxu0 %v1307
        %v1343 = vpop.f32.mrb[0].mxu0
        %v1344 = vadd.f32 %v1301, %v1343
        %v1345 = vpop.f32.mrb[0].mxu0
        %v1346 = vpop.f32.mrb[0].mxu0
        %v1347 = vpop.f32.mrb[0].mxu0
        %1348 = vdwg.mxu0
        %v1349 = vadd.f32 %v1344, %v617
        %v1350 = vxor.u32 %v1258, 2147483648
        %v1351 = vmul.f32 %v1350, 1.442695
        %v1352 = vpow.pop %v1351
        %v1353 = vadd.f32 %v1352, 1.0
        %v1354 = vrcp.pop %v1353
        %v1355 = vmul.f32 1.0, %v1354
        %v1356 = vtanh.pop %v1258
        %v1357 = vmul.f32 %v1355, %v1121
        %1359 = vrot.lane.b32.xlu0 %v1356, 32
        %v1360 = vpop.permute.xlu0 %1359
        %v1362 = vmul.f32 %v1355, %v1360
        %1364 = vrot.lane.b32.xlu0 %v1362, 32
        %v1365 = vpop.permute.xlu0 %1364
        %v1367 = vadd.f32 %v1357, %v1365
        %v1368 = vtanh.pop %v1367
        %1370 = vrot.lane.b32.xlu0 %v1368, 32
        %v1371 = vpop.permute.xlu0 %1370
        %v1373 = vmul.f32 %v1355, %v1371
        %v1374 = vxor.u32 %v1349, 2147483648
        %v1375 = vmul.f32 %v1374, 1.442695
        %v1376 = vpow.pop %v1375
        %v1377 = vadd.f32 %v1376, 1.0
        %v1378 = vrcp.pop %v1377
        %v1379 = vmul.f32 1.0, %v1378
        %v1380 = vtanh.pop %v1349
        %v1381 = vmul.f32 %v1379, %v1145
        %1383 = vrot.lane.b32.xlu0 %v1380, 32
        %v1384 = vpop.permute.xlu0 %1383
        %v1386 = vmul.f32 %v1379, %v1384
        %1388 = vrot.lane.b32.xlu0 %v1386, 32
        %v1389 = vpop.permute.xlu0 %1388
        %v1391 = vadd.f32 %v1381, %v1389
        %v1392 = vtanh.pop %v1391
        %1394 = vrot.lane.b32.xlu0 %v1392, 32
        %v1395 = vpop.permute.xlu0 %1394
        %v1397 = vmul.f32 %v1379, %v1395
        %1399 = vrot.lane.b32.xlu0 %v1373, 64
        %v1400 = vpop.permute.xlu0 %1399
        %s1402 = scalar_lea.vmem %s550, 16 [#allocation12]
        %1403 = vst.msk [vmem:[%s1402] sm:$0xff] %vm639, %v1400
        %1405 = vrot.lane.b32.xlu0 %v1397, 64
        %v1406 = vpop.permute.xlu0 %1405
        %s1408 = scalar_lea.vmem %s557, 8 [#allocation13]
        %1409 = vst.msk [vmem:[%s1408] sm:$0xff] %vm639, %v1406
        %s1410 = scalar_lea.vmem %s566, 12
        %v1411 = vld [vmem:[%s1410] sm:$0xf]
        %v1412 = vld [vmem:[%s573] sm:$0xf]
        %v1413 = vpack.c.bf16 %v1373, %v1373
        %1415 = vrot.lane.b32.xlu0 %v1413, 64
        %v1416 = vpop.permute.xlu0 %1415
        %v1418 = vsel %vm639, %v1416, 0
        %1420 = vmatprep.subr.bf16.mxu0 0
        %1421 = vmatpush1.bf16.msra.mxu0 %v635
        %1422 = vmatprep.subr.bf16.mxu0 0
        %1423 = vmatpush1.bf16.msra.mxu0 %v636
        %1424 = vmatprep.subr.bf16.mxu0 0
        %1425 = vmatpush1.bf16.msra.mxu0 0
        %1426 = vmatprep.subr.bf16.mxu0 0
        %1427 = vmatpush1.bf16.msra.mxu0 0
        %1428 = vmatprep.subr.bf16.mxu0 0
        %1429 = vmatpush1.bf16.msra.mxu0 0
        %1430 = vmatprep.subr.bf16.mxu0 0
        %1431 = vmatpush1.bf16.msra.mxu0 0
        %1432 = vmatprep.subr.bf16.mxu0 0
        %1433 = vmatpush1.bf16.msra.mxu0 0
        %1434 = vmatprep.subr.bf16.mxu0 0
        %1435 = vmatpush1.bf16.msra.mxu0 0
        %1436 = vmatprep.subr.bf16.mxu0 0
        %1437 = vmatpush1.bf16.msra.mxu0 0
        %1438 = vmatprep.subr.bf16.mxu0 0
        %1439 = vmatpush1.bf16.msra.mxu0 0
        %1440 = vmatprep.subr.bf16.mxu0 0
        %1441 = vmatpush1.bf16.msra.mxu0 0
        %1442 = vmatprep.subr.bf16.mxu0 0
        %1443 = vmatpush1.bf16.msra.mxu0 0
        %1444 = vmatprep.subr.bf16.mxu0 0
        %1445 = vmatpush1.bf16.msra.mxu0 0
        %1446 = vmatprep.subr.bf16.mxu0 0
        %1447 = vmatpush1.bf16.msra.mxu0 0
        %1448 = vmatprep.subr.bf16.mxu0 0
        %1449 = vmatpush1.bf16.msra.mxu0 0
        %1450 = vmatprep.subr.bf16.mxu0 0
        %1451 = vmatpush1.bf16.msra.mxu0 0
        %1452 = vmatprep.mubr.bf16.mxu0 0
        %1453 = vmatmul.mubr.bf16.gmra.mrb[0].mxu0 %v1418
        %v1454 = vpop.f32.mrb[0].mxu0
        %v1455 = vadd.f32 0.0, %v1454
        %v1456 = vpop.f32.mrb[0].mxu0
        %v1457 = vpop.f32.mrb[0].mxu0
        %v1458 = vpop.f32.mrb[0].mxu0
        %1459 = vdwg.mxu0
        %v1461 = vsel %vm639, %v1411, 0
        %1463 = vmatprep.subr.bf16.mxu0 0
        %1464 = vmatpush1.bf16.msra.mxu0 %v691
        %1465 = vmatprep.subr.bf16.mxu0 0
        %1466 = vmatpush1.bf16.msra.mxu0 %v692
        %1467 = vmatprep.subr.bf16.mxu0 0
        %1468 = vmatpush1.bf16.msra.mxu0 0
        %1469 = vmatprep.subr.bf16.mxu0 0
        %1470 = vmatpush1.bf16.msra.mxu0 0
        %1471 = vmatprep.subr.bf16.mxu0 0
        %1472 = vmatpush1.bf16.msra.mxu0 0
        %1473 = vmatprep.subr.bf16.mxu0 0
        %1474 = vmatpush1.bf16.msra.mxu0 0
        %1475 = vmatprep.subr.bf16.mxu0 0
        %1476 = vmatpush1.bf16.msra.mxu0 0
        %1477 = vmatprep.subr.bf16.mxu0 0
        %1478 = vmatpush1.bf16.msra.mxu0 0
        %1479 = vmatprep.subr.bf16.mxu0 0
        %1480 = vmatpush1.bf16.msra.mxu0 0
        %1481 = vmatprep.subr.bf16.mxu0 0
        %1482 = vmatpush1.bf16.msra.mxu0 0
        %1483 = vmatprep.subr.bf16.mxu0 0
        %1484 = vmatpush1.bf16.msra.mxu0 0
        %1485 = vmatprep.subr.bf16.mxu0 0
        %1486 = vmatpush1.bf16.msra.mxu0 0
        %1487 = vmatprep.subr.bf16.mxu0 0
        %1488 = vmatpush1.bf16.msra.mxu0 0
        %1489 = vmatprep.subr.bf16.mxu0 0
        %1490 = vmatpush1.bf16.msra.mxu0 0
        %1491 = vmatprep.subr.bf16.mxu0 0
        %1492 = vmatpush1.bf16.msra.mxu0 0
        %1493 = vmatprep.subr.bf16.mxu0 0
        %1494 = vmatpush1.bf16.msra.mxu0 0
        %1495 = vmatprep.mubr.bf16.mxu0 0
        %1496 = vmatmul.mubr.bf16.gmra.mrb[0].mxu0 %v1461
        %v1497 = vpop.f32.mrb[0].mxu0
        %v1498 = vadd.f32 %v1455, %v1497
        %v1499 = vpop.f32.mrb[0].mxu0
        %v1500 = vpop.f32.mrb[0].mxu0
        %v1501 = vpop.f32.mrb[0].mxu0
        %1502 = vdwg.mxu0
        %v1503 = vadd.f32 %v1498, %v610
        %v1504 = vpack.c.bf16 %v1397, %v1397
        %1506 = vrot.lane.b32.xlu0 %v1504, 64
        %v1507 = vpop.permute.xlu0 %1506
        %v1509 = vsel %vm639, %v1507, 0
        %1511 = vmatprep.subr.bf16.mxu0 0
        %1512 = vmatpush1.bf16.msra.mxu0 %v748
        %1513 = vmatprep.subr.bf16.mxu0 0
        %1514 = vmatpush1.bf16.msra.mxu0 %v749
        %1515 = vmatprep.subr.bf16.mxu0 0
        %1516 = vmatpush1.bf16.msra.mxu0 0
        %1517 = vmatprep.subr.bf16.mxu0 0
        %1518 = vmatpush1.bf16.msra.mxu0 0
        %1519 = vmatprep.subr.bf16.mxu0 0
        %1520 = vmatpush1.bf16.msra.mxu0 0
        %1521 = vmatprep.subr.bf16.mxu0 0
        %1522 = vmatpush1.bf16.msra.mxu0 0
        %1523 = vmatprep.subr.bf16.mxu0 0
        %1524 = vmatpush1.bf16.msra.mxu0 0
        %1525 = vmatprep.subr.bf16.mxu0 0
        %1526 = vmatpush1.bf16.msra.mxu0 0
        %1527 = vmatprep.subr.bf16.mxu0 0
        %1528 = vmatpush1.bf16.msra.mxu0 0
        %1529 = vmatprep.subr.bf16.mxu0 0
        %1530 = vmatpush1.bf16.msra.mxu0 0
        %1531 = vmatprep.subr.bf16.mxu0 0
        %1532 = vmatpush1.bf16.msra.mxu0 0
        %1533 = vmatprep.subr.bf16.mxu0 0
        %1534 = vmatpush1.bf16.msra.mxu0 0
        %1535 = vmatprep.subr.bf16.mxu0 0
        %1536 = vmatpush1.bf16.msra.mxu0 0
        %1537 = vmatprep.subr.bf16.mxu0 0
        %1538 = vmatpush1.bf16.msra.mxu0 0
        %1539 = vmatprep.subr.bf16.mxu0 0
        %1540 = vmatpush1.bf16.msra.mxu0 0
        %1541 = vmatprep.subr.bf16.mxu0 0
        %1542 = vmatpush1.bf16.msra.mxu0 0
        %1543 = vmatprep.mubr.bf16.mxu0 0
        %1544 = vmatmul.mubr.bf16.gmra.mrb[0].mxu0 %v1509
        %v1545 = vpop.f32.mrb[0].mxu0
        %v1546 = vadd.f32 0.0, %v1545
        %v1547 = vpop.f32.mrb[0].mxu0
        %v1548 = vpop.f32.mrb[0].mxu0
        %v1549 = vpop.f32.mrb[0].mxu0
        %1550 = vdwg.mxu0
        %v1552 = vsel %vm639, %v1412, 0
        %1554 = vmatprep.subr.bf16.mxu0 0
        %1555 = vmatpush1.bf16.msra.mxu0 %v803
        %1556 = vmatprep.subr.bf16.mxu0 0
        %1557 = vmatpush1.bf16.msra.mxu0 %v804
        %1558 = vmatprep.subr.bf16.mxu0 0
        %1559 = vmatpush1.bf16.msra.mxu0 0
        %1560 = vmatprep.subr.bf16.mxu0 0
        %1561 = vmatpush1.bf16.msra.mxu0 0
        %1562 = vmatprep.subr.bf16.mxu0 0
        %1563 = vmatpush1.bf16.msra.mxu0 0
        %1564 = vmatprep.subr.bf16.mxu0 0
        %1565 = vmatpush1.bf16.msra.mxu0 0
        %1566 = vmatprep.subr.bf16.mxu0 0
        %1567 = vmatpush1.bf16.msra.mxu0 0
        %1568 = vmatprep.subr.bf16.mxu0 0
        %1569 = vmatpush1.bf16.msra.mxu0 0
        %1570 = vmatprep.subr.bf16.mxu0 0
        %1571 = vmatpush1.bf16.msra.mxu0 0
        %1572 = vmatprep.subr.bf16.mxu0 0
        %1573 = vmatpush1.bf16.msra.mxu0 0
        %1574 = vmatprep.subr.bf16.mxu0 0
        %1575 = vmatpush1.bf16.msra.mxu0 0
        %1576 = vmatprep.subr.bf16.mxu0 0
        %1577 = vmatpush1.bf16.msra.mxu0 0
        %1578 = vmatprep.subr.bf16.mxu0 0
        %1579 = vmatpush1.bf16.msra.mxu0 0
        %1580 = vmatprep.subr.bf16.mxu0 0
        %1581 = vmatpush1.bf16.msra.mxu0 0
        %1582 = vmatprep.subr.bf16.mxu0 0
        %1583 = vmatpush1.bf16.msra.mxu0 0
        %1584 = vmatprep.subr.bf16.mxu0 0
        %1585 = vmatpush1.bf16.msra.mxu0 0
        %1586 = vmatprep.mubr.bf16.mxu0 0
        %1587 = vmatmul.mubr.bf16.gmra.mrb[0].mxu0 %v1552
        %v1588 = vpop.f32.mrb[0].mxu0
        %v1589 = vadd.f32 %v1546, %v1588
        %v1590 = vpop.f32.mrb[0].mxu0
        %v1591 = vpop.f32.mrb[0].mxu0
        %v1592 = vpop.f32.mrb[0].mxu0
        %1593 = vdwg.mxu0
        %v1594 = vadd.f32 %v1589, %v617
        %v1595 = vxor.u32 %v1503, 2147483648
        %v1596 = vmul.f32 %v1595, 1.442695
        %v1597 = vpow.pop %v1596
        %v1598 = vadd.f32 %v1597, 1.0
        %v1599 = vrcp.pop %v1598
        %v1600 = vmul.f32 1.0, %v1599
        %v1601 = vtanh.pop %v1503
        %v1602 = vmul.f32 %v1600, %v1367
        %1604 = vrot.lane.b32.xlu0 %v1601, 32
        %v1605 = vpop.permute.xlu0 %1604
        %v1607 = vmul.f32 %v1600, %v1605
        %1609 = vrot.lane.b32.xlu0 %v1607, 32
        %v1610 = vpop.permute.xlu0 %1609
        %v1612 = vadd.f32 %v1602, %v1610
        %v1613 = vtanh.pop %v1612
        %1615 = vrot.lane.b32.xlu0 %v1613, 32
        %v1616 = vpop.permute.xlu0 %1615
        %v1618 = vmul.f32 %v1600, %v1616
        %v1619 = vxor.u32 %v1594, 2147483648
        %v1620 = vmul.f32 %v1619, 1.442695
        %v1621 = vpow.pop %v1620
        %v1622 = vadd.f32 %v1621, 1.0
        %v1623 = vrcp.pop %v1622
        %v1624 = vmul.f32 1.0, %v1623
        %v1625 = vtanh.pop %v1594
        %v1626 = vmul.f32 %v1624, %v1391
        %1628 = vrot.lane.b32.xlu0 %v1625, 32
        %v1629 = vpop.permute.xlu0 %1628
        %v1631 = vmul.f32 %v1624, %v1629
        %1633 = vrot.lane.b32.xlu0 %v1631, 32
        %v1634 = vpop.permute.xlu0 %1633
        %v1636 = vadd.f32 %v1626, %v1634
        %v1637 = vtanh.pop %v1636
        %1639 = vrot.lane.b32.xlu0 %v1637, 32
        %v1640 = vpop.permute.xlu0 %1639
        %v1642 = vmul.f32 %v1624, %v1640
        %1644 = vrot.lane.b32.xlu0 %v1618, 64
        %v1645 = vpop.permute.xlu0 %1644
        %s1647 = scalar_lea.vmem %s550, 24 [#allocation12]
        %1648 = vst.msk [vmem:[%s1647] sm:$0xff] %vm639, %v1645
        %1650 = vrot.lane.b32.xlu0 %v1642, 64
        %v1651 = vpop.permute.xlu0 %1650
        %1653 = vst.msk [vmem:[%s557] sm:$0xff] %vm639, %v1651
        %1654 = vst.msk [vmem:[#allocation2] sm:$0xff] %vm639, %v1645
        %1656 = vrot.lane.b32.xlu0 %v1612, 96
        %v1657 = vpop.permute.xlu0 %1656
        %1659 = vst.msk [vmem:[#allocation3] sm:$0xff] %vm639, %v1657
        %1660 = vst.msk [vmem:[#allocation4] sm:$0xff] %vm639, %v1651
        %1662 = vrot.lane.b32.xlu0 %v1636, 96
        %v1663 = vpop.permute.xlu0 %1662
        %1665 = vst.msk [vmem:[#allocation5] sm:$0xff] %vm639, %v1663
        %p1666 = scmp.eq.s32.totalorder %s36, 1
        // Predicated region
        $region85: #{tpu_custom_call.1} parent=67 // pred_check
          %p1667 = pneg %p1666
        $region86: #{tpu_custom_call.1} parent=67 // pred_check_branch
          %1669 = sbr.rel (%p1667) target = $region88
        $region87: #{tpu_custom_call.1} parent=67 // pred_region
          %v1670 = vpack.c.bf16 %v1618, %v1618
          %v1671 = vld [vmem:[%s8] sm:$0xf]
          %v1672 = vld [vmem:[%s8 + $0x4] sm:$0xf]
          %v1673 = vld [vmem:[%s8 + $0x8] sm:$0xf]
          %v1674 = vld [vmem:[%s8 + $0xc] sm:$0xf]
          %v1675 = vpack.c.bf16 %v1642, %v1642
          %v1676 = vld [vmem:[%s8 + $0x10] sm:$0xf]
          %v1677 = vld [vmem:[%s8 + $0x14] sm:$0xf]
          %v1678 = vld [vmem:[%s8 + $0x18] sm:$0xf]
          %v1679 = vld [vmem:[%s8 + $0x1c] sm:$0xf]
          %1681 = vrot.lane.b32.xlu0 %v1675, 64
          %v1682 = vpop.permute.xlu0 %1681
          %v1687 = vunpack.c.l.b16 %v1676
          %v1688 = vunpack.c.l.b16 %v1677
          %v1689 = vunpack.c.l.b16 %v1678
          %v1690 = vunpack.c.l.b16 %v1679
          %v1691 = vpack.c.b16 %v1688, %v1687
          %v1692 = vpack.c.b16 %v1690, %v1689
          %v1696 = vsel %vm639, %v1682, 0
          %1698 = vmatprep.subr.bf16.mxu0 0
          %1699 = vmatpush1.bf16.msra.mxu0 %v1691
          %1700 = vmatprep.subr.bf16.mxu0 0
          %1701 = vmatpush1.bf16.msra.mxu0 %v1692
          %1702 = vmatprep.subr.bf16.mxu0 0
          %1703 = vmatpush1.bf16.msra.mxu0 0
          %1704 = vmatprep.subr.bf16.mxu0 0
          %1705 = vmatpush1.bf16.msra.mxu0 0
          %1706 = vmatprep.subr.bf16.mxu0 0
          %1707 = vmatpush1.bf16.msra.mxu0 0
          %1708 = vmatprep.subr.bf16.mxu0 0
          %1709 = vmatpush1.bf16.msra.mxu0 0
          %1710 = vmatprep.subr.bf16.mxu0 0
          %1711 = vmatpush1.bf16.msra.mxu0 0
          %1712 = vmatprep.subr.bf16.mxu0 0
          %1713 = vmatpush1.bf16.msra.mxu0 0
          %1714 = vmatprep.subr.bf16.mxu0 0
          %1715 = vmatpush1.bf16.msra.mxu0 0
          %1716 = vmatprep.subr.bf16.mxu0 0
          %1717 = vmatpush1.bf16.msra.mxu0 0
          %1718 = vmatprep.subr.bf16.mxu0 0
          %1719 = vmatpush1.bf16.msra.mxu0 0
          %1720 = vmatprep.subr.bf16.mxu0 0
          %1721 = vmatpush1.bf16.msra.mxu0 0
          %1722 = vmatprep.subr.bf16.mxu0 0
          %1723 = vmatpush1.bf16.msra.mxu0 0
          %1724 = vmatprep.subr.bf16.mxu0 0
          %1725 = vmatpush1.bf16.msra.mxu0 0
          %1726 = vmatprep.subr.bf16.mxu0 0
          %1727 = vmatpush1.bf16.msra.mxu0 0
          %1728 = vmatprep.subr.bf16.mxu0 0
          %1729 = vmatpush1.bf16.msra.mxu0 0
          %1730 = vmatprep.mubr.bf16.mxu0 0
          %1731 = vmatmul.mubr.bf16.gmra.mrb[0].mxu0 %v1696
          %v1732 = vpop.f32.mrb[0].mxu0
          %v1733 = vadd.f32 0.0, %v1732
          %v1734 = vpop.f32.mrb[0].mxu0
          %v1735 = vpop.f32.mrb[0].mxu0
          %v1736 = vpop.f32.mrb[0].mxu0
          %1737 = vdwg.mxu0
          %1739 = vrot.lane.b32.xlu0 %v1670, 64
          %v1740 = vpop.permute.xlu0 %1739
          %v1745 = vunpack.c.l.b16 %v1671
          %v1746 = vunpack.c.l.b16 %v1672
          %v1747 = vunpack.c.l.b16 %v1673
          %v1748 = vunpack.c.l.b16 %v1674
          %v1749 = vpack.c.b16 %v1746, %v1745
          %v1750 = vpack.c.b16 %v1748, %v1747
          %v1754 = vsel %vm639, %v1740, 0
          %1756 = vmatprep.subr.bf16.mxu0 0
          %1757 = vmatpush1.bf16.msra.mxu0 %v1749
          %1758 = vmatprep.subr.bf16.mxu0 0
          %1759 = vmatpush1.bf16.msra.mxu0 %v1750
          %1760 = vmatprep.subr.bf16.mxu0 0
          %1761 = vmatpush1.bf16.msra.mxu0 0
          %1762 = vmatprep.subr.bf16.mxu0 0
          %1763 = vmatpush1.bf16.msra.mxu0 0
          %1764 = vmatprep.subr.bf16.mxu0 0
          %1765 = vmatpush1.bf16.msra.mxu0 0
          %1766 = vmatprep.subr.bf16.mxu0 0
          %1767 = vmatpush1.bf16.msra.mxu0 0
          %1768 = vmatprep.subr.bf16.mxu0 0
          %1769 = vmatpush1.bf16.msra.mxu0 0
          %1770 = vmatprep.subr.bf16.mxu0 0
          %1771 = vmatpush1.bf16.msra.mxu0 0
          %1772 = vmatprep.subr.bf16.mxu0 0
          %1773 = vmatpush1.bf16.msra.mxu0 0
          %1774 = vmatprep.subr.bf16.mxu0 0
          %1775 = vmatpush1.bf16.msra.mxu0 0
          %1776 = vmatprep.subr.bf16.mxu0 0
          %1777 = vmatpush1.bf16.msra.mxu0 0
          %1778 = vmatprep.subr.bf16.mxu0 0
          %1779 = vmatpush1.bf16.msra.mxu0 0
          %1780 = vmatprep.subr.bf16.mxu0 0
          %1781 = vmatpush1.bf16.msra.mxu0 0
          %1782 = vmatprep.subr.bf16.mxu0 0
          %1783 = vmatpush1.bf16.msra.mxu0 0
          %1784 = vmatprep.subr.bf16.mxu0 0
          %1785 = vmatpush1.bf16.msra.mxu0 0
          %1786 = vmatprep.subr.bf16.mxu0 0
          %1787 = vmatpush1.bf16.msra.mxu0 0
          %1788 = vmatprep.mubr.bf16.mxu0 0
          %1789 = vmatmul.mubr.bf16.gmra.mrb[0].mxu0 %v1754
          %v1790 = vpop.f32.mrb[0].mxu0
          %v1791 = vadd.f32 %v1733, %v1790
          %v1792 = vpop.f32.mrb[0].mxu0
          %v1793 = vpop.f32.mrb[0].mxu0
          %v1794 = vpop.f32.mrb[0].mxu0
          %1795 = vdwg.mxu0
          %v1796 = vld [vmem:[%s9] sm:$0x1]
          %v1798 = vlaneseq
          %v1799 = vshrl.u32 %v1798, 7
          %v1800 = vsub.s32 0, %v1799
          %v1801 = vrot.slane %v1796, %v1800
          %v1803 = vadd.f32 %v1791, %v1801
          %1804 = vst.msk [vmem:[#allocation15] sm:$0xff] %vm639, %v1803
          %v1805 = vpack.c.bf16 %v1612, %v1612
          %v1806 = vld [vmem:[%s10] sm:$0xf]
          %v1807 = vld [vmem:[%s10 + $0x4] sm:$0xf]
          %v1808 = vld [vmem:[%s10 + $0x8] sm:$0xf]
          %v1809 = vld [vmem:[%s10 + $0xc] sm:$0xf]
          %v1810 = vpack.c.bf16 %v1636, %v1636
          %v1811 = vld [vmem:[%s10 + $0x10] sm:$0xf]
          %v1812 = vld [vmem:[%s10 + $0x14] sm:$0xf]
          %v1813 = vld [vmem:[%s10 + $0x18] sm:$0xf]
          %v1814 = vld [vmem:[%s10 + $0x1c] sm:$0xf]
          %1816 = vrot.lane.b32.xlu0 %v1810, 96
          %v1817 = vpop.permute.xlu0 %1816
          %v1822 = vunpack.c.l.b16 %v1811
          %v1823 = vunpack.c.l.b16 %v1812
          %v1824 = vunpack.c.l.b16 %v1813
          %v1825 = vunpack.c.l.b16 %v1814
          %v1826 = vpack.c.b16 %v1823, %v1822
          %v1827 = vpack.c.b16 %v1825, %v1824
          %v1831 = vsel %vm639, %v1817, 0
          %1833 = vmatprep.subr.bf16.mxu0 0
          %1834 = vmatpush1.bf16.msra.mxu0 %v1826
          %1835 = vmatprep.subr.bf16.mxu0 0
          %1836 = vmatpush1.bf16.msra.mxu0 %v1827
          %1837 = vmatprep.subr.bf16.mxu0 0
          %1838 = vmatpush1.bf16.msra.mxu0 0
          %1839 = vmatprep.subr.bf16.mxu0 0
          %1840 = vmatpush1.bf16.msra.mxu0 0
          %1841 = vmatprep.subr.bf16.mxu0 0
          %1842 = vmatpush1.bf16.msra.mxu0 0
          %1843 = vmatprep.subr.bf16.mxu0 0
          %1844 = vmatpush1.bf16.msra.mxu0 0
          %1845 = vmatprep.subr.bf16.mxu0 0
          %1846 = vmatpush1.bf16.msra.mxu0 0
          %1847 = vmatprep.subr.bf16.mxu0 0
          %1848 = vmatpush1.bf16.msra.mxu0 0
          %1849 = vmatprep.subr.bf16.mxu0 0
          %1850 = vmatpush1.bf16.msra.mxu0 0
          %1851 = vmatprep.subr.bf16.mxu0 0
          %1852 = vmatpush1.bf16.msra.mxu0 0
          %1853 = vmatprep.subr.bf16.mxu0 0
          %1854 = vmatpush1.bf16.msra.mxu0 0
          %1855 = vmatprep.subr.bf16.mxu0 0
          %1856 = vmatpush1.bf16.msra.mxu0 0
          %1857 = vmatprep.subr.bf16.mxu0 0
          %1858 = vmatpush1.bf16.msra.mxu0 0
          %1859 = vmatprep.subr.bf16.mxu0 0
          %1860 = vmatpush1.bf16.msra.mxu0 0
          %1861 = vmatprep.subr.bf16.mxu0 0
          %1862 = vmatpush1.bf16.msra.mxu0 0
          %1863 = vmatprep.subr.bf16.mxu0 0
          %1864 = vmatpush1.bf16.msra.mxu0 0
          %1865 = vmatprep.mubr.bf16.mxu0 0
          %1866 = vmatmul.mubr.bf16.gmra.mrb[0].mxu0 %v1831
          %v1867 = vpop.f32.mrb[0].mxu0
          %v1868 = vadd.f32 0.0, %v1867
          %v1869 = vpop.f32.mrb[0].mxu0
          %v1870 = vpop.f32.mrb[0].mxu0
          %v1871 = vpop.f32.mrb[0].mxu0
          %1872 = vdwg.mxu0
          %1874 = vrot.lane.b32.xlu0 %v1805, 96
          %v1875 = vpop.permute.xlu0 %1874
          %v1880 = vunpack.c.l.b16 %v1806
          %v1881 = vunpack.c.l.b16 %v1807
          %v1882 = vunpack.c.l.b16 %v1808
          %v1883 = vunpack.c.l.b16 %v1809
          %v1884 = vpack.c.b16 %v1881, %v1880
          %v1885 = vpack.c.b16 %v1883, %v1882
          %v1889 = vsel %vm639, %v1875, 0
          %1891 = vmatprep.subr.bf16.mxu0 0
          %1892 = vmatpush1.bf16.msra.mxu0 %v1884
          %1893 = vmatprep.subr.bf16.mxu0 0
          %1894 = vmatpush1.bf16.msra.mxu0 %v1885
          %1895 = vmatprep.subr.bf16.mxu0 0
          %1896 = vmatpush1.bf16.msra.mxu0 0
          %1897 = vmatprep.subr.bf16.mxu0 0
          %1898 = vmatpush1.bf16.msra.mxu0 0
          %1899 = vmatprep.subr.bf16.mxu0 0
          %1900 = vmatpush1.bf16.msra.mxu0 0
          %1901 = vmatprep.subr.bf16.mxu0 0
          %1902 = vmatpush1.bf16.msra.mxu0 0
          %1903 = vmatprep.subr.bf16.mxu0 0
          %1904 = vmatpush1.bf16.msra.mxu0 0
          %1905 = vmatprep.subr.bf16.mxu0 0
          %1906 = vmatpush1.bf16.msra.mxu0 0
          %1907 = vmatprep.subr.bf16.mxu0 0
          %1908 = vmatpush1.bf16.msra.mxu0 0
          %1909 = vmatprep.subr.bf16.mxu0 0
          %1910 = vmatpush1.bf16.msra.mxu0 0
          %1911 = vmatprep.subr.bf16.mxu0 0
          %1912 = vmatpush1.bf16.msra.mxu0 0
          %1913 = vmatprep.subr.bf16.mxu0 0
          %1914 = vmatpush1.bf16.msra.mxu0 0
          %1915 = vmatprep.subr.bf16.mxu0 0
          %1916 = vmatpush1.bf16.msra.mxu0 0
          %1917 = vmatprep.subr.bf16.mxu0 0
          %1918 = vmatpush1.bf16.msra.mxu0 0
          %1919 = vmatprep.subr.bf16.mxu0 0
          %1920 = vmatpush1.bf16.msra.mxu0 0
          %1921 = vmatprep.subr.bf16.mxu0 0
          %1922 = vmatpush1.bf16.msra.mxu0 0
          %1923 = vmatprep.mubr.bf16.mxu0 0
          %1924 = vmatmul.mubr.bf16.gmra.mrb[0].mxu0 %v1889
          %v1925 = vpop.f32.mrb[0].mxu0
          %v1926 = vadd.f32 %v1868, %v1925
          %v1927 = vpop.f32.mrb[0].mxu0
          %v1928 = vpop.f32.mrb[0].mxu0
          %v1929 = vpop.f32.mrb[0].mxu0
          %1930 = vdwg.mxu0
          %v1931 = vld [vmem:[%s11] sm:$0x1]
          %v1933 = vlaneseq
          %v1934 = vshrl.u32 %v1933, 7
          %v1935 = vsub.s32 0, %v1934
          %v1936 = vrot.slane %v1931, %v1935
          %v1938 = vadd.f32 %v1926, %v1936
          %1939 = vst.msk [vmem:[#allocation16] sm:$0xff] %vm639, %v1938
        $region88: #{tpu_custom_call.1} parent=67 // pred_fallthru
          _
        %s1940 = sand.u32 %s308, 1
        %s1941 = scalar_lea.sflag [#allocation8], %s1940
        %s1942 = sand.u32 %s308, 1
        %s1943 = smul.addr %s1942, 32
        %s1944 = scalar_lea.vmem [#allocation12], %s1943
        %s1945 = sand.u32 %s36, 1
        %s1946 = scalar_lea.sflag [#allocation14], %s1945
        %s1947 = sand.u32 %s336, 1
        %s1948 = smul.addr %s1947, 32
        %s1949 = scalar_lea.vmem [#allocation13], %s1948
        // Predicated region
        $region89: #{tpu_custom_call.1} parent=67 // pred_check
          %p1950 = pneg %p318
        $region90: #{tpu_custom_call.1} parent=67 // pred_check_branch
          %1952 = sbr.rel (%p1950) target = $region92
        $region91: #{tpu_custom_call.1} parent=67 // pred_region
          %s1953 = smul.u32 4, %s36
          %s1955 = ssub.s32 512, 512
          %1956 = vsyncadd %s1941, %s1955
          %s1957 = smul.addr %s1953, 128
          %s1958 = scalar_lea.hbm %s12, %s1957
          %s1959 = sshll.u32 %s1944, 4
          %s1960 = int_to_ptr.vmem [resolvable:$true] %s1959
          %1965 = dma.vmem_to_hbm [thread:$0]  %s1960, 512, %s1958, %s1941, 128, 128, 8
        $region92: #{tpu_custom_call.1} parent=67 // pred_fallthru
          _
        // Predicated region
        $region93: #{tpu_custom_call.1} parent=67 // pred_check
          %p1966 = pneg %p346
        $region94: #{tpu_custom_call.1} parent=67 // pred_check_branch
          %1968 = sbr.rel (%p1966) target = $region96
        $region95: #{tpu_custom_call.1} parent=67 // pred_region
          %s1969 = ssub.s32 1, %s36
          %s1970 = smul.u32 4, %s1969
          %s1972 = ssub.s32 512, 512
          %1973 = vsyncadd %s1946, %s1972
          %s1974 = smul.addr %s1970, 128
          %s1975 = scalar_lea.hbm %s13, %s1974
          %s1976 = sshll.u32 %s1949, 4
          %s1977 = int_to_ptr.vmem [resolvable:$true] %s1976
          %1982 = dma.vmem_to_hbm [thread:$0]  %s1977, 512, %s1975, %s1946, 128, 128, 8
        $region96: #{tpu_custom_call.1} parent=67 // pred_fallthru
          _
        // Predicated region
        $region97: #{tpu_custom_call.1} parent=67 // pred_check
          %p1983 = pneg %p367
        $region98: #{tpu_custom_call.1} parent=67 // pred_check_branch
          %1985 = sbr.rel (%p1983) target = $region100
        $region99: #{tpu_custom_call.1} parent=67 // pred_region
          %s1987 = ssub.s32 128, 128
          %1988 = vsyncadd [#allocation14], %s1987
          %s1990 = sshll.u32 [#allocation15], 4
          %s1991 = int_to_ptr.vmem [resolvable:$true] %s1990
          %1993 = dma.vmem_to_hbm [thread:$0]  %s1991, 128, %s14, [#allocation14]
        $region100: #{tpu_custom_call.1} parent=67 // pred_fallthru
          _
        // Predicated region
        $region101: #{tpu_custom_call.1} parent=67 // pred_check
          %p1994 = pneg %p388
        $region102: #{tpu_custom_call.1} parent=67 // pred_check_branch
          %1996 = sbr.rel (%p1994) target = $region104
        $region103: #{tpu_custom_call.1} parent=67 // pred_region
          %s1998 = ssub.s32 128, 128
          %1999 = vsyncadd [#allocation17], %s1998
          %s2001 = sshll.u32 [#allocation16], 4
          %s2002 = int_to_ptr.vmem [resolvable:$true] %s2001
          %2004 = dma.vmem_to_hbm [thread:$0]  %s2002, 128, %s15, [#allocation17]
        $region104: #{tpu_custom_call.1} parent=67 // pred_fallthru
          _
        // Predicated region
        $region105: #{tpu_custom_call.1} parent=67 // pred_check
          %p2005 = pneg %p367
        $region106: #{tpu_custom_call.1} parent=67 // pred_check_branch
          %2007 = sbr.rel (%p2005) target = $region108
        $region107: #{tpu_custom_call.1} parent=67 // pred_region
          %2008 = dma.done [#allocation14], 128
        $region108: #{tpu_custom_call.1} parent=67 // pred_fallthru
          _
        // Predicated region
        $region109: #{tpu_custom_call.1} parent=67 // pred_check
          %p2009 = pneg %p388
        $region110: #{tpu_custom_call.1} parent=67 // pred_check_branch
          %2011 = sbr.rel (%p2009) target = $region112
        $region111: #{tpu_custom_call.1} parent=67 // pred_region
          %2012 = dma.done [#allocation17], 128
        $region112: #{tpu_custom_call.1} parent=67 // pred_fallthru
          _
      $region68: #{tpu_custom_call.1} parent=5 // pred_fallthru
        _
      %p2013 = scmp.le.s32.totalorder 2, %s31
      // Predicated region
      $region113: #{tpu_custom_call.1} parent=5 // pred_check
        %p2014 = pneg %p2013
      $region114: #{tpu_custom_call.1} parent=5 // pred_check_branch
        %2016 = sbr.rel (%p2014) target = $region116
      $region115: #{tpu_custom_call.1} parent=5 // pred_region
        %s2017 = ssub.s32 %s31, 2
        // Predicated region
        $region117: #{tpu_custom_call.1} parent=115 // pred_check
          %p2018 = pneg %p324
        $region118: #{tpu_custom_call.1} parent=115 // pred_check_branch
          %2020 = sbr.rel (%p2018) target = $region120
        $region119: #{tpu_custom_call.1} parent=115 // pred_region
          %s2021 = sand.u32 %s309, 1
          %s2022 = scalar_lea.sflag [#allocation8], %s2021
          %s2023 = sand.u32 %s309, 1
          %s2024 = smul.addr %s2023, 32
          %s2025 = scalar_lea.vmem [#allocation12], %s2024
          %2026 = dma.done %s2022, 512
        $region120: #{tpu_custom_call.1} parent=115 // pred_fallthru
          _
        // Predicated region
        $region121: #{tpu_custom_call.1} parent=115 // pred_check
          %p2027 = pneg %p352
        $region122: #{tpu_custom_call.1} parent=115 // pred_check_branch
          %2029 = sbr.rel (%p2027) target = $region124
        $region123: #{tpu_custom_call.1} parent=115 // pred_region
          %s2030 = sand.u32 %s37, 1
          %s2031 = scalar_lea.sflag [#allocation14], %s2030
          %s2032 = sand.u32 %s337, 1
          %s2033 = smul.addr %s2032, 32
          %s2034 = scalar_lea.vmem [#allocation13], %s2033
          %2035 = dma.done %s2031, 512
        $region124: #{tpu_custom_call.1} parent=115 // pred_fallthru
          _
      $region116: #{tpu_custom_call.1} parent=5 // pred_fallthru
        _
    $region6: #{tpu_custom_call.1} parent=1 // loop_footer
      %s35 = sadd.s32 1, %s31
    $region7: #{tpu_custom_call.1} parent=1 // loop_footer_branch
      %30 = sbr.rel target = $region3
    $region8: #{tpu_custom_call.1} parent=1 // loop_exit
      _
    %2036 = vsyncpa [#allocation7], 1
    %s2037 = scalar_lea.sflag [#allocation7], 1
    %2038 = vsyncpa %s2037, 1
    %2039 = vsyncpa [#allocation10], 1
    %2040 = vsyncpa [#allocation8], 1
    %s2041 = scalar_lea.sflag [#allocation8], 1
    %2042 = vsyncpa %s2041, 1
    %2043 = vsyncpa [#allocation14], 1
    %s2044 = scalar_lea.sflag [#allocation14], 1
    %2045 = vsyncpa %s2044, 1
    %2046 = vsyncpa [#allocation17], 1

// kernel: tpu_custom_call.1
$region0: #{tpu_custom_call.1}
  #allocation0 [shape = 'u32[]', space=smem, size = 0x4, offset = 0x4, fixed_abs, tag = 'smem constant byte address 0x4 - core index']
  #allocation1 [shape = 'u32[144,128]{1,0:T(1,128)}', space=vmem, size = 0x12000, scoped, tag = 'internal scratch']
  #allocation2 [shape = 'f32[8,32]{1,0:T(8,128)}', space=vmem, size = 0x1000, scoped, tag = 'scratch operand']
  #allocation3 [shape = 'f32[8,32]{1,0:T(8,128)}', space=vmem, size = 0x1000, scoped, tag = 'scratch operand']
  #allocation4 [shape = 'f32[8,32]{1,0:T(8,128)}', space=vmem, size = 0x1000, scoped, tag = 'scratch operand']
  #allocation5 [shape = 'f32[8,32]{1,0:T(8,128)}', space=vmem, size = 0x1000, scoped, tag = 'scratch operand']
  %s0 = inlined_call_operand.vmem [shape: bf16[8,8,32], index: 0, kind: input, shape index: {}]
  %s1 = inlined_call_operand.vmem [shape: bf16[8,8,32], index: 1, kind: input, shape index: {}]
  %s2 = inlined_call_operand.vmem [shape: bf16[32,128], index: 2, kind: input, shape index: {}]
  %s3 = inlined_call_operand.hbm [shape: bf16[32,128], index: 3, kind: input, shape index: {}]
  %s4 = inlined_call_operand.vmem [shape: f32[1,128], index: 4, kind: input, shape index: {}]
  %s5 = inlined_call_operand.vmem [shape: f32[1,128], index: 5, kind: input, shape index: {}]
  %s6 = inlined_call_operand.hbm [shape: bf16[32,128], index: 6, kind: input, shape index: {}]
  %s7 = inlined_call_operand.hbm [shape: bf16[32,128], index: 7, kind: input, shape index: {}]
  %s8 = inlined_call_operand.vmem [shape: bf16[64,32], index: 8, kind: input, shape index: {}]
  %s9 = inlined_call_operand.vmem [shape: f32[1,32], index: 9, kind: input, shape index: {}]
  %s10 = inlined_call_operand.vmem [shape: bf16[64,32], index: 10, kind: input, shape index: {}]
  %s11 = inlined_call_operand.vmem [shape: f32[1,32], index: 11, kind: input, shape index: {}]
  %s12 = inlined_call_operand.hbm [shape: f32[8,8,32], index: 12, kind: output, shape index: {0}]
  %s13 = inlined_call_operand.hbm [shape: f32[8,8,32], index: 13, kind: output, shape index: {1}]
  %s14 = inlined_call_operand.hbm [shape: f32[8,32], index: 14, kind: output, shape index: {2}]
  %s15 = inlined_call_operand.hbm [shape: f32[8,32], index: 15, kind: output, shape index: {3}]
  %16 = xla_tuple %s12, %s13, %s14, %s15
  %s17 = sld [smem:[#allocation0]]
  $region125: #{tpu_custom_call.1} parent=0
    _
  %s19 = ssub.s32 1, %s17
  %s20 = scalar_select 0, %s19, %s17
  $region1: #{tpu_custom_call.1} parent=0
    #allocation6 [shape = 'u8[8192]{0}', space=vmem, size = 0x2000, scoped, tag = 'input window, operand 3, single buffered']
    #allocation7 [shape = 's32[2]{0}', space=sflag, size = 0x8, scoped, tag = 'scoped memory for tpu_custom_call.1']
    #allocation8 [shape = 's32[2]{0}', space=sflag, size = 0x8, scoped, tag = 'scoped memory for tpu_custom_call.1']
    #allocation9 [shape = 'u8[8192]{0}', space=vmem, size = 0x2000, scoped, tag = 'input window, operand 6, single buffered']
    #allocation10 [shape = 's32[1]{0}', space=sflag, size = 0x4, scoped, tag = 'scoped memory for tpu_custom_call.1']
    #allocation11 [shape = 'u8[8192]{0}', space=vmem, size = 0x2000, scoped, tag = 'input window, operand 7, single buffered']
    #allocation12 [shape = 'u8[32768]{0}', space=vmem, size = 0x8000, scoped, tag = 'output window, operand 0']
    #allocation13 [shape = 'u8[32768]{0}', space=vmem, size = 0x8000, scoped, tag = 'output window, operand 1']
    #allocation14 [shape = 's32[2]{0}', space=sflag, size = 0x8, scoped, tag = 'scoped memory for tpu_custom_call.1']
    #allocation15 [shape = 'u8[4096]{0}', space=vmem, size = 0x1000, scoped, tag = 'output window, operand 2, single buffered']
    #allocation16 [shape = 'u8[4096]{0}', space=vmem, size = 0x1000, scoped, tag = 'output window, operand 3, single buffered']
    #allocation17 [shape = 's32[1]{0}', space=sflag, size = 0x4, scoped, tag = 'scoped memory for tpu_custom_call.1']
    %21 = vsyncpa [#allocation7], 0
    %22 = vsyncpa [#allocation10], 0
    %23 = vsyncpa [#allocation8], 0
    %s24 = scalar_lea.sflag [#allocation8], 1
    %25 = vsyncpa %s24, 0
    %26 = vsyncpa [#allocation14], 0
    %s27 = scalar_lea.sflag [#allocation14], 1
    %28 = vsyncpa %s27, 0
    %29 = vsyncpa [#allocation17], 0
    loop: start=0, step=1, limit=4
    $region2: #{tpu_custom_call.1} parent=1 // loop_pre_header
      _
    $region3: #{tpu_custom_call.1} parent=1 // loop_header
      %s31 = sphi 0, %s35
      %p32 = scmp.ge.s32.totalorder %s31, 4
      %s41 = sphi 0, %s43
      %s44 = sphi 0, %s41
      %s45 = sphi 0, %s44
      %s61 = sphi 0, %s45
      %s69 = sphi 0, %s71
      %s72 = sphi 0, %s69
      %s73 = sphi 0, %s72
      %s89 = sphi 0, %s73
      %s93 = sphi 0, %s93
      %s95 = sphi 0, %s93
      %s96 = sphi 0, %s95
      %s110 = sphi 0, %s96
      %s114 = sphi 0, %s114
      %s116 = sphi 0, %s114
      %s117 = sphi 0, %s116
      %s131 = sphi 0, %s117
      %s135 = sphi 0, %s135
      %s137 = sphi 0, %s135
      %s138 = sphi 0, %s137
      %s152 = sphi 0, %s138
      %s156 = sphi 0, %s156
      %s158 = sphi 0, %s156
      %s159 = sphi 0, %s158
      %s173 = sphi 0, %s159
      %s177 = sphi 0, %s177
      %s179 = sphi 0, %s177
      %s180 = sphi 0, %s179
      %s194 = sphi 0, %s180
      %s198 = sphi 0, %s198
      %s200 = sphi 0, %s198
      %s201 = sphi 0, %s200
      %s215 = sphi 0, %s201
      %s219 = sphi 0, %s219
      %s221 = sphi 0, %s219
      %s222 = sphi 0, %s221
      %s236 = sphi 0, %s222
      %s240 = sphi 0, %s240
      %s242 = sphi 0, %s240
      %s243 = sphi 0, %s242
      %s257 = sphi 0, %s243
      %s261 = sphi 0, %s261
      %s263 = sphi 0, %s261
      %s264 = sphi 0, %s263
      %s278 = sphi 0, %s264
      %s282 = sphi 0, %s282
      %s284 = sphi 0, %s282
      %s285 = sphi 0, %s284
      %s299 = sphi 0, %s285
      %s305 = sphi 0, %s307
      %s308 = sphi 0, %s305
      %s309 = sphi 0, %s308
      %s325 = sphi 0, %s309
      %s333 = sphi 0, %s335
      %s336 = sphi 0, %s333
      %s337 = sphi 0, %s336
      %s353 = sphi 0, %s337
      %s357 = sphi 0, %s357
      %s359 = sphi 0, %s357
      %s360 = sphi 0, %s359
      %s374 = sphi 0, %s360
      %s378 = sphi 0, %s378
      %s380 = sphi 0, %s378
      %s381 = sphi 0, %s380
      %s395 = sphi 0, %s381
    $region4: #{tpu_custom_call.1} parent=1 // loop_header_branch
      %34 = sbr.rel (%p32) target = $region8
    $region5: #{tpu_custom_call.1} parent=1 // loop_body
      %s36 = ssub.s32 %s31, 1
      %s37 = ssub.s32 %s31, 2
      %s38 = sadd.s32 %s31, 1
      %s39 = ssub.s32 %s31, %s38
      %p40 = scmp.eq.s32.totalorder %s39, 0
      %s42 = sadd.s32 %s41, 1
      %s43 = scalar_select %p40, %s41, %s42
      %p46 = pneg %p40
      %p47 = scmp.eq.s32.totalorder %s31, 1
      %p48 = por %p46, %p47
      %p49 = scmp.ne.s32.totalorder %s41, %s44
      %p50 = scmp.eq.s32.totalorder %s31, 0
      %p51 = por %p49, %p50
      %p52 = scmp.ne.s32.totalorder %s41, %s44
      %p53 = scmp.eq.s32.totalorder %s36, 1
      %p54 = por %p52, %p53
      %p55 = scmp.ne.s32.totalorder %s44, %s45
      %p56 = scmp.eq.s32.totalorder %s36, 0
      %p57 = por %p55, %p56
      %p58 = scmp.ne.s32.totalorder %s44, %s45
      %p59 = scmp.eq.s32.totalorder %s37, 1
      %p60 = por %p58, %p59
      %p62 = scmp.ne.s32.totalorder %s45, %s61
      %p63 = scmp.eq.s32.totalorder %s37, 0
      %p64 = por %p62, %p63
      %s65 = ssub.s32 1, %s31
      %s66 = ssub.s32 1, %s38
      %s67 = ssub.s32 %s65, %s66
      %p68 = scmp.eq.s32.totalorder %s67, 0
      %s70 = sadd.s32 %s69, 1
      %s71 = scalar_select %p68, %s69, %s70
      %p74 = pneg %p68
      %p75 = scmp.eq.s32.totalorder %s31, 1
      %p76 = por %p74, %p75
      %p77 = scmp.ne.s32.totalorder %s69, %s72
      %p78 = scmp.eq.s32.totalorder %s31, 0
      %p79 = por %p77, %p78
      %p80 = scmp.ne.s32.totalorder %s69, %s72
      %p81 = scmp.eq.s32.totalorder %s36, 1
      %p82 = por %p80, %p81
      %p83 = scmp.ne.s32.totalorder %s72, %s73
      %p84 = scmp.eq.s32.totalorder %s36, 0
      %p85 = por %p83, %p84
      %p86 = scmp.ne.s32.totalorder %s72, %s73
      %p87 = scmp.eq.s32.totalorder %s37, 1
      %p88 = por %p86, %p87
      %p90 = scmp.ne.s32.totalorder %s73, %s89
      %p91 = scmp.eq.s32.totalorder %s37, 0
      %p92 = por %p90, %p91
      %s94 = sadd.s32 %s93, 1
      %p97 = scmp.eq.s32.totalorder %s31, 1
      %p98 = scmp.ne.s32.totalorder %s93, %s95
      %p99 = scmp.eq.s32.totalorder %s31, 0
      %p100 = por %p98, %p99
      %p101 = scmp.ne.s32.totalorder %s93, %s95
      %p102 = scmp.eq.s32.totalorder %s36, 1
      %p103 = por %p101, %p102
      %p104 = scmp.ne.s32.totalorder %s95, %s96
      %p105 = scmp.eq.s32.totalorder %s36, 0
      %p106 = por %p104, %p105
      %p107 = scmp.ne.s32.totalorder %s95, %s96
      %p108 = scmp.eq.s32.totalorder %s37, 1
      %p109 = por %p107, %p108
      %p111 = scmp.ne.s32.totalorder %s96, %s110
      %p112 = scmp.eq.s32.totalorder %s37, 0
      %p113 = por %p111, %p112
      %s115 = sadd.s32 %s114, 1
      %p118 = scmp.eq.s32.totalorder %s31, 1
      %p119 = scmp.ne.s32.totalorder %s114, %s116
      %p120 = scmp.eq.s32.totalorder %s31, 0
      %p121 = por %p119, %p120
      %p122 = scmp.ne.s32.totalorder %s114, %s116
      %p123 = scmp.eq.s32.totalorder %s36, 1
      %p124 = por %p122, %p123
      %p125 = scmp.ne.s32.totalorder %s116, %s117
      %p126 = scmp.eq.s32.totalorder %s36, 0
      %p127 = por %p125, %p126
      %p128 = scmp.ne.s32.totalorder %s116, %s117
      %p129 = scmp.eq.s32.totalorder %s37, 1
      %p130 = por %p128, %p129
      %p132 = scmp.ne.s32.totalorder %s117, %s131
      %p133 = scmp.eq.s32.totalorder %s37, 0
      %p134 = por %p132, %p133
      %s136 = sadd.s32 %s135, 1
      %p139 = scmp.eq.s32.totalorder %s31, 1
      %p140 = scmp.ne.s32.totalorder %s135, %s137
      %p141 = scmp.eq.s32.totalorder %s31, 0
      %p142 = por %p140, %p141
      %p143 = scmp.ne.s32.totalorder %s135, %s137
      %p144 = scmp.eq.s32.totalorder %s36, 1
      %p145 = por %p143, %p144
      %p146 = scmp.ne.s32.totalorder %s137, %s138
      %p147 = scmp.eq.s32.totalorder %s36, 0
      %p148 = por %p146, %p147
      %p149 = scmp.ne.s32.totalorder %s137, %s138
      %p150 = scmp.eq.s32.totalorder %s37, 1
      %p151 = por %p149, %p150
      %p153 = scmp.ne.s32.totalorder %s138, %s152
      %p154 = scmp.eq.s32.totalorder %s37, 0
      %p155 = por %p153, %p154
      %s157 = sadd.s32 %s156, 1
      %p160 = scmp.eq.s32.totalorder %s31, 1
      %p161 = scmp.ne.s32.totalorder %s156, %s158
      %p162 = scmp.eq.s32.totalorder %s31, 0
      %p163 = por %p161, %p162
      %p164 = scmp.ne.s32.totalorder %s156, %s158
      %p165 = scmp.eq.s32.totalorder %s36, 1
      %p166 = por %p164, %p165
      %p167 = scmp.ne.s32.totalorder %s158, %s159
      %p168 = scmp.eq.s32.totalorder %s36, 0
      %p169 = por %p167, %p168
      %p170 = scmp.ne.s32.totalorder %s158, %s159
      %p171 = scmp.eq.s32.totalorder %s37, 1
      %p172 = por %p170, %p171
      %p174 = scmp.ne.s32.totalorder %s159, %s173
      %p175 = scmp.eq.s32.totalorder %s37, 0
      %p176 = por %p174, %p175
      %s178 = sadd.s32 %s177, 1
      %p181 = scmp.eq.s32.totalorder %s31, 1
      %p182 = scmp.ne.s32.totalorder %s177, %s179
      %p183 = scmp.eq.s32.totalorder %s31, 0
      %p184 = por %p182, %p183
      %p185 = scmp.ne.s32.totalorder %s177, %s179
      %p186 = scmp.eq.s32.totalorder %s36, 1
      %p187 = por %p185, %p186
      %p188 = scmp.ne.s32.totalorder %s179, %s180
      %p189 = scmp.eq.s32.totalorder %s36, 0
      %p190 = por %p188, %p189
      %p191 = scmp.ne.s32.totalorder %s179, %s180
      %p192 = scmp.eq.s32.totalorder %s37, 1
      %p193 = por %p191, %p192
      %p195 = scmp.ne.s32.totalorder %s180, %s194
      %p196 = scmp.eq.s32.totalorder %s37, 0
      %p197 = por %p195, %p196
      %s199 = sadd.s32 %s198, 1
      %p202 = scmp.eq.s32.totalorder %s31, 1
      %p203 = scmp.ne.s32.totalorder %s198, %s200
      %p204 = scmp.eq.s32.totalorder %s31, 0
      %p205 = por %p203, %p204
      %p206 = scmp.ne.s32.totalorder %s198, %s200
      %p207 = scmp.eq.s32.totalorder %s36, 1
      %p208 = por %p206, %p207
      %p209 = scmp.ne.s32.totalorder %s200, %s201
      %p210 = scmp.eq.s32.totalorder %s36, 0
      %p211 = por %p209, %p210
      %p212 = scmp.ne.s32.totalorder %s200, %s201
      %p213 = scmp.eq.s32.totalorder %s37, 1
      %p214 = por %p212, %p213
      %p216 = scmp.ne.s32.totalorder %s201, %s215
      %p217 = scmp.eq.s32.totalorder %s37, 0
      %p218 = por %p216, %p217
      %s220 = sadd.s32 %s219, 1
      %p223 = scmp.eq.s32.totalorder %s31, 1
      %p224 = scmp.ne.s32.totalorder %s219, %s221
      %p225 = scmp.eq.s32.totalorder %s31, 0
      %p226 = por %p224, %p225
      %p227 = scmp.ne.s32.totalorder %s219, %s221
      %p228 = scmp.eq.s32.totalorder %s36, 1
      %p229 = por %p227, %p228
      %p230 = scmp.ne.s32.totalorder %s221, %s222
      %p231 = scmp.eq.s32.totalorder %s36, 0
      %p232 = por %p230, %p231
      %p233 = scmp.ne.s32.totalorder %s221, %s222
      %p234 = scmp.eq.s32.totalorder %s37, 1
      %p235 = por %p233, %p234
      %p237 = scmp.ne.s32.totalorder %s222, %s236
      %p238 = scmp.eq.s32.totalorder %s37, 0
      %p239 = por %p237, %p238
      %s241 = sadd.s32 %s240, 1
      %p244 = scmp.eq.s32.totalorder %s31, 1
      %p245 = scmp.ne.s32.totalorder %s240, %s242
      %p246 = scmp.eq.s32.totalorder %s31, 0
      %p247 = por %p245, %p246
      %p248 = scmp.ne.s32.totalorder %s240, %s242
      %p249 = scmp.eq.s32.totalorder %s36, 1
      %p250 = por %p248, %p249
      %p251 = scmp.ne.s32.totalorder %s242, %s243
      %p252 = scmp.eq.s32.totalorder %s36, 0
      %p253 = por %p251, %p252
      %p254 = scmp.ne.s32.totalorder %s242, %s243
      %p255 = scmp.eq.s32.totalorder %s37, 1
      %p256 = por %p254, %p255
      %p258 = scmp.ne.s32.totalorder %s243, %s257
      %p259 = scmp.eq.s32.totalorder %s37, 0
      %p260 = por %p258, %p259
      %s262 = sadd.s32 %s261, 1
      %p265 = scmp.eq.s32.totalorder %s31, 1
      %p266 = scmp.ne.s32.totalorder %s261, %s263
      %p267 = scmp.eq.s32.totalorder %s31, 0
      %p268 = por %p266, %p267
      %p269 = scmp.ne.s32.totalorder %s261, %s263
      %p270 = scmp.eq.s32.totalorder %s36, 1
      %p271 = por %p269, %p270
      %p272 = scmp.ne.s32.totalorder %s263, %s264
      %p273 = scmp.eq.s32.totalorder %s36, 0
      %p274 = por %p272, %p273
      %p275 = scmp.ne.s32.totalorder %s263, %s264
      %p276 = scmp.eq.s32.totalorder %s37, 1
      %p277 = por %p275, %p276
      %p279 = scmp.ne.s32.totalorder %s264, %s278
      %p280 = scmp.eq.s32.totalorder %s37, 0
      %p281 = por %p279, %p280
      %s283 = sadd.s32 %s282, 1
      %p286 = scmp.eq.s32.totalorder %s31, 1
      %p287 = scmp.ne.s32.totalorder %s282, %s284
      %p288 = scmp.eq.s32.totalorder %s31, 0
      %p289 = por %p287, %p288
      %p290 = scmp.ne.s32.totalorder %s282, %s284
      %p291 = scmp.eq.s32.totalorder %s36, 1
      %p292 = por %p290, %p291
      %p293 = scmp.ne.s32.totalorder %s284, %s285
      %p294 = scmp.eq.s32.totalorder %s36, 0
      %p295 = por %p293, %p294
      %p296 = scmp.ne.s32.totalorder %s284, %s285
      %p297 = scmp.eq.s32.totalorder %s37, 1
      %p298 = por %p296, %p297
      %p300 = scmp.ne.s32.totalorder %s285, %s299
      %p301 = scmp.eq.s32.totalorder %s37, 0
      %p302 = por %p300, %p301
      %s303 = ssub.s32 %s31, %s38
      %p304 = scmp.eq.s32.totalorder %s303, 0
      %s306 = sadd.s32 %s305, 1
      %s307 = scalar_select %p304, %s305, %s306
      %p310 = pneg %p304
      %p311 = scmp.eq.s32.totalorder %s31, 1
      %p312 = por %p310, %p311
      %p313 = scmp.ne.s32.totalorder %s305, %s308
      %p314 = scmp.eq.s32.totalorder %s31, 0
      %p315 = por %p313, %p314
      %p316 = scmp.ne.s32.totalorder %s305, %s308
      %p317 = scmp.eq.s32.totalorder %s36, 1
      %p318 = por %p316, %p317
      %p319 = scmp.ne.s32.totalorder %s308, %s309
      %p320 = scmp.eq.s32.totalorder %s36, 0
      %p321 = por %p319, %p320
      %p322 = scmp.ne.s32.totalorder %s308, %s309
      %p323 = scmp.eq.s32.totalorder %s37, 1
      %p324 = por %p322, %p323
      %p326 = scmp.ne.s32.totalorder %s309, %s325
      %p327 = scmp.eq.s32.totalorder %s37, 0
      %p328 = por %p326, %p327
      %s329 = ssub.s32 1, %s31
      %s330 = ssub.s32 1, %s38
      %s331 = ssub.s32 %s329, %s330
      %p332 = scmp.eq.s32.totalorder %s331, 0
      %s334 = sadd.s32 %s333, 1
      %s335 = scalar_select %p332, %s333, %s334
      %p338 = pneg %p332
      %p339 = scmp.eq.s32.totalorder %s31, 1
      %p340 = por %p338, %p339
      %p341 = scmp.ne.s32.totalorder %s333, %s336
      %p342 = scmp.eq.s32.totalorder %s31, 0
      %p343 = por %p341, %p342
      %p344 = scmp.ne.s32.totalorder %s333, %s336
      %p345 = scmp.eq.s32.totalorder %s36, 1
      %p346 = por %p344, %p345
      %p347 = scmp.ne.s32.totalorder %s336, %s337
      %p348 = scmp.eq.s32.totalorder %s36, 0
      %p349 = por %p347, %p348
      %p350 = scmp.ne.s32.totalorder %s336, %s337
      %p351 = scmp.eq.s32.totalorder %s37, 1
      %p352 = por %p350, %p351
      %p354 = scmp.ne.s32.totalorder %s337, %s353
      %p355 = scmp.eq.s32.totalorder %s37, 0
      %p356 = por %p354, %p355
      %s358 = sadd.s32 %s357, 1
      %p361 = scmp.eq.s32.totalorder %s31, 1
      %p362 = scmp.ne.s32.totalorder %s357, %s359
      %p363 = scmp.eq.s32.totalorder %s31, 0
      %p364 = por %p362, %p363
      %p365 = scmp.ne.s32.totalorder %s357, %s359
      %p366 = scmp.eq.s32.totalorder %s36, 1
      %p367 = por %p365, %p366
      %p368 = scmp.ne.s32.totalorder %s359, %s360
      %p369 = scmp.eq.s32.totalorder %s36, 0
      %p370 = por %p368, %p369
      %p371 = scmp.ne.s32.totalorder %s359, %s360
      %p372 = scmp.eq.s32.totalorder %s37, 1
      %p373 = por %p371, %p372
      %p375 = scmp.ne.s32.totalorder %s360, %s374
      %p376 = scmp.eq.s32.totalorder %s37, 0
      %p377 = por %p375, %p376
      %s379 = sadd.s32 %s378, 1
      %p382 = scmp.eq.s32.totalorder %s31, 1
      %p383 = scmp.ne.s32.totalorder %s378, %s380
      %p384 = scmp.eq.s32.totalorder %s31, 0
      %p385 = por %p383, %p384
      %p386 = scmp.ne.s32.totalorder %s378, %s380
      %p387 = scmp.eq.s32.totalorder %s36, 1
      %p388 = por %p386, %p387
      %p389 = scmp.ne.s32.totalorder %s380, %s381
      %p390 = scmp.eq.s32.totalorder %s36, 0
      %p391 = por %p389, %p390
      %p392 = scmp.ne.s32.totalorder %s380, %s381
      %p393 = scmp.eq.s32.totalorder %s37, 1
      %p394 = por %p392, %p393
      %p396 = scmp.ne.s32.totalorder %s381, %s395
      %p397 = scmp.eq.s32.totalorder %s37, 0
      %p398 = por %p396, %p397
      %p399 = scmp.le.s32.totalorder 1, %s31
      %p400 = scmp.lt.s32.totalorder %s31, 3
      %p401 = pnand %p399, %p400
      %p402 = pneg %p401
      // Predicated region
      $region9: #{tpu_custom_call.1} parent=5 // pred_check
        _
      $region10: #{tpu_custom_call.1} parent=5 // pred_check_branch
        %404 = sbr.rel (%p401) target = $region12
      $region11: #{tpu_custom_call.1} parent=5 // pred_region
        %s405 = ssub.s32 %s31, 1
        // Predicated region
        $region13: #{tpu_custom_call.1} parent=11 // pred_check
          %p406 = pneg %p106
        $region14: #{tpu_custom_call.1} parent=11 // pred_check_branch
          %408 = sbr.rel (%p406) target = $region16
        $region15: #{tpu_custom_call.1} parent=11 // pred_region
          _
        $region16: #{tpu_custom_call.1} parent=11 // pred_fallthru
          _
        // Predicated region
        $region17: #{tpu_custom_call.1} parent=11 // pred_check
          %p409 = pneg %p127
        $region18: #{tpu_custom_call.1} parent=11 // pred_check_branch
          %411 = sbr.rel (%p409) target = $region20
        $region19: #{tpu_custom_call.1} parent=11 // pred_region
          %s413 = ssub.s32 256, 256
          %414 = vsyncadd [#allocation7], %s413
          %s415 = sshll.u32 [#allocation6], 4
          %s416 = int_to_ptr.vmem [resolvable:$true] %s415
          %421 = dma.hbm_to_vmem [thread:$0]  %s3, 256, %s416, [#allocation7], 64, 64, 4
        $region20: #{tpu_custom_call.1} parent=11 // pred_fallthru
          _
        // Predicated region
        $region21: #{tpu_custom_call.1} parent=11 // pred_check
          %p422 = pneg %p148
        $region22: #{tpu_custom_call.1} parent=11 // pred_check_branch
          %424 = sbr.rel (%p422) target = $region24
        $region23: #{tpu_custom_call.1} parent=11 // pred_region
          _
        $region24: #{tpu_custom_call.1} parent=11 // pred_fallthru
          _
        // Predicated region
        $region25: #{tpu_custom_call.1} parent=11 // pred_check
          %p425 = pneg %p169
        $region26: #{tpu_custom_call.1} parent=11 // pred_check_branch
          %427 = sbr.rel (%p425) target = $region28
        $region27: #{tpu_custom_call.1} parent=11 // pred_region
          _
        $region28: #{tpu_custom_call.1} parent=11 // pred_fallthru
          _
        // Predicated region
        $region29: #{tpu_custom_call.1} parent=11 // pred_check
          %p428 = pneg %p190
        $region30: #{tpu_custom_call.1} parent=11 // pred_check_branch
          %430 = sbr.rel (%p428) target = $region32
        $region31: #{tpu_custom_call.1} parent=11 // pred_region
          %s432 = ssub.s32 256, 256
          %433 = vsyncadd [#allocation10], %s432
          %s434 = sshll.u32 [#allocation9], 4
          %s435 = int_to_ptr.vmem [resolvable:$true] %s434
          %440 = dma.hbm_to_vmem [thread:$0]  %s6, 256, %s435, [#allocation10], 64, 64, 4
        $region32: #{tpu_custom_call.1} parent=11 // pred_fallthru
          _
        // Predicated region
        $region33: #{tpu_custom_call.1} parent=11 // pred_check
          %p441 = pneg %p211
        $region34: #{tpu_custom_call.1} parent=11 // pred_check_branch
          %443 = sbr.rel (%p441) target = $region36
        $region35: #{tpu_custom_call.1} parent=11 // pred_region
          %s445 = ssub.s32 256, 256
          %446 = vsyncadd [#allocation10], %s445
          %s447 = sshll.u32 [#allocation11], 4
          %s448 = int_to_ptr.vmem [resolvable:$true] %s447
          %453 = dma.hbm_to_vmem [thread:$0]  %s7, 256, %s448, [#allocation10], 64, 64, 4
        $region36: #{tpu_custom_call.1} parent=11 // pred_fallthru
          _
        // Predicated region
        $region37: #{tpu_custom_call.1} parent=11 // pred_check
          %p454 = pneg %p232
        $region38: #{tpu_custom_call.1} parent=11 // pred_check_branch
          %456 = sbr.rel (%p454) target = $region40
        $region39: #{tpu_custom_call.1} parent=11 // pred_region
          _
        $region40: #{tpu_custom_call.1} parent=11 // pred_fallthru
          _
        // Predicated region
        $region41: #{tpu_custom_call.1} parent=11 // pred_check
          %p457 = pneg %p253
        $region42: #{tpu_custom_call.1} parent=11 // pred_check_branch
          %459 = sbr.rel (%p457) target = $region44
        $region43: #{tpu_custom_call.1} parent=11 // pred_region
          _
        $region44: #{tpu_custom_call.1} parent=11 // pred_fallthru
          _
        // Predicated region
        $region45: #{tpu_custom_call.1} parent=11 // pred_check
          %p460 = pneg %p274
        $region46: #{tpu_custom_call.1} parent=11 // pred_check_branch
          %462 = sbr.rel (%p460) target = $region48
        $region47: #{tpu_custom_call.1} parent=11 // pred_region
          _
        $region48: #{tpu_custom_call.1} parent=11 // pred_fallthru
          _
        // Predicated region
        $region49: #{tpu_custom_call.1} parent=11 // pred_check
          %p463 = pneg %p295
        $region50: #{tpu_custom_call.1} parent=11 // pred_check_branch
          %465 = sbr.rel (%p463) target = $region52
        $region51: #{tpu_custom_call.1} parent=11 // pred_region
          _
        $region52: #{tpu_custom_call.1} parent=11 // pred_fallthru
          _
      $region12: #{tpu_custom_call.1} parent=5 // pred_fallthru
        _
      %p466 = scmp.lt.s32.totalorder %s31, 2
      // Predicated region
      $region53: #{tpu_custom_call.1} parent=5 // pred_check
        %p467 = pneg %p466
      $region54: #{tpu_custom_call.1} parent=5 // pred_check_branch
        %469 = sbr.rel (%p467) target = $region56
      $region55: #{tpu_custom_call.1} parent=5 // pred_region
        // Predicated region
        $region57: #{tpu_custom_call.1} parent=55 // pred_check
          %p470 = pneg %p51
        $region58: #{tpu_custom_call.1} parent=55 // pred_check_branch
          %472 = sbr.rel (%p470) target = $region60
        $region59: #{tpu_custom_call.1} parent=55 // pred_region
          %s473 = smul.u32 4, %s31
          %p474 = scmp.lt.s32.totalorder %s473, 7
          %s475 = scalar_select %p474, %s473, 7
          %s476 = smul.addr %s475, 4
          %s477 = scalar_lea.vmem %s0, %s476
          %s478 = smul.u32 4, %s31
        $region60: #{tpu_custom_call.1} parent=55 // pred_fallthru
          _
        // Predicated region
        $region61: #{tpu_custom_call.1} parent=55 // pred_check
          %p479 = pneg %p79
        $region62: #{tpu_custom_call.1} parent=55 // pred_check_branch
          %481 = sbr.rel (%p479) target = $region64
        $region63: #{tpu_custom_call.1} parent=55 // pred_region
          %s482 = ssub.s32 1, %s31
          %s483 = smul.u32 4, %s482
          %p484 = scmp.lt.s32.totalorder %s483, 7
          %s485 = scalar_select %p484, %s483, 7
          %s486 = smul.addr %s485, 4
          %s487 = scalar_lea.vmem %s1, %s486
          %s488 = ssub.s32 1, %s31
          %s489 = smul.u32 4, %s488
        $region64: #{tpu_custom_call.1} parent=55 // pred_fallthru
          _
      $region56: #{tpu_custom_call.1} parent=5 // pred_fallthru
        _
      %p490 = scmp.le.s32.totalorder 1, %s31
      %p491 = scmp.lt.s32.totalorder %s31, 3
      %p492 = pnand %p490, %p491
      %p493 = pneg %p492
      // Predicated region
      $region65: #{tpu_custom_call.1} parent=5 // pred_check
        _
      $region66: #{tpu_custom_call.1} parent=5 // pred_check_branch
        %495 = sbr.rel (%p492) target = $region68
      $region67: #{tpu_custom_call.1} parent=5 // pred_region
        %s496 = ssub.s32 %s31, 1
        // Predicated region
        $region69: #{tpu_custom_call.1} parent=67 // pred_check
          %p497 = pneg %p127
        $region70: #{tpu_custom_call.1} parent=67 // pred_check_branch
          %499 = sbr.rel (%p497) target = $region72
        $region71: #{tpu_custom_call.1} parent=67 // pred_region
          %500 = dma.done [#allocation7], 256
        $region72: #{tpu_custom_call.1} parent=67 // pred_fallthru
          _
        // Predicated region
        $region73: #{tpu_custom_call.1} parent=67 // pred_check
          %p501 = pneg %p190
        $region74: #{tpu_custom_call.1} parent=67 // pred_check_branch
          %503 = sbr.rel (%p501) target = $region76
        $region75: #{tpu_custom_call.1} parent=67 // pred_region
          %504 = dma.done [#allocation10], 256
        $region76: #{tpu_custom_call.1} parent=67 // pred_fallthru
          _
        // Predicated region
        $region77: #{tpu_custom_call.1} parent=67 // pred_check
          %p505 = pneg %p211
        $region78: #{tpu_custom_call.1} parent=67 // pred_check_branch
          %507 = sbr.rel (%p505) target = $region80
        $region79: #{tpu_custom_call.1} parent=67 // pred_region
          %508 = dma.done [#allocation10], 256
        $region80: #{tpu_custom_call.1} parent=67 // pred_fallthru
          _
        %s509 = smul.u32 4, %s36
        %p510 = scmp.lt.s32.totalorder %s509, 7
        %s511 = scalar_select %p510, %s509, 7
        %s512 = smul.addr %s511, 4
        %s513 = scalar_lea.vmem %s0, %s512
        %p514 = pneg %p57
        %p515 = pneg %p54
        %s516 = ssub.s32 1, %s36
        %s517 = smul.u32 4, %s516
        %p518 = scmp.lt.s32.totalorder %s517, 7
        %s519 = scalar_select %p518, %s517, 7
        %s520 = smul.addr %s519, 4
        %s521 = scalar_lea.vmem %s1, %s520
        %p522 = pneg %p85
        %p523 = pneg %p82
        %p524 = pneg %p106
        %p525 = pneg %p103
        %p526 = pneg %p127
        %p527 = pneg %p124
        %p528 = pneg %p148
        %p529 = pneg %p145
        %p530 = pneg %p169
        %p531 = pneg %p166
        %p532 = pneg %p190
        %p533 = pneg %p187
        %p534 = pneg %p211
        %p535 = pneg %p208
        %p536 = pneg %p232
        %p537 = pneg %p229
        %p538 = pneg %p253
        %p539 = pneg %p250
        %p540 = pneg %p274
        %p541 = pneg %p271
        %p542 = pneg %p295
        %p543 = pneg %p292
        %p544 = pneg %p321
        %p545 = pneg %p318
        %s546 = sand.u32 %s308, 1
        %s547 = scalar_lea.sflag [#allocation8], %s546
        %s548 = sand.u32 %s308, 1
        %s549 = smul.addr %s548, 32
        %s550 = scalar_lea.vmem [#allocation12], %s549
        %p551 = pneg %p349
        %p552 = pneg %p346
        %s553 = sand.u32 %s36, 1
        %s554 = scalar_lea.sflag [#allocation14], %s553
        %s555 = sand.u32 %s336, 1
        %s556 = smul.addr %s555, 32
        %s557 = scalar_lea.vmem [#allocation13], %s556
        %p558 = pneg %p370
        %p559 = pneg %p367
        %p560 = pneg %p391
        %p561 = pneg %p388
        %s562 = smul.u32 4, %s36
        %p563 = scmp.lt.s32.totalorder %s562, 7
        %s564 = scalar_select %p563, %s562, 7
        %s565 = smul.addr %s564, 4
        %s566 = scalar_lea.vmem %s0, %s565
        %s567 = smul.u32 4, %s36
        %s568 = ssub.s32 1, %s36
        %s569 = smul.u32 4, %s568
        %p570 = scmp.lt.s32.totalorder %s569, 7
        %s571 = scalar_select %p570, %s569, 7
        %s572 = smul.addr %s571, 4
        %s573 = scalar_lea.vmem %s1, %s572
        %s574 = ssub.s32 1, %s36
        %s575 = smul.u32 4, %s574
        %s576 = smul.u32 4, %s36
        %s577 = ssub.s32 1, %s36
        %s578 = smul.u32 4, %s577
        %p580 = scmp.eq.s32.totalorder %s36, 0
        // Predicated region
        $region81: #{tpu_custom_call.1} parent=67 // pred_check
          %p581 = pneg %p580
        $region82: #{tpu_custom_call.1} parent=67 // pred_check_branch
          %583 = sbr.rel (%p581) target = $region84
        $region83: #{tpu_custom_call.1} parent=67 // pred_region
          %vm584 = vcmask 261120
          %585 = vst.msk [vmem:[#allocation2] sm:$0xff] %vm584, 0.0
          %586 = vst.msk [vmem:[#allocation3] sm:$0xff] %vm584, 0.0
          %587 = vst.msk [vmem:[#allocation4] sm:$0xff] %vm584, 0.0
          %588 = vst.msk [vmem:[#allocation5] sm:$0xff] %vm584, 0.0
        $region84: #{tpu_custom_call.1} parent=67 // pred_fallthru
          _
        %v589 = vld [vmem:[%s2] sm:$0xf]
        %v590 = vld [vmem:[%s2 + $0x4] sm:$0xf]
        %v591 = vld [vmem:[%s2 + $0x8] sm:$0xf]
        %v592 = vld [vmem:[%s2 + $0xc] sm:$0xf]
        %v593 = vld [vmem:[#allocation6] sm:$0xf]
        %v594 = vld [vmem:[#allocation6 + $0x4] sm:$0xf]
        %v595 = vld [vmem:[#allocation6 + $0x8] sm:$0xf]
        %v596 = vld [vmem:[#allocation6 + $0xc] sm:$0xf]
        %v597 = vld [vmem:[#allocation9] sm:$0xf]
        %v598 = vld [vmem:[#allocation9 + $0x4] sm:$0xf]
        %v599 = vld [vmem:[#allocation9 + $0x8] sm:$0xf]
        %v600 = vld [vmem:[#allocation9 + $0xc] sm:$0xf]
        %v601 = vld [vmem:[#allocation11] sm:$0xf]
        %v602 = vld [vmem:[#allocation11 + $0x4] sm:$0xf]
        %v603 = vld [vmem:[#allocation11 + $0x8] sm:$0xf]
        %v604 = vld [vmem:[#allocation11 + $0xc] sm:$0xf]
        %v605 = vld [vmem:[%s4] sm:$0x1]
        %v607 = vlaneseq
        %v608 = vshrl.u32 %v607, 7
        %v609 = vsub.s32 0, %v608
        %v610 = vrot.slane %v605, %v609
        %v612 = vld [vmem:[%s5] sm:$0x1]
        %v614 = vlaneseq
        %v615 = vshrl.u32 %v614, 7
        %v616 = vsub.s32 0, %v615
        %v617 = vrot.slane %v612, %v616
        %v619 = vld [vmem:[#allocation2] sm:$0xff]
        %v620 = vld [vmem:[#allocation3] sm:$0xff]
        %v621 = vld [vmem:[#allocation4] sm:$0xff]
        %v622 = vld [vmem:[#allocation5] sm:$0xff]
        %v623 = vld [vmem:[%s566] sm:$0xf]
        %s624 = scalar_lea.vmem %s573, 12
        %v625 = vld [vmem:[%s624] sm:$0xf]
        %v626 = vpack.c.bf16 %v619, %v619
        %v631 = vunpack.c.l.b16 %v597
        %v632 = vunpack.c.l.b16 %v598
        %v633 = vunpack.c.l.b16 %v599
        %v634 = vunpack.c.l.b16 %v600
        %v635 = vpack.c.b16 %v632, %v631
        %v636 = vpack.c.b16 %v634, %v633
        %vm639 = vcmask 261120
        %v641 = vsel %vm639, %v626, 0
        %643 = vmatprep.subr.bf16.mxu0 0
        %644 = vmatpush1.bf16.msra.mxu0 %v635
        %645 = vmatprep.subr.bf16.mxu0 0
        %646 = vmatpush1.bf16.msra.mxu0 %v636
        %647 = vmatprep.subr.bf16.mxu0 0
        %648 = vmatpush1.bf16.msra.mxu0 0
        %649 = vmatprep.subr.bf16.mxu0 0
        %650 = vmatpush1.bf16.msra.mxu0 0
        %651 = vmatprep.subr.bf16.mxu0 0
        %652 = vmatpush1.bf16.msra.mxu0 0
        %653 = vmatprep.subr.bf16.mxu0 0
        %654 = vmatpush1.bf16.msra.mxu0 0
        %655 = vmatprep.subr.bf16.mxu0 0
        %656 = vmatpush1.bf16.msra.mxu0 0
        %657 = vmatprep.subr.bf16.mxu0 0
        %658 = vmatpush1.bf16.msra.mxu0 0
        %659 = vmatprep.subr.bf16.mxu0 0
        %660 = vmatpush1.bf16.msra.mxu0 0
        %661 = vmatprep.subr.bf16.mxu0 0
        %662 = vmatpush1.bf16.msra.mxu0 0
        %663 = vmatprep.subr.bf16.mxu0 0
        %664 = vmatpush1.bf16.msra.mxu0 0
        %665 = vmatprep.subr.bf16.mxu0 0
        %666 = vmatpush1.bf16.msra.mxu0 0
        %667 = vmatprep.subr.bf16.mxu0 0
        %668 = vmatpush1.bf16.msra.mxu0 0
        %669 = vmatprep.subr.bf16.mxu0 0
        %670 = vmatpush1.bf16.msra.mxu0 0
        %671 = vmatprep.subr.bf16.mxu0 0
        %672 = vmatpush1.bf16.msra.mxu0 0
        %673 = vmatprep.subr.bf16.mxu0 0
        %674 = vmatpush1.bf16.msra.mxu0 0
        %675 = vmatprep.mubr.bf16.mxu0 0
        %676 = vmatmul.mubr.bf16.gmra.mrb[0].mxu0 %v641
        %v677 = vpop.f32.mrb[0].mxu0
        %v678 = vadd.f32 0.0, %v677
        %v679 = vpop.f32.mrb[0].mxu0
        %v680 = vpop.f32.mrb[0].mxu0
        %v681 = vpop.f32.mrb[0].mxu0
        %682 = vdwg.mxu0
        %v687 = vunpack.c.l.b16 %v589
        %v688 = vunpack.c.l.b16 %v590
        %v689 = vunpack.c.l.b16 %v591
        %v690 = vunpack.c.l.b16 %v592
        %v691 = vpack.c.b16 %v688, %v687
        %v692 = vpack.c.b16 %v690, %v689
        %v696 = vsel %vm639, %v623, 0
        %698 = vmatprep.subr.bf16.mxu0 0
        %699 = vmatpush1.bf16.msra.mxu0 %v691
        %700 = vmatprep.subr.bf16.mxu0 0
        %701 = vmatpush1.bf16.msra.mxu0 %v692
        %702 = vmatprep.subr.bf16.mxu0 0
        %703 = vmatpush1.bf16.msra.mxu0 0
        %704 = vmatprep.subr.bf16.mxu0 0
        %705 = vmatpush1.bf16.msra.mxu0 0
        %706 = vmatprep.subr.bf16.mxu0 0
        %707 = vmatpush1.bf16.msra.mxu0 0
        %708 = vmatprep.subr.bf16.mxu0 0
        %709 = vmatpush1.bf16.msra.mxu0 0
        %710 = vmatprep.subr.bf16.mxu0 0
        %711 = vmatpush1.bf16.msra.mxu0 0
        %712 = vmatprep.subr.bf16.mxu0 0
        %713 = vmatpush1.bf16.msra.mxu0 0
        %714 = vmatprep.subr.bf16.mxu0 0
        %715 = vmatpush1.bf16.msra.mxu0 0
        %716 = vmatprep.subr.bf16.mxu0 0
        %717 = vmatpush1.bf16.msra.mxu0 0
        %718 = vmatprep.subr.bf16.mxu0 0
        %719 = vmatpush1.bf16.msra.mxu0 0
        %720 = vmatprep.subr.bf16.mxu0 0
        %721 = vmatpush1.bf16.msra.mxu0 0
        %722 = vmatprep.subr.bf16.mxu0 0
        %723 = vmatpush1.bf16.msra.mxu0 0
        %724 = vmatprep.subr.bf16.mxu0 0
        %725 = vmatpush1.bf16.msra.mxu0 0
        %726 = vmatprep.subr.bf16.mxu0 0
        %727 = vmatpush1.bf16.msra.mxu0 0
        %728 = vmatprep.subr.bf16.mxu0 0
        %729 = vmatpush1.bf16.msra.mxu0 0
        %730 = vmatprep.mubr.bf16.mxu0 0
        %731 = vmatmul.mubr.bf16.gmra.mrb[0].mxu0 %v696
        %v732 = vpop.f32.mrb[0].mxu0
        %v733 = vadd.f32 %v678, %v732
        %v734 = vpop.f32.mrb[0].mxu0
        %v735 = vpop.f32.mrb[0].mxu0
        %v736 = vpop.f32.mrb[0].mxu0
        %737 = vdwg.mxu0
        %v738 = vadd.f32 %v733, %v610
        %v739 = vpack.c.bf16 %v621, %v621
        %v744 = vunpack.c.l.b16 %v601
        %v745 = vunpack.c.l.b16 %v602
        %v746 = vunpack.c.l.b16 %v603
        %v747 = vunpack.c.l.b16 %v604
        %v748 = vpack.c.b16 %v745, %v744
        %v749 = vpack.c.b16 %v747, %v746
        %v753 = vsel %vm639, %v739, 0
        %755 = vmatprep.subr.bf16.mxu0 0
        %756 = vmatpush1.bf16.msra.mxu0 %v748
        %757 = vmatprep.subr.bf16.mxu0 0
        %758 = vmatpush1.bf16.msra.mxu0 %v749
        %759 = vmatprep.subr.bf16.mxu0 0
        %760 = vmatpush1.bf16.msra.mxu0 0
        %761 = vmatprep.subr.bf16.mxu0 0
        %762 = vmatpush1.bf16.msra.mxu0 0
        %763 = vmatprep.subr.bf16.mxu0 0
        %764 = vmatpush1.bf16.msra.mxu0 0
        %765 = vmatprep.subr.bf16.mxu0 0
        %766 = vmatpush1.bf16.msra.mxu0 0
        %767 = vmatprep.subr.bf16.mxu0 0
        %768 = vmatpush1.bf16.msra.mxu0 0
        %769 = vmatprep.subr.bf16.mxu0 0
        %770 = vmatpush1.bf16.msra.mxu0 0
        %771 = vmatprep.subr.bf16.mxu0 0
        %772 = vmatpush1.bf16.msra.mxu0 0
        %773 = vmatprep.subr.bf16.mxu0 0
        %774 = vmatpush1.bf16.msra.mxu0 0
        %775 = vmatprep.subr.bf16.mxu0 0
        %776 = vmatpush1.bf16.msra.mxu0 0
        %777 = vmatprep.subr.bf16.mxu0 0
        %778 = vmatpush1.bf16.msra.mxu0 0
        %779 = vmatprep.subr.bf16.mxu0 0
        %780 = vmatpush1.bf16.msra.mxu0 0
        %781 = vmatprep.subr.bf16.mxu0 0
        %782 = vmatpush1.bf16.msra.mxu0 0
        %783 = vmatprep.subr.bf16.mxu0 0
        %784 = vmatpush1.bf16.msra.mxu0 0
        %785 = vmatprep.subr.bf16.mxu0 0
        %786 = vmatpush1.bf16.msra.mxu0 0
        %787 = vmatprep.mubr.bf16.mxu0 0
        %788 = vmatmul.mubr.bf16.gmra.mrb[0].mxu0 %v753
        %v789 = vpop.f32.mrb[0].mxu0
        %v790 = vadd.f32 0.0, %v789
        %v791 = vpop.f32.mrb[0].mxu0
        %v792 = vpop.f32.mrb[0].mxu0
        %v793 = vpop.f32.mrb[0].mxu0
        %794 = vdwg.mxu0
        %v799 = vunpack.c.l.b16 %v593
        %v800 = vunpack.c.l.b16 %v594
        %v801 = vunpack.c.l.b16 %v595
        %v802 = vunpack.c.l.b16 %v596
        %v803 = vpack.c.b16 %v800, %v799
        %v804 = vpack.c.b16 %v802, %v801
        %v808 = vsel %vm639, %v625, 0
        %810 = vmatprep.subr.bf16.mxu0 0
        %811 = vmatpush1.bf16.msra.mxu0 %v803
        %812 = vmatprep.subr.bf16.mxu0 0
        %813 = vmatpush1.bf16.msra.mxu0 %v804
        %814 = vmatprep.subr.bf16.mxu0 0
        %815 = vmatpush1.bf16.msra.mxu0 0
        %816 = vmatprep.subr.bf16.mxu0 0
        %817 = vmatpush1.bf16.msra.mxu0 0
        %818 = vmatprep.subr.bf16.mxu0 0
        %819 = vmatpush1.bf16.msra.mxu0 0
        %820 = vmatprep.subr.bf16.mxu0 0
        %821 = vmatpush1.bf16.msra.mxu0 0
        %822 = vmatprep.subr.bf16.mxu0 0
        %823 = vmatpush1.bf16.msra.mxu0 0
        %824 = vmatprep.subr.bf16.mxu0 0
        %825 = vmatpush1.bf16.msra.mxu0 0
        %826 = vmatprep.subr.bf16.mxu0 0
        %827 = vmatpush1.bf16.msra.mxu0 0
        %828 = vmatprep.subr.bf16.mxu0 0
        %829 = vmatpush1.bf16.msra.mxu0 0
        %830 = vmatprep.subr.bf16.mxu0 0
        %831 = vmatpush1.bf16.msra.mxu0 0
        %832 = vmatprep.subr.bf16.mxu0 0
        %833 = vmatpush1.bf16.msra.mxu0 0
        %834 = vmatprep.subr.bf16.mxu0 0
        %835 = vmatpush1.bf16.msra.mxu0 0
        %836 = vmatprep.subr.bf16.mxu0 0
        %837 = vmatpush1.bf16.msra.mxu0 0
        %838 = vmatprep.subr.bf16.mxu0 0
        %839 = vmatpush1.bf16.msra.mxu0 0
        %840 = vmatprep.subr.bf16.mxu0 0
        %841 = vmatpush1.bf16.msra.mxu0 0
        %842 = vmatprep.mubr.bf16.mxu0 0
        %843 = vmatmul.mubr.bf16.gmra.mrb[0].mxu0 %v808
        %v844 = vpop.f32.mrb[0].mxu0
        %v845 = vadd.f32 %v790, %v844
        %v846 = vpop.f32.mrb[0].mxu0
        %v847 = vpop.f32.mrb[0].mxu0
        %v848 = vpop.f32.mrb[0].mxu0
        %849 = vdwg.mxu0
        %v850 = vadd.f32 %v845, %v617
        %v851 = vxor.u32 %v738, 2147483648
        %v852 = vmul.f32 %v851, 1.442695
        %v853 = vpow.pop %v852
        %v854 = vadd.f32 %v853, 1.0
        %v855 = vrcp.pop %v854
        %v856 = vmul.f32 1.0, %v855
        %v857 = vtanh.pop %v738
        %859 = vrot.lane.b32.xlu0 %v620, 32
        %v860 = vpop.permute.xlu0 %859
        %v862 = vmul.f32 %v856, %v860
        %864 = vrot.lane.b32.xlu0 %v857, 32
        %v865 = vpop.permute.xlu0 %864
        %v867 = vmul.f32 %v856, %v865
        %869 = vrot.lane.b32.xlu0 %v867, 32
        %v870 = vpop.permute.xlu0 %869
        %v872 = vadd.f32 %v862, %v870
        %v873 = vtanh.pop %v872
        %875 = vrot.lane.b32.xlu0 %v873, 32
        %v876 = vpop.permute.xlu0 %875
        %v878 = vmul.f32 %v856, %v876
        %v879 = vxor.u32 %v850, 2147483648
        %v880 = vmul.f32 %v879, 1.442695
        %v881 = vpow.pop %v880
        %v882 = vadd.f32 %v881, 1.0
        %v883 = vrcp.pop %v882
        %v884 = vmul.f32 1.0, %v883
        %v885 = vtanh.pop %v850
        %887 = vrot.lane.b32.xlu0 %v622, 32
        %v888 = vpop.permute.xlu0 %887
        %v890 = vmul.f32 %v884, %v888
        %892 = vrot.lane.b32.xlu0 %v885, 32
        %v893 = vpop.permute.xlu0 %892
        %v895 = vmul.f32 %v884, %v893
        %897 = vrot.lane.b32.xlu0 %v895, 32
        %v898 = vpop.permute.xlu0 %897
        %v900 = vadd.f32 %v890, %v898
        %v901 = vtanh.pop %v900
        %903 = vrot.lane.b32.xlu0 %v901, 32
        %v904 = vpop.permute.xlu0 %903
        %v906 = vmul.f32 %v884, %v904
        %908 = vrot.lane.b32.xlu0 %v878, 64
        %v909 = vpop.permute.xlu0 %908
        %911 = vst.msk [vmem:[%s550] sm:$0xff] %vm639, %v909
        %913 = vrot.lane.b32.xlu0 %v906, 64
        %v914 = vpop.permute.xlu0 %913
        %s916 = scalar_lea.vmem %s557, 24 [#allocation13]
        %917 = vst.msk [vmem:[%s916] sm:$0xff] %vm639, %v914
        %s918 = scalar_lea.vmem %s566, 4
        %v919 = vld [vmem:[%s918] sm:$0xf]
        %s920 = scalar_lea.vmem %s573, 8
        %v921 = vld [vmem:[%s920] sm:$0xf]
        %v922 = vpack.c.bf16 %v878, %v878
        %924 = vrot.lane.b32.xlu0 %v922, 64
        %v925 = vpop.permute.xlu0 %924
        %v927 = vsel %vm639, %v925, 0
        %929 = vmatprep.subr.bf16.mxu0 0
        %930 = vmatpush1.bf16.msra.mxu0 %v635
        %931 = vmatprep.subr.bf16.mxu0 0
        %932 = vmatpush1.bf16.msra.mxu0 %v636
        %933 = vmatprep.subr.bf16.mxu0 0
        %934 = vmatpush1.bf16.msra.mxu0 0
        %935 = vmatprep.subr.bf16.mxu0 0
        %936 = vmatpush1.bf16.msra.mxu0 0
        %937 = vmatprep.subr.bf16.mxu0 0
        %938 = vmatpush1.bf16.msra.mxu0 0
        %939 = vmatprep.subr.bf16.mxu0 0
        %940 = vmatpush1.bf16.msra.mxu0 0
        %941 = vmatprep.subr.bf16.mxu0 0
        %942 = vmatpush1.bf16.msra.mxu0 0
        %943 = vmatprep.subr.bf16.mxu0 0
        %944 = vmatpush1.bf16.msra.mxu0 0
        %945 = vmatprep.subr.bf16.mxu0 0
        %946 = vmatpush1.bf16.msra.mxu0 0
        %947 = vmatprep.subr.bf16.mxu0 0
        %948 = vmatpush1.bf16.msra.mxu0 0
        %949 = vmatprep.subr.bf16.mxu0 0
        %950 = vmatpush1.bf16.msra.mxu0 0
        %951 = vmatprep.subr.bf16.mxu0 0
        %952 = vmatpush1.bf16.msra.mxu0 0
        %953 = vmatprep.subr.bf16.mxu0 0
        %954 = vmatpush1.bf16.msra.mxu0 0
        %955 = vmatprep.subr.bf16.mxu0 0
        %956 = vmatpush1.bf16.msra.mxu0 0
        %957 = vmatprep.subr.bf16.mxu0 0
        %958 = vmatpush1.bf16.msra.mxu0 0
        %959 = vmatprep.subr.bf16.mxu0 0
        %960 = vmatpush1.bf16.msra.mxu0 0
        %961 = vmatprep.mubr.bf16.mxu0 0
        %962 = vmatmul.mubr.bf16.gmra.mrb[0].mxu0 %v927
        %v963 = vpop.f32.mrb[0].mxu0
        %v964 = vadd.f32 0.0, %v963
        %v965 = vpop.f32.mrb[0].mxu0
        %v966 = vpop.f32.mrb[0].mxu0
        %v967 = vpop.f32.mrb[0].mxu0
        %968 = vdwg.mxu0
        %v970 = vsel %vm639, %v919, 0
        %972 = vmatprep.subr.bf16.mxu0 0
        %973 = vmatpush1.bf16.msra.mxu0 %v691
        %974 = vmatprep.subr.bf16.mxu0 0
        %975 = vmatpush1.bf16.msra.mxu0 %v692
        %976 = vmatprep.subr.bf16.mxu0 0
        %977 = vmatpush1.bf16.msra.mxu0 0
        %978 = vmatprep.subr.bf16.mxu0 0
        %979 = vmatpush1.bf16.msra.mxu0 0
        %980 = vmatprep.subr.bf16.mxu0 0
        %981 = vmatpush1.bf16.msra.mxu0 0
        %982 = vmatprep.subr.bf16.mxu0 0
        %983 = vmatpush1.bf16.msra.mxu0 0
        %984 = vmatprep.subr.bf16.mxu0 0
        %985 = vmatpush1.bf16.msra.mxu0 0
        %986 = vmatprep.subr.bf16.mxu0 0
        %987 = vmatpush1.bf16.msra.mxu0 0
        %988 = vmatprep.subr.bf16.mxu0 0
        %989 = vmatpush1.bf16.msra.mxu0 0
        %990 = vmatprep.subr.bf16.mxu0 0
        %991 = vmatpush1.bf16.msra.mxu0 0
        %992 = vmatprep.subr.bf16.mxu0 0
        %993 = vmatpush1.bf16.msra.mxu0 0
        %994 = vmatprep.subr.bf16.mxu0 0
        %995 = vmatpush1.bf16.msra.mxu0 0
        %996 = vmatprep.subr.bf16.mxu0 0
        %997 = vmatpush1.bf16.msra.mxu0 0
        %998 = vmatprep.subr.bf16.mxu0 0
        %999 = vmatpush1.bf16.msra.mxu0 0
        %1000 = vmatprep.subr.bf16.mxu0 0
        %1001 = vmatpush1.bf16.msra.mxu0 0
        %1002 = vmatprep.subr.bf16.mxu0 0
        %1003 = vmatpush1.bf16.msra.mxu0 0
        %1004 = vmatprep.mubr.bf16.mxu0 0
        %1005 = vmatmul.mubr.bf16.gmra.mrb[0].mxu0 %v970
        %v1006 = vpop.f32.mrb[0].mxu0
        %v1007 = vadd.f32 %v964, %v1006
        %v1008 = vpop.f32.mrb[0].mxu0
        %v1009 = vpop.f32.mrb[0].mxu0
        %v1010 = vpop.f32.mrb[0].mxu0
        %1011 = vdwg.mxu0
        %v1012 = vadd.f32 %v1007, %v610
        %v1013 = vpack.c.bf16 %v906, %v906
        %1015 = vrot.lane.b32.xlu0 %v1013, 64
        %v1016 = vpop.permute.xlu0 %1015
        %v1018 = vsel %vm639, %v1016, 0
        %1020 = vmatprep.subr.bf16.mxu0 0
        %1021 = vmatpush1.bf16.msra.mxu0 %v748
        %1022 = vmatprep.subr.bf16.mxu0 0
        %1023 = vmatpush1.bf16.msra.mxu0 %v749
        %1024 = vmatprep.subr.bf16.mxu0 0
        %1025 = vmatpush1.bf16.msra.mxu0 0
        %1026 = vmatprep.subr.bf16.mxu0 0
        %1027 = vmatpush1.bf16.msra.mxu0 0
        %1028 = vmatprep.subr.bf16.mxu0 0
        %1029 = vmatpush1.bf16.msra.mxu0 0
        %1030 = vmatprep.subr.bf16.mxu0 0
        %1031 = vmatpush1.bf16.msra.mxu0 0
        %1032 = vmatprep.subr.bf16.mxu0 0
        %1033 = vmatpush1.bf16.msra.mxu0 0
        %1034 = vmatprep.subr.bf16.mxu0 0
        %1035 = vmatpush1.bf16.msra.mxu0 0
        %1036 = vmatprep.subr.bf16.mxu0 0
        %1037 = vmatpush1.bf16.msra.mxu0 0
        %1038 = vmatprep.subr.bf16.mxu0 0
        %1039 = vmatpush1.bf16.msra.mxu0 0
        %1040 = vmatprep.subr.bf16.mxu0 0
        %1041 = vmatpush1.bf16.msra.mxu0 0
        %1042 = vmatprep.subr.bf16.mxu0 0
        %1043 = vmatpush1.bf16.msra.mxu0 0
        %1044 = vmatprep.subr.bf16.mxu0 0
        %1045 = vmatpush1.bf16.msra.mxu0 0
        %1046 = vmatprep.subr.bf16.mxu0 0
        %1047 = vmatpush1.bf16.msra.mxu0 0
        %1048 = vmatprep.subr.bf16.mxu0 0
        %1049 = vmatpush1.bf16.msra.mxu0 0
        %1050 = vmatprep.subr.bf16.mxu0 0
        %1051 = vmatpush1.bf16.msra.mxu0 0
        %1052 = vmatprep.mubr.bf16.mxu0 0
        %1053 = vmatmul.mubr.bf16.gmra.mrb[0].mxu0 %v1018
        %v1054 = vpop.f32.mrb[0].mxu0
        %v1055 = vadd.f32 0.0, %v1054
        %v1056 = vpop.f32.mrb[0].mxu0
        %v1057 = vpop.f32.mrb[0].mxu0
        %v1058 = vpop.f32.mrb[0].mxu0
        %1059 = vdwg.mxu0
        %v1061 = vsel %vm639, %v921, 0
        %1063 = vmatprep.subr.bf16.mxu0 0
        %1064 = vmatpush1.bf16.msra.mxu0 %v803
        %1065 = vmatprep.subr.bf16.mxu0 0
        %1066 = vmatpush1.bf16.msra.mxu0 %v804
        %1067 = vmatprep.subr.bf16.mxu0 0
        %1068 = vmatpush1.bf16.msra.mxu0 0
        %1069 = vmatprep.subr.bf16.mxu0 0
        %1070 = vmatpush1.bf16.msra.mxu0 0
        %1071 = vmatprep.subr.bf16.mxu0 0
        %1072 = vmatpush1.bf16.msra.mxu0 0
        %1073 = vmatprep.subr.bf16.mxu0 0
        %1074 = vmatpush1.bf16.msra.mxu0 0
        %1075 = vmatprep.subr.bf16.mxu0 0
        %1076 = vmatpush1.bf16.msra.mxu0 0
        %1077 = vmatprep.subr.bf16.mxu0 0
        %1078 = vmatpush1.bf16.msra.mxu0 0
        %1079 = vmatprep.subr.bf16.mxu0 0
        %1080 = vmatpush1.bf16.msra.mxu0 0
        %1081 = vmatprep.subr.bf16.mxu0 0
        %1082 = vmatpush1.bf16.msra.mxu0 0
        %1083 = vmatprep.subr.bf16.mxu0 0
        %1084 = vmatpush1.bf16.msra.mxu0 0
        %1085 = vmatprep.subr.bf16.mxu0 0
        %1086 = vmatpush1.bf16.msra.mxu0 0
        %1087 = vmatprep.subr.bf16.mxu0 0
        %1088 = vmatpush1.bf16.msra.mxu0 0
        %1089 = vmatprep.subr.bf16.mxu0 0
        %1090 = vmatpush1.bf16.msra.mxu0 0
        %1091 = vmatprep.subr.bf16.mxu0 0
        %1092 = vmatpush1.bf16.msra.mxu0 0
        %1093 = vmatprep.subr.bf16.mxu0 0
        %1094 = vmatpush1.bf16.msra.mxu0 0
        %1095 = vmatprep.mubr.bf16.mxu0 0
        %1096 = vmatmul.mubr.bf16.gmra.mrb[0].mxu0 %v1061
        %v1097 = vpop.f32.mrb[0].mxu0
        %v1098 = vadd.f32 %v1055, %v1097
        %v1099 = vpop.f32.mrb[0].mxu0
        %v1100 = vpop.f32.mrb[0].mxu0
        %v1101 = vpop.f32.mrb[0].mxu0
        %1102 = vdwg.mxu0
        %v1103 = vadd.f32 %v1098, %v617
        %v1104 = vxor.u32 %v1012, 2147483648
        %v1105 = vmul.f32 %v1104, 1.442695
        %v1106 = vpow.pop %v1105
        %v1107 = vadd.f32 %v1106, 1.0
        %v1108 = vrcp.pop %v1107
        %v1109 = vmul.f32 1.0, %v1108
        %v1110 = vtanh.pop %v1012
        %v1111 = vmul.f32 %v1109, %v872
        %1113 = vrot.lane.b32.xlu0 %v1110, 32
        %v1114 = vpop.permute.xlu0 %1113
        %v1116 = vmul.f32 %v1109, %v1114
        %1118 = vrot.lane.b32.xlu0 %v1116, 32
        %v1119 = vpop.permute.xlu0 %1118
        %v1121 = vadd.f32 %v1111, %v1119
        %v1122 = vtanh.pop %v1121
        %1124 = vrot.lane.b32.xlu0 %v1122, 32
        %v1125 = vpop.permute.xlu0 %1124
        %v1127 = vmul.f32 %v1109, %v1125
        %v1128 = vxor.u32 %v1103, 2147483648
        %v1129 = vmul.f32 %v1128, 1.442695
        %v1130 = vpow.pop %v1129
        %v1131 = vadd.f32 %v1130, 1.0
        %v1132 = vrcp.pop %v1131
        %v1133 = vmul.f32 1.0, %v1132
        %v1134 = vtanh.pop %v1103
        %v1135 = vmul.f32 %v1133, %v900
        %1137 = vrot.lane.b32.xlu0 %v1134, 32
        %v1138 = vpop.permute.xlu0 %1137
        %v1140 = vmul.f32 %v1133, %v1138
        %1142 = vrot.lane.b32.xlu0 %v1140, 32
        %v1143 = vpop.permute.xlu0 %1142
        %v1145 = vadd.f32 %v1135, %v1143
        %v1146 = vtanh.pop %v1145
        %1148 = vrot.lane.b32.xlu0 %v1146, 32
        %v1149 = vpop.permute.xlu0 %1148
        %v1151 = vmul.f32 %v1133, %v1149
        %1153 = vrot.lane.b32.xlu0 %v1127, 64
        %v1154 = vpop.permute.xlu0 %1153
        %s1156 = scalar_lea.vmem %s550, 8 [#allocation12]
        %1157 = vst.msk [vmem:[%s1156] sm:$0xff] %vm639, %v1154
        %1159 = vrot.lane.b32.xlu0 %v1151, 64
        %v1160 = vpop.permute.xlu0 %1159
        %s1162 = scalar_lea.vmem %s557, 16 [#allocation13]
        %1163 = vst.msk [vmem:[%s1162] sm:$0xff] %vm639, %v1160
        %s1164 = scalar_lea.vmem %s566, 8
        %v1165 = vld [vmem:[%s1164] sm:$0xf]
        %s1166 = scalar_lea.vmem %s573, 4
        %v1167 = vld [vmem:[%s1166] sm:$0xf]
        %v1168 = vpack.c.bf16 %v1127, %v1127
        %1170 = vrot.lane.b32.xlu0 %v1168, 64
        %v1171 = vpop.permute.xlu0 %1170
        %v1173 = vsel %vm639, %v1171, 0
        %1175 = vmatprep.subr.bf16.mxu0 0
        %1176 = vmatpush1.bf16.msra.mxu0 %v635
        %1177 = vmatprep.subr.bf16.mxu0 0
        %1178 = vmatpush1.bf16.msra.mxu0 %v636
        %1179 = vmatprep.subr.bf16.mxu0 0
        %1180 = vmatpush1.bf16.msra.mxu0 0
        %1181 = vmatprep.subr.bf16.mxu0 0
        %1182 = vmatpush1.bf16.msra.mxu0 0
        %1183 = vmatprep.subr.bf16.mxu0 0
        %1184 = vmatpush1.bf16.msra.mxu0 0
        %1185 = vmatprep.subr.bf16.mxu0 0
        %1186 = vmatpush1.bf16.msra.mxu0 0
        %1187 = vmatprep.subr.bf16.mxu0 0
        %1188 = vmatpush1.bf16.msra.mxu0 0
        %1189 = vmatprep.subr.bf16.mxu0 0
        %1190 = vmatpush1.bf16.msra.mxu0 0
        %1191 = vmatprep.subr.bf16.mxu0 0
        %1192 = vmatpush1.bf16.msra.mxu0 0
        %1193 = vmatprep.subr.bf16.mxu0 0
        %1194 = vmatpush1.bf16.msra.mxu0 0
        %1195 = vmatprep.subr.bf16.mxu0 0
        %1196 = vmatpush1.bf16.msra.mxu0 0
        %1197 = vmatprep.subr.bf16.mxu0 0
        %1198 = vmatpush1.bf16.msra.mxu0 0
        %1199 = vmatprep.subr.bf16.mxu0 0
        %1200 = vmatpush1.bf16.msra.mxu0 0
        %1201 = vmatprep.subr.bf16.mxu0 0
        %1202 = vmatpush1.bf16.msra.mxu0 0
        %1203 = vmatprep.subr.bf16.mxu0 0
        %1204 = vmatpush1.bf16.msra.mxu0 0
        %1205 = vmatprep.subr.bf16.mxu0 0
        %1206 = vmatpush1.bf16.msra.mxu0 0
        %1207 = vmatprep.mubr.bf16.mxu0 0
        %1208 = vmatmul.mubr.bf16.gmra.mrb[0].mxu0 %v1173
        %v1209 = vpop.f32.mrb[0].mxu0
        %v1210 = vadd.f32 0.0, %v1209
        %v1211 = vpop.f32.mrb[0].mxu0
        %v1212 = vpop.f32.mrb[0].mxu0
        %v1213 = vpop.f32.mrb[0].mxu0
        %1214 = vdwg.mxu0
        %v1216 = vsel %vm639, %v1165, 0
        %1218 = vmatprep.subr.bf16.mxu0 0
        %1219 = vmatpush1.bf16.msra.mxu0 %v691
        %1220 = vmatprep.subr.bf16.mxu0 0
        %1221 = vmatpush1.bf16.msra.mxu0 %v692
        %1222 = vmatprep.subr.bf16.mxu0 0
        %1223 = vmatpush1.bf16.msra.mxu0 0
        %1224 = vmatprep.subr.bf16.mxu0 0
        %1225 = vmatpush1.bf16.msra.mxu0 0
        %1226 = vmatprep.subr.bf16.mxu0 0
        %1227 = vmatpush1.bf16.msra.mxu0 0
        %1228 = vmatprep.subr.bf16.mxu0 0
        %1229 = vmatpush1.bf16.msra.mxu0 0
        %1230 = vmatprep.subr.bf16.mxu0 0
        %1231 = vmatpush1.bf16.msra.mxu0 0
        %1232 = vmatprep.subr.bf16.mxu0 0
        %1233 = vmatpush1.bf16.msra.mxu0 0
        %1234 = vmatprep.subr.bf16.mxu0 0
        %1235 = vmatpush1.bf16.msra.mxu0 0
        %1236 = vmatprep.subr.bf16.mxu0 0
        %1237 = vmatpush1.bf16.msra.mxu0 0
        %1238 = vmatprep.subr.bf16.mxu0 0
        %1239 = vmatpush1.bf16.msra.mxu0 0
        %1240 = vmatprep.subr.bf16.mxu0 0
        %1241 = vmatpush1.bf16.msra.mxu0 0
        %1242 = vmatprep.subr.bf16.mxu0 0
        %1243 = vmatpush1.bf16.msra.mxu0 0
        %1244 = vmatprep.subr.bf16.mxu0 0
        %1245 = vmatpush1.bf16.msra.mxu0 0
        %1246 = vmatprep.subr.bf16.mxu0 0
        %1247 = vmatpush1.bf16.msra.mxu0 0
        %1248 = vmatprep.subr.bf16.mxu0 0
        %1249 = vmatpush1.bf16.msra.mxu0 0
        %1250 = vmatprep.mubr.bf16.mxu0 0
        %1251 = vmatmul.mubr.bf16.gmra.mrb[0].mxu0 %v1216
        %v1252 = vpop.f32.mrb[0].mxu0
        %v1253 = vadd.f32 %v1210, %v1252
        %v1254 = vpop.f32.mrb[0].mxu0
        %v1255 = vpop.f32.mrb[0].mxu0
        %v1256 = vpop.f32.mrb[0].mxu0
        %1257 = vdwg.mxu0
        %v1258 = vadd.f32 %v1253, %v610
        %v1259 = vpack.c.bf16 %v1151, %v1151
        %1261 = vrot.lane.b32.xlu0 %v1259, 64
        %v1262 = vpop.permute.xlu0 %1261
        %v1264 = vsel %vm639, %v1262, 0
        %1266 = vmatprep.subr.bf16.mxu0 0
        %1267 = vmatpush1.bf16.msra.mxu0 %v748
        %1268 = vmatprep.subr.bf16.mxu0 0
        %1269 = vmatpush1.bf16.msra.mxu0 %v749
        %1270 = vmatprep.subr.bf16.mxu0 0
        %1271 = vmatpush1.bf16.msra.mxu0 0
        %1272 = vmatprep.subr.bf16.mxu0 0
        %1273 = vmatpush1.bf16.msra.mxu0 0
        %1274 = vmatprep.subr.bf16.mxu0 0
        %1275 = vmatpush1.bf16.msra.mxu0 0
        %1276 = vmatprep.subr.bf16.mxu0 0
        %1277 = vmatpush1.bf16.msra.mxu0 0
        %1278 = vmatprep.subr.bf16.mxu0 0
        %1279 = vmatpush1.bf16.msra.mxu0 0
        %1280 = vmatprep.subr.bf16.mxu0 0
        %1281 = vmatpush1.bf16.msra.mxu0 0
        %1282 = vmatprep.subr.bf16.mxu0 0
        %1283 = vmatpush1.bf16.msra.mxu0 0
        %1284 = vmatprep.subr.bf16.mxu0 0
        %1285 = vmatpush1.bf16.msra.mxu0 0
        %1286 = vmatprep.subr.bf16.mxu0 0
        %1287 = vmatpush1.bf16.msra.mxu0 0
        %1288 = vmatprep.subr.bf16.mxu0 0
        %1289 = vmatpush1.bf16.msra.mxu0 0
        %1290 = vmatprep.subr.bf16.mxu0 0
        %1291 = vmatpush1.bf16.msra.mxu0 0
        %1292 = vmatprep.subr.bf16.mxu0 0
        %1293 = vmatpush1.bf16.msra.mxu0 0
        %1294 = vmatprep.subr.bf16.mxu0 0
        %1295 = vmatpush1.bf16.msra.mxu0 0
        %1296 = vmatprep.subr.bf16.mxu0 0
        %1297 = vmatpush1.bf16.msra.mxu0 0
        %1298 = vmatprep.mubr.bf16.mxu0 0
        %1299 = vmatmul.mubr.bf16.gmra.mrb[0].mxu0 %v1264
        %v1300 = vpop.f32.mrb[0].mxu0
        %v1301 = vadd.f32 0.0, %v1300
        %v1302 = vpop.f32.mrb[0].mxu0
        %v1303 = vpop.f32.mrb[0].mxu0
        %v1304 = vpop.f32.mrb[0].mxu0
        %1305 = vdwg.mxu0
        %v1307 = vsel %vm639, %v1167, 0
        %1309 = vmatprep.subr.bf16.mxu0 0
        %1310 = vmatpush1.bf16.msra.mxu0 %v803
        %1311 = vmatprep.subr.bf16.mxu0 0
        %1312 = vmatpush1.bf16.msra.mxu0 %v804
        %1313 = vmatprep.subr.bf16.mxu0 0
        %1314 = vmatpush1.bf16.msra.mxu0 0
        %1315 = vmatprep.subr.bf16.mxu0 0
        %1316 = vmatpush1.bf16.msra.mxu0 0
        %1317 = vmatprep.subr.bf16.mxu0 0
        %1318 = vmatpush1.bf16.msra.mxu0 0
        %1319 = vmatprep.subr.bf16.mxu0 0
        %1320 = vmatpush1.bf16.msra.mxu0 0
        %1321 = vmatprep.subr.bf16.mxu0 0
        %1322 = vmatpush1.bf16.msra.mxu0 0
        %1323 = vmatprep.subr.bf16.mxu0 0
        %1324 = vmatpush1.bf16.msra.mxu0 0
        %1325 = vmatprep.subr.bf16.mxu0 0
        %1326 = vmatpush1.bf16.msra.mxu0 0
        %1327 = vmatprep.subr.bf16.mxu0 0
        %1328 = vmatpush1.bf16.msra.mxu0 0
        %1329 = vmatprep.subr.bf16.mxu0 0
        %1330 = vmatpush1.bf16.msra.mxu0 0
        %1331 = vmatprep.subr.bf16.mxu0 0
        %1332 = vmatpush1.bf16.msra.mxu0 0
        %1333 = vmatprep.subr.bf16.mxu0 0
        %1334 = vmatpush1.bf16.msra.mxu0 0
        %1335 = vmatprep.subr.bf16.mxu0 0
        %1336 = vmatpush1.bf16.msra.mxu0 0
        %1337 = vmatprep.subr.bf16.mxu0 0
        %1338 = vmatpush1.bf16.msra.mxu0 0
        %1339 = vmatprep.subr.bf16.mxu0 0
        %1340 = vmatpush1.bf16.msra.mxu0 0
        %1341 = vmatprep.mubr.bf16.mxu0 0
        %1342 = vmatmul.mubr.bf16.gmra.mrb[0].mxu0 %v1307
        %v1343 = vpop.f32.mrb[0].mxu0
        %v1344 = vadd.f32 %v1301, %v1343
        %v1345 = vpop.f32.mrb[0].mxu0
        %v1346 = vpop.f32.mrb[0].mxu0
        %v1347 = vpop.f32.mrb[0].mxu0
        %1348 = vdwg.mxu0
        %v1349 = vadd.f32 %v1344, %v617
        %v1350 = vxor.u32 %v1258, 2147483648
        %v1351 = vmul.f32 %v1350, 1.442695
        %v1352 = vpow.pop %v1351
        %v1353 = vadd.f32 %v1352, 1.0
        %v1354 = vrcp.pop %v1353
        %v1355 = vmul.f32 1.0, %v1354
        %v1356 = vtanh.pop %v1258
        %v1357 = vmul.f32 %v1355, %v1121
        %1359 = vrot.lane.b32.xlu0 %v1356, 32
        %v1360 = vpop.permute.xlu0 %1359
        %v1362 = vmul.f32 %v1355, %v1360
        %1364 = vrot.lane.b32.xlu0 %v1362, 32
        %v1365 = vpop.permute.xlu0 %1364
        %v1367 = vadd.f32 %v1357, %v1365
        %v1368 = vtanh.pop %v1367
        %1370 = vrot.lane.b32.xlu0 %v1368, 32
        %v1371 = vpop.permute.xlu0 %1370
        %v1373 = vmul.f32 %v1355, %v1371
        %v1374 = vxor.u32 %v1349, 2147483648
        %v1375 = vmul.f32 %v1374, 1.442695
        %v1376 = vpow.pop %v1375
        %v1377 = vadd.f32 %v1376, 1.0
        %v1378 = vrcp.pop %v1377
        %v1379 = vmul.f32 1.0, %v1378
        %v1380 = vtanh.pop %v1349
        %v1381 = vmul.f32 %v1379, %v1145
        %1383 = vrot.lane.b32.xlu0 %v1380, 32
        %v1384 = vpop.permute.xlu0 %1383
        %v1386 = vmul.f32 %v1379, %v1384
        %1388 = vrot.lane.b32.xlu0 %v1386, 32
        %v1389 = vpop.permute.xlu0 %1388
        %v1391 = vadd.f32 %v1381, %v1389
        %v1392 = vtanh.pop %v1391
        %1394 = vrot.lane.b32.xlu0 %v1392, 32
        %v1395 = vpop.permute.xlu0 %1394
        %v1397 = vmul.f32 %v1379, %v1395
        %1399 = vrot.lane.b32.xlu0 %v1373, 64
        %v1400 = vpop.permute.xlu0 %1399
        %s1402 = scalar_lea.vmem %s550, 16 [#allocation12]
        %1403 = vst.msk [vmem:[%s1402] sm:$0xff] %vm639, %v1400
        %1405 = vrot.lane.b32.xlu0 %v1397, 64
        %v1406 = vpop.permute.xlu0 %1405
        %s1408 = scalar_lea.vmem %s557, 8 [#allocation13]
        %1409 = vst.msk [vmem:[%s1408] sm:$0xff] %vm639, %v1406
        %s1410 = scalar_lea.vmem %s566, 12
        %v1411 = vld [vmem:[%s1410] sm:$0xf]
        %v1412 = vld [vmem:[%s573] sm:$0xf]
        %v1413 = vpack.c.bf16 %v1373, %v1373
        %1415 = vrot.lane.b32.xlu0 %v1413, 64
        %v1416 = vpop.permute.xlu0 %1415
        %v1418 = vsel %vm639, %v1416, 0
        %1420 = vmatprep.subr.bf16.mxu0 0
        %1421 = vmatpush1.bf16.msra.mxu0 %v635
        %1422 = vmatprep.subr.bf16.mxu0 0
        %1423 = vmatpush1.bf16.msra.mxu0 %v636
        %1424 = vmatprep.subr.bf16.mxu0 0
        %1425 = vmatpush1.bf16.msra.mxu0 0
        %1426 = vmatprep.subr.bf16.mxu0 0
        %1427 = vmatpush1.bf16.msra.mxu0 0
        %1428 = vmatprep.subr.bf16.mxu0 0
        %1429 = vmatpush1.bf16.msra.mxu0 0
        %1430 = vmatprep.subr.bf16.mxu0 0
        %1431 = vmatpush1.bf16.msra.mxu0 0
        %1432 = vmatprep.subr.bf16.mxu0 0
        %1433 = vmatpush1.bf16.msra.mxu0 0
        %1434 = vmatprep.subr.bf16.mxu0 0
        %1435 = vmatpush1.bf16.msra.mxu0 0
        %1436 = vmatprep.subr.bf16.mxu0 0
        %1437 = vmatpush1.bf16.msra.mxu0 0
        %1438 = vmatprep.subr.bf16.mxu0 0
        %1439 = vmatpush1.bf16.msra.mxu0 0
        %1440 = vmatprep.subr.bf16.mxu0 0
        %1441 = vmatpush1.bf16.msra.mxu0 0
        %1442 = vmatprep.subr.bf16.mxu0 0
        %1443 = vmatpush1.bf16.msra.mxu0 0
        %1444 = vmatprep.subr.bf16.mxu0 0
        %1445 = vmatpush1.bf16.msra.mxu0 0
        %1446 = vmatprep.subr.bf16.mxu0 0
        %1447 = vmatpush1.bf16.msra.mxu0 0
        %1448 = vmatprep.subr.bf16.mxu0 0
        %1449 = vmatpush1.bf16.msra.mxu0 0
        %1450 = vmatprep.subr.bf16.mxu0 0
        %1451 = vmatpush1.bf16.msra.mxu0 0
        %1452 = vmatprep.mubr.bf16.mxu0 0
        %1453 = vmatmul.mubr.bf16.gmra.mrb[0].mxu0 %v1418
        %v1454 = vpop.f32.mrb[0].mxu0
        %v1455 = vadd.f32 0.0, %v1454
        %v1456 = vpop.f32.mrb[0].mxu0
        %v1457 = vpop.f32.mrb[0].mxu0
        %v1458 = vpop.f32.mrb[0].mxu0
        %1459 = vdwg.mxu0
        %v1461 = vsel %vm639, %v1411, 0
        %1463 = vmatprep.subr.bf16.mxu0 0
        %1464 = vmatpush1.bf16.msra.mxu0 %v691
        %1465 = vmatprep.subr.bf16.mxu0 0
        %1466 = vmatpush1.bf16.msra.mxu0 %v692
        %1467 = vmatprep.subr.bf16.mxu0 0
        %1468 = vmatpush1.bf16.msra.mxu0 0
        %1469 = vmatprep.subr.bf16.mxu0 0
        %1470 = vmatpush1.bf16.msra.mxu0 0
        %1471 = vmatprep.subr.bf16.mxu0 0
        %1472 = vmatpush1.bf16.msra.mxu0 0
        %1473 = vmatprep.subr.bf16.mxu0 0
        %1474 = vmatpush1.bf16.msra.mxu0 0
        %1475 = vmatprep.subr.bf16.mxu0 0
        %1476 = vmatpush1.bf16.msra.mxu0 0
        %1477 = vmatprep.subr.bf16.mxu0 0
        %1478 = vmatpush1.bf16.msra.mxu0 0
        %1479 = vmatprep.subr.bf16.mxu0 0
        %1480 = vmatpush1.bf16.msra.mxu0 0
        %1481 = vmatprep.subr.bf16.mxu0 0
        %1482 = vmatpush1.bf16.msra.mxu0 0
        %1483 = vmatprep.subr.bf16.mxu0 0
        %1484 = vmatpush1.bf16.msra.mxu0 0
        %1485 = vmatprep.subr.bf16.mxu0 0
        %1486 = vmatpush1.bf16.msra.mxu0 0
        %1487 = vmatprep.subr.bf16.mxu0 0
        %1488 = vmatpush1.bf16.msra.mxu0 0
        %1489 = vmatprep.subr.bf16.mxu0 0
        %1490 = vmatpush1.bf16.msra.mxu0 0
        %1491 = vmatprep.subr.bf16.mxu0 0
        %1492 = vmatpush1.bf16.msra.mxu0 0
        %1493 = vmatprep.subr.bf16.mxu0 0
        %1494 = vmatpush1.bf16.msra.mxu0 0
        %1495 = vmatprep.mubr.bf16.mxu0 0
        %1496 = vmatmul.mubr.bf16.gmra.mrb[0].mxu0 %v1461
        %v1497 = vpop.f32.mrb[0].mxu0
        %v1498 = vadd.f32 %v1455, %v1497
        %v1499 = vpop.f32.mrb[0].mxu0
        %v1500 = vpop.f32.mrb[0].mxu0
        %v1501 = vpop.f32.mrb[0].mxu0
        %1502 = vdwg.mxu0
        %v1503 = vadd.f32 %v1498, %v610
        %v1504 = vpack.c.bf16 %v1397, %v1397
        %1506 = vrot.lane.b32.xlu0 %v1504, 64
        %v1507 = vpop.permute.xlu0 %1506
        %v1509 = vsel %vm639, %v1507, 0
        %1511 = vmatprep.subr.bf16.mxu0 0
        %1512 = vmatpush1.bf16.msra.mxu0 %v748
        %1513 = vmatprep.subr.bf16.mxu0 0
        %1514 = vmatpush1.bf16.msra.mxu0 %v749
        %1515 = vmatprep.subr.bf16.mxu0 0
        %1516 = vmatpush1.bf16.msra.mxu0 0
        %1517 = vmatprep.subr.bf16.mxu0 0
        %1518 = vmatpush1.bf16.msra.mxu0 0
        %1519 = vmatprep.subr.bf16.mxu0 0
        %1520 = vmatpush1.bf16.msra.mxu0 0
        %1521 = vmatprep.subr.bf16.mxu0 0
        %1522 = vmatpush1.bf16.msra.mxu0 0
        %1523 = vmatprep.subr.bf16.mxu0 0
        %1524 = vmatpush1.bf16.msra.mxu0 0
        %1525 = vmatprep.subr.bf16.mxu0 0
        %1526 = vmatpush1.bf16.msra.mxu0 0
        %1527 = vmatprep.subr.bf16.mxu0 0
        %1528 = vmatpush1.bf16.msra.mxu0 0
        %1529 = vmatprep.subr.bf16.mxu0 0
        %1530 = vmatpush1.bf16.msra.mxu0 0
        %1531 = vmatprep.subr.bf16.mxu0 0
        %1532 = vmatpush1.bf16.msra.mxu0 0
        %1533 = vmatprep.subr.bf16.mxu0 0
        %1534 = vmatpush1.bf16.msra.mxu0 0
        %1535 = vmatprep.subr.bf16.mxu0 0
        %1536 = vmatpush1.bf16.msra.mxu0 0
        %1537 = vmatprep.subr.bf16.mxu0 0
        %1538 = vmatpush1.bf16.msra.mxu0 0
        %1539 = vmatprep.subr.bf16.mxu0 0
        %1540 = vmatpush1.bf16.msra.mxu0 0
        %1541 = vmatprep.subr.bf16.mxu0 0
        %1542 = vmatpush1.bf16.msra.mxu0 0
        %1543 = vmatprep.mubr.bf16.mxu0 0
        %1544 = vmatmul.mubr.bf16.gmra.mrb[0].mxu0 %v1509
        %v1545 = vpop.f32.mrb[0].mxu0
        %v1546 = vadd.f32 0.0, %v1545
        %v1547 = vpop.f32.mrb[0].mxu0
        %v1548 = vpop.f32.mrb[0].mxu0
        %v1549 = vpop.f32.mrb[0].mxu0
        %1550 = vdwg.mxu0
        %v1552 = vsel %vm639, %v1412, 0
        %1554 = vmatprep.subr.bf16.mxu0 0
        %1555 = vmatpush1.bf16.msra.mxu0 %v803
        %1556 = vmatprep.subr.bf16.mxu0 0
        %1557 = vmatpush1.bf16.msra.mxu0 %v804
        %1558 = vmatprep.subr.bf16.mxu0 0
        %1559 = vmatpush1.bf16.msra.mxu0 0
        %1560 = vmatprep.subr.bf16.mxu0 0
        %1561 = vmatpush1.bf16.msra.mxu0 0
        %1562 = vmatprep.subr.bf16.mxu0 0
        %1563 = vmatpush1.bf16.msra.mxu0 0
        %1564 = vmatprep.subr.bf16.mxu0 0
        %1565 = vmatpush1.bf16.msra.mxu0 0
        %1566 = vmatprep.subr.bf16.mxu0 0
        %1567 = vmatpush1.bf16.msra.mxu0 0
        %1568 = vmatprep.subr.bf16.mxu0 0
        %1569 = vmatpush1.bf16.msra.mxu0 0
        %1570 = vmatprep.subr.bf16.mxu0 0
        %1571 = vmatpush1.bf16.msra.mxu0 0
        %1572 = vmatprep.subr.bf16.mxu0 0
        %1573 = vmatpush1.bf16.msra.mxu0 0
        %1574 = vmatprep.subr.bf16.mxu0 0
        %1575 = vmatpush1.bf16.msra.mxu0 0
        %1576 = vmatprep.subr.bf16.mxu0 0
        %1577 = vmatpush1.bf16.msra.mxu0 0
        %1578 = vmatprep.subr.bf16.mxu0 0
        %1579 = vmatpush1.bf16.msra.mxu0 0
        %1580 = vmatprep.subr.bf16.mxu0 0
        %1581 = vmatpush1.bf16.msra.mxu0 0
        %1582 = vmatprep.subr.bf16.mxu0 0
        %1583 = vmatpush1.bf16.msra.mxu0 0
        %1584 = vmatprep.subr.bf16.mxu0 0
        %1585 = vmatpush1.bf16.msra.mxu0 0
        %1586 = vmatprep.mubr.bf16.mxu0 0
        %1587 = vmatmul.mubr.bf16.gmra.mrb[0].mxu0 %v1552
        %v1588 = vpop.f32.mrb[0].mxu0
        %v1589 = vadd.f32 %v1546, %v1588
        %v1590 = vpop.f32.mrb[0].mxu0
        %v1591 = vpop.f32.mrb[0].mxu0
        %v1592 = vpop.f32.mrb[0].mxu0
        %1593 = vdwg.mxu0
        %v1594 = vadd.f32 %v1589, %v617
        %v1595 = vxor.u32 %v1503, 2147483648
        %v1596 = vmul.f32 %v1595, 1.442695
        %v1597 = vpow.pop %v1596
        %v1598 = vadd.f32 %v1597, 1.0
        %v1599 = vrcp.pop %v1598
        %v1600 = vmul.f32 1.0, %v1599
        %v1601 = vtanh.pop %v1503
        %v1602 = vmul.f32 %v1600, %v1367
        %1604 = vrot.lane.b32.xlu0 %v1601, 32
        %v1605 = vpop.permute.xlu0 %1604
        %v1607 = vmul.f32 %v1600, %v1605
        %1609 = vrot.lane.b32.xlu0 %v1607, 32
        %v1610 = vpop.permute.xlu0 %1609
        %v1612 = vadd.f32 %v1602, %v1610
        %v1613 = vtanh.pop %v1612
        %1615 = vrot.lane.b32.xlu0 %v1613, 32
        %v1616 = vpop.permute.xlu0 %1615
        %v1618 = vmul.f32 %v1600, %v1616
        %v1619 = vxor.u32 %v1594, 2147483648
        %v1620 = vmul.f32 %v1619, 1.442695
        %v1621 = vpow.pop %v1620
        %v1622 = vadd.f32 %v1621, 1.0
        %v1623 = vrcp.pop %v1622
        %v1624 = vmul.f32 1.0, %v1623
        %v1625 = vtanh.pop %v1594
        %v1626 = vmul.f32 %v1624, %v1391
        %1628 = vrot.lane.b32.xlu0 %v1625, 32
        %v1629 = vpop.permute.xlu0 %1628
        %v1631 = vmul.f32 %v1624, %v1629
        %1633 = vrot.lane.b32.xlu0 %v1631, 32
        %v1634 = vpop.permute.xlu0 %1633
        %v1636 = vadd.f32 %v1626, %v1634
        %v1637 = vtanh.pop %v1636
        %1639 = vrot.lane.b32.xlu0 %v1637, 32
        %v1640 = vpop.permute.xlu0 %1639
        %v1642 = vmul.f32 %v1624, %v1640
        %1644 = vrot.lane.b32.xlu0 %v1618, 64
        %v1645 = vpop.permute.xlu0 %1644
        %s1647 = scalar_lea.vmem %s550, 24 [#allocation12]
        %1648 = vst.msk [vmem:[%s1647] sm:$0xff] %vm639, %v1645
        %1650 = vrot.lane.b32.xlu0 %v1642, 64
        %v1651 = vpop.permute.xlu0 %1650
        %1653 = vst.msk [vmem:[%s557] sm:$0xff] %vm639, %v1651
        %1654 = vst.msk [vmem:[#allocation2] sm:$0xff] %vm639, %v1645
        %1656 = vrot.lane.b32.xlu0 %v1612, 96
        %v1657 = vpop.permute.xlu0 %1656
        %1659 = vst.msk [vmem:[#allocation3] sm:$0xff] %vm639, %v1657
        %1660 = vst.msk [vmem:[#allocation4] sm:$0xff] %vm639, %v1651
        %1662 = vrot.lane.b32.xlu0 %v1636, 96
        %v1663 = vpop.permute.xlu0 %1662
        %1665 = vst.msk [vmem:[#allocation5] sm:$0xff] %vm639, %v1663
        %p1666 = scmp.eq.s32.totalorder %s36, 1
        // Predicated region
        $region85: #{tpu_custom_call.1} parent=67 // pred_check
          %p1667 = pneg %p1666
        $region86: #{tpu_custom_call.1} parent=67 // pred_check_branch
          %1669 = sbr.rel (%p1667) target = $region88
        $region87: #{tpu_custom_call.1} parent=67 // pred_region
          %v1670 = vpack.c.bf16 %v1618, %v1618
          %v1671 = vld [vmem:[%s8] sm:$0xf]
          %v1672 = vld [vmem:[%s8 + $0x4] sm:$0xf]
          %v1673 = vld [vmem:[%s8 + $0x8] sm:$0xf]
          %v1674 = vld [vmem:[%s8 + $0xc] sm:$0xf]
          %v1675 = vpack.c.bf16 %v1642, %v1642
          %v1676 = vld [vmem:[%s8 + $0x10] sm:$0xf]
          %v1677 = vld [vmem:[%s8 + $0x14] sm:$0xf]
          %v1678 = vld [vmem:[%s8 + $0x18] sm:$0xf]
          %v1679 = vld [vmem:[%s8 + $0x1c] sm:$0xf]
          %1681 = vrot.lane.b32.xlu0 %v1675, 64
          %v1682 = vpop.permute.xlu0 %1681
          %v1687 = vunpack.c.l.b16 %v1676
          %v1688 = vunpack.c.l.b16 %v1677
          %v1689 = vunpack.c.l.b16 %v1678
          %v1690 = vunpack.c.l.b16 %v1679
          %v1691 = vpack.c.b16 %v1688, %v1687
          %v1692 = vpack.c.b16 %v1690, %v1689
          %v1696 = vsel %vm639, %v1682, 0
          %1698 = vmatprep.subr.bf16.mxu0 0
          %1699 = vmatpush1.bf16.msra.mxu0 %v1691
          %1700 = vmatprep.subr.bf16.mxu0 0
          %1701 = vmatpush1.bf16.msra.mxu0 %v1692
          %1702 = vmatprep.subr.bf16.mxu0 0
          %1703 = vmatpush1.bf16.msra.mxu0 0
          %1704 = vmatprep.subr.bf16.mxu0 0
          %1705 = vmatpush1.bf16.msra.mxu0 0
          %1706 = vmatprep.subr.bf16.mxu0 0
          %1707 = vmatpush1.bf16.msra.mxu0 0
          %1708 = vmatprep.subr.bf16.mxu0 0
          %1709 = vmatpush1.bf16.msra.mxu0 0
          %1710 = vmatprep.subr.bf16.mxu0 0
          %1711 = vmatpush1.bf16.msra.mxu0 0
          %1712 = vmatprep.subr.bf16.mxu0 0
          %1713 = vmatpush1.bf16.msra.mxu0 0
          %1714 = vmatprep.subr.bf16.mxu0 0
          %1715 = vmatpush1.bf16.msra.mxu0 0
          %1716 = vmatprep.subr.bf16.mxu0 0
          %1717 = vmatpush1.bf16.msra.mxu0 0
          %1718 = vmatprep.subr.bf16.mxu0 0
          %1719 = vmatpush1.bf16.msra.mxu0 0
          %1720 = vmatprep.subr.bf16.mxu0 0
          %1721 = vmatpush1.bf16.msra.mxu0 0
          %1722 = vmatprep.subr.bf16.mxu0 0
          %1723 = vmatpush1.bf16.msra.mxu0 0
          %1724 = vmatprep.subr.bf16.mxu0 0
          %1725 = vmatpush1.bf16.msra.mxu0 0
          %1726 = vmatprep.subr.bf16.mxu0 0
          %1727 = vmatpush1.bf16.msra.mxu0 0
          %1728 = vmatprep.subr.bf16.mxu0 0
          %1729 = vmatpush1.bf16.msra.mxu0 0
          %1730 = vmatprep.mubr.bf16.mxu0 0
          %1731 = vmatmul.mubr.bf16.gmra.mrb[0].mxu0 %v1696
          %v1732 = vpop.f32.mrb[0].mxu0
          %v1733 = vadd.f32 0.0, %v1732
          %v1734 = vpop.f32.mrb[0].mxu0
          %v1735 = vpop.f32.mrb[0].mxu0
          %v1736 = vpop.f32.mrb[0].mxu0
          %1737 = vdwg.mxu0
          %1739 = vrot.lane.b32.xlu0 %v1670, 64
          %v1740 = vpop.permute.xlu0 %1739
          %v1745 = vunpack.c.l.b16 %v1671
          %v1746 = vunpack.c.l.b16 %v1672
          %v1747 = vunpack.c.l.b16 %v1673
          %v1748 = vunpack.c.l.b16 %v1674
          %v1749 = vpack.c.b16 %v1746, %v1745
          %v1750 = vpack.c.b16 %v1748, %v1747
          %v1754 = vsel %vm639, %v1740, 0
          %1756 = vmatprep.subr.bf16.mxu0 0
          %1757 = vmatpush1.bf16.msra.mxu0 %v1749
          %1758 = vmatprep.subr.bf16.mxu0 0
          %1759 = vmatpush1.bf16.msra.mxu0 %v1750
          %1760 = vmatprep.subr.bf16.mxu0 0
          %1761 = vmatpush1.bf16.msra.mxu0 0
          %1762 = vmatprep.subr.bf16.mxu0 0
          %1763 = vmatpush1.bf16.msra.mxu0 0
          %1764 = vmatprep.subr.bf16.mxu0 0
          %1765 = vmatpush1.bf16.msra.mxu0 0
          %1766 = vmatprep.subr.bf16.mxu0 0
          %1767 = vmatpush1.bf16.msra.mxu0 0
          %1768 = vmatprep.subr.bf16.mxu0 0
          %1769 = vmatpush1.bf16.msra.mxu0 0
          %1770 = vmatprep.subr.bf16.mxu0 0
          %1771 = vmatpush1.bf16.msra.mxu0 0
          %1772 = vmatprep.subr.bf16.mxu0 0
          %1773 = vmatpush1.bf16.msra.mxu0 0
          %1774 = vmatprep.subr.bf16.mxu0 0
          %1775 = vmatpush1.bf16.msra.mxu0 0
          %1776 = vmatprep.subr.bf16.mxu0 0
          %1777 = vmatpush1.bf16.msra.mxu0 0
          %1778 = vmatprep.subr.bf16.mxu0 0
          %1779 = vmatpush1.bf16.msra.mxu0 0
          %1780 = vmatprep.subr.bf16.mxu0 0
          %1781 = vmatpush1.bf16.msra.mxu0 0
          %1782 = vmatprep.subr.bf16.mxu0 0
          %1783 = vmatpush1.bf16.msra.mxu0 0
          %1784 = vmatprep.subr.bf16.mxu0 0
          %1785 = vmatpush1.bf16.msra.mxu0 0
          %1786 = vmatprep.subr.bf16.mxu0 0
          %1787 = vmatpush1.bf16.msra.mxu0 0
          %1788 = vmatprep.mubr.bf16.mxu0 0
          %1789 = vmatmul.mubr.bf16.gmra.mrb[0].mxu0 %v1754
          %v1790 = vpop.f32.mrb[0].mxu0
          %v1791 = vadd.f32 %v1733, %v1790
          %v1792 = vpop.f32.mrb[0].mxu0
          %v1793 = vpop.f32.mrb[0].mxu0
          %v1794 = vpop.f32.mrb[0].mxu0
          %1795 = vdwg.mxu0
          %v1796 = vld [vmem:[%s9] sm:$0x1]
          %v1798 = vlaneseq
          %v1799 = vshrl.u32 %v1798, 7
          %v1800 = vsub.s32 0, %v1799
          %v1801 = vrot.slane %v1796, %v1800
          %v1803 = vadd.f32 %v1791, %v1801
          %1804 = vst.msk [vmem:[#allocation15] sm:$0xff] %vm639, %v1803
          %v1805 = vpack.c.bf16 %v1612, %v1612
          %v1806 = vld [vmem:[%s10] sm:$0xf]
          %v1807 = vld [vmem:[%s10 + $0x4] sm:$0xf]
          %v1808 = vld [vmem:[%s10 + $0x8] sm:$0xf]
          %v1809 = vld [vmem:[%s10 + $0xc] sm:$0xf]
          %v1810 = vpack.c.bf16 %v1636, %v1636
          %v1811 = vld [vmem:[%s10 + $0x10] sm:$0xf]
          %v1812 = vld [vmem:[%s10 + $0x14] sm:$0xf]
          %v1813 = vld [vmem:[%s10 + $0x18] sm:$0xf]
          %v1814 = vld [vmem:[%s10 + $0x1c] sm:$0xf]
          %1816 = vrot.lane.b32.xlu0 %v1810, 96
          %v1817 = vpop.permute.xlu0 %1816
          %v1822 = vunpack.c.l.b16 %v1811
          %v1823 = vunpack.c.l.b16 %v1812
          %v1824 = vunpack.c.l.b16 %v1813
          %v1825 = vunpack.c.l.b16 %v1814
          %v1826 = vpack.c.b16 %v1823, %v1822
          %v1827 = vpack.c.b16 %v1825, %v1824
          %v1831 = vsel %vm639, %v1817, 0
          %1833 = vmatprep.subr.bf16.mxu0 0
          %1834 = vmatpush1.bf16.msra.mxu0 %v1826
          %1835 = vmatprep.subr.bf16.mxu0 0
          %1836 = vmatpush1.bf16.msra.mxu0 %v1827
          %1837 = vmatprep.subr.bf16.mxu0 0
          %1838 = vmatpush1.bf16.msra.mxu0 0
          %1839 = vmatprep.subr.bf16.mxu0 0
          %1840 = vmatpush1.bf16.msra.mxu0 0
          %1841 = vmatprep.subr.bf16.mxu0 0
          %1842 = vmatpush1.bf16.msra.mxu0 0
          %1843 = vmatprep.subr.bf16.mxu0 0
          %1844 = vmatpush1.bf16.msra.mxu0 0
          %1845 = vmatprep.subr.bf16.mxu0 0
          %1846 = vmatpush1.bf16.msra.mxu0 0
          %1847 = vmatprep.subr.bf16.mxu0 0
          %1848 = vmatpush1.bf16.msra.mxu0 0
          %1849 = vmatprep.subr.bf16.mxu0 0
          %1850 = vmatpush1.bf16.msra.mxu0 0
          %1851 = vmatprep.subr.bf16.mxu0 0
          %1852 = vmatpush1.bf16.msra.mxu0 0
          %1853 = vmatprep.subr.bf16.mxu0 0
          %1854 = vmatpush1.bf16.msra.mxu0 0
          %1855 = vmatprep.subr.bf16.mxu0 0
          %1856 = vmatpush1.bf16.msra.mxu0 0
          %1857 = vmatprep.subr.bf16.mxu0 0
          %1858 = vmatpush1.bf16.msra.mxu0 0
          %1859 = vmatprep.subr.bf16.mxu0 0
          %1860 = vmatpush1.bf16.msra.mxu0 0
          %1861 = vmatprep.subr.bf16.mxu0 0
          %1862 = vmatpush1.bf16.msra.mxu0 0
          %1863 = vmatprep.subr.bf16.mxu0 0
          %1864 = vmatpush1.bf16.msra.mxu0 0
          %1865 = vmatprep.mubr.bf16.mxu0 0
          %1866 = vmatmul.mubr.bf16.gmra.mrb[0].mxu0 %v1831
          %v1867 = vpop.f32.mrb[0].mxu0
          %v1868 = vadd.f32 0.0, %v1867
          %v1869 = vpop.f32.mrb[0].mxu0
          %v1870 = vpop.f32.mrb[0].mxu0
          %v1871 = vpop.f32.mrb[0].mxu0
          %1872 = vdwg.mxu0
          %1874 = vrot.lane.b32.xlu0 %v1805, 96
          %v1875 = vpop.permute.xlu0 %1874
          %v1880 = vunpack.c.l.b16 %v1806
          %v1881 = vunpack.c.l.b16 %v1807
          %v1882 = vunpack.c.l.b16 %v1808
          %v1883 = vunpack.c.l.b16 %v1809
          %v1884 = vpack.c.b16 %v1881, %v1880
          %v1885 = vpack.c.b16 %v1883, %v1882
          %v1889 = vsel %vm639, %v1875, 0
          %1891 = vmatprep.subr.bf16.mxu0 0
          %1892 = vmatpush1.bf16.msra.mxu0 %v1884
          %1893 = vmatprep.subr.bf16.mxu0 0
          %1894 = vmatpush1.bf16.msra.mxu0 %v1885
          %1895 = vmatprep.subr.bf16.mxu0 0
          %1896 = vmatpush1.bf16.msra.mxu0 0
          %1897 = vmatprep.subr.bf16.mxu0 0
          %1898 = vmatpush1.bf16.msra.mxu0 0
          %1899 = vmatprep.subr.bf16.mxu0 0
          %1900 = vmatpush1.bf16.msra.mxu0 0
          %1901 = vmatprep.subr.bf16.mxu0 0
          %1902 = vmatpush1.bf16.msra.mxu0 0
          %1903 = vmatprep.subr.bf16.mxu0 0
          %1904 = vmatpush1.bf16.msra.mxu0 0
          %1905 = vmatprep.subr.bf16.mxu0 0
          %1906 = vmatpush1.bf16.msra.mxu0 0
          %1907 = vmatprep.subr.bf16.mxu0 0
          %1908 = vmatpush1.bf16.msra.mxu0 0
          %1909 = vmatprep.subr.bf16.mxu0 0
          %1910 = vmatpush1.bf16.msra.mxu0 0
          %1911 = vmatprep.subr.bf16.mxu0 0
          %1912 = vmatpush1.bf16.msra.mxu0 0
          %1913 = vmatprep.subr.bf16.mxu0 0
          %1914 = vmatpush1.bf16.msra.mxu0 0
          %1915 = vmatprep.subr.bf16.mxu0 0
          %1916 = vmatpush1.bf16.msra.mxu0 0
          %1917 = vmatprep.subr.bf16.mxu0 0
          %1918 = vmatpush1.bf16.msra.mxu0 0
          %1919 = vmatprep.subr.bf16.mxu0 0
          %1920 = vmatpush1.bf16.msra.mxu0 0
          %1921 = vmatprep.subr.bf16.mxu0 0
          %1922 = vmatpush1.bf16.msra.mxu0 0
          %1923 = vmatprep.mubr.bf16.mxu0 0
          %1924 = vmatmul.mubr.bf16.gmra.mrb[0].mxu0 %v1889
          %v1925 = vpop.f32.mrb[0].mxu0
          %v1926 = vadd.f32 %v1868, %v1925
          %v1927 = vpop.f32.mrb[0].mxu0
          %v1928 = vpop.f32.mrb[0].mxu0
          %v1929 = vpop.f32.mrb[0].mxu0
          %1930 = vdwg.mxu0
          %v1931 = vld [vmem:[%s11] sm:$0x1]
          %v1933 = vlaneseq
          %v1934 = vshrl.u32 %v1933, 7
          %v1935 = vsub.s32 0, %v1934
          %v1936 = vrot.slane %v1931, %v1935
          %v1938 = vadd.f32 %v1926, %v1936
          %1939 = vst.msk [vmem:[#allocation16] sm:$0xff] %vm639, %v1938
        $region88: #{tpu_custom_call.1} parent=67 // pred_fallthru
          _
        %s1940 = sand.u32 %s308, 1
        %s1941 = scalar_lea.sflag [#allocation8], %s1940
        %s1942 = sand.u32 %s308, 1
        %s1943 = smul.addr %s1942, 32
        %s1944 = scalar_lea.vmem [#allocation12], %s1943
        %s1945 = sand.u32 %s36, 1
        %s1946 = scalar_lea.sflag [#allocation14], %s1945
        %s1947 = sand.u32 %s336, 1
        %s1948 = smul.addr %s1947, 32
        %s1949 = scalar_lea.vmem [#allocation13], %s1948
        // Predicated region
        $region89: #{tpu_custom_call.1} parent=67 // pred_check
          %p1950 = pneg %p318
        $region90: #{tpu_custom_call.1} parent=67 // pred_check_branch
          %1952 = sbr.rel (%p1950) target = $region92
        $region91: #{tpu_custom_call.1} parent=67 // pred_region
          %s1953 = smul.u32 4, %s36
          %s1955 = ssub.s32 512, 512
          %1956 = vsyncadd %s1941, %s1955
          %s1957 = smul.addr %s1953, 128
          %s1958 = scalar_lea.hbm %s12, %s1957
          %s1959 = sshll.u32 %s1944, 4
          %s1960 = int_to_ptr.vmem [resolvable:$true] %s1959
          %1965 = dma.vmem_to_hbm [thread:$0]  %s1960, 512, %s1958, %s1941, 128, 128, 8
        $region92: #{tpu_custom_call.1} parent=67 // pred_fallthru
          _
        // Predicated region
        $region93: #{tpu_custom_call.1} parent=67 // pred_check
          %p1966 = pneg %p346
        $region94: #{tpu_custom_call.1} parent=67 // pred_check_branch
          %1968 = sbr.rel (%p1966) target = $region96
        $region95: #{tpu_custom_call.1} parent=67 // pred_region
          %s1969 = ssub.s32 1, %s36
          %s1970 = smul.u32 4, %s1969
          %s1972 = ssub.s32 512, 512
          %1973 = vsyncadd %s1946, %s1972
          %s1974 = smul.addr %s1970, 128
          %s1975 = scalar_lea.hbm %s13, %s1974
          %s1976 = sshll.u32 %s1949, 4
          %s1977 = int_to_ptr.vmem [resolvable:$true] %s1976
          %1982 = dma.vmem_to_hbm [thread:$0]  %s1977, 512, %s1975, %s1946, 128, 128, 8
        $region96: #{tpu_custom_call.1} parent=67 // pred_fallthru
          _
        // Predicated region
        $region97: #{tpu_custom_call.1} parent=67 // pred_check
          %p1983 = pneg %p367
        $region98: #{tpu_custom_call.1} parent=67 // pred_check_branch
          %1985 = sbr.rel (%p1983) target = $region100
        $region99: #{tpu_custom_call.1} parent=67 // pred_region
          %s1987 = ssub.s32 128, 128
          %1988 = vsyncadd [#allocation14], %s1987
          %s1990 = sshll.u32 [#allocation15], 4
          %s1991 = int_to_ptr.vmem [resolvable:$true] %s1990
          %1993 = dma.vmem_to_hbm [thread:$0]  %s1991, 128, %s14, [#allocation14]
        $region100: #{tpu_custom_call.1} parent=67 // pred_fallthru
          _
        // Predicated region
        $region101: #{tpu_custom_call.1} parent=67 // pred_check
          %p1994 = pneg %p388
        $region102: #{tpu_custom_call.1} parent=67 // pred_check_branch
          %1996 = sbr.rel (%p1994) target = $region104
        $region103: #{tpu_custom_call.1} parent=67 // pred_region
          %s1998 = ssub.s32 128, 128
          %1999 = vsyncadd [#allocation17], %s1998
          %s2001 = sshll.u32 [#allocation16], 4
          %s2002 = int_to_ptr.vmem [resolvable:$true] %s2001
          %2004 = dma.vmem_to_hbm [thread:$0]  %s2002, 128, %s15, [#allocation17]
        $region104: #{tpu_custom_call.1} parent=67 // pred_fallthru
          _
        // Predicated region
        $region105: #{tpu_custom_call.1} parent=67 // pred_check
          %p2005 = pneg %p367
        $region106: #{tpu_custom_call.1} parent=67 // pred_check_branch
          %2007 = sbr.rel (%p2005) target = $region108
        $region107: #{tpu_custom_call.1} parent=67 // pred_region
          %2008 = dma.done [#allocation14], 128
        $region108: #{tpu_custom_call.1} parent=67 // pred_fallthru
          _
        // Predicated region
        $region109: #{tpu_custom_call.1} parent=67 // pred_check
          %p2009 = pneg %p388
        $region110: #{tpu_custom_call.1} parent=67 // pred_check_branch
          %2011 = sbr.rel (%p2009) target = $region112
        $region111: #{tpu_custom_call.1} parent=67 // pred_region
          %2012 = dma.done [#allocation17], 128
        $region112: #{tpu_custom_call.1} parent=67 // pred_fallthru
          _
      $region68: #{tpu_custom_call.1} parent=5 // pred_fallthru
        _
      %p2013 = scmp.le.s32.totalorder 2, %s31
      // Predicated region
      $region113: #{tpu_custom_call.1} parent=5 // pred_check
        %p2014 = pneg %p2013
      $region114: #{tpu_custom_call.1} parent=5 // pred_check_branch
        %2016 = sbr.rel (%p2014) target = $region116
      $region115: #{tpu_custom_call.1} parent=5 // pred_region
        %s2017 = ssub.s32 %s31, 2
        // Predicated region
        $region117: #{tpu_custom_call.1} parent=115 // pred_check
          %p2018 = pneg %p324
        $region118: #{tpu_custom_call.1} parent=115 // pred_check_branch
          %2020 = sbr.rel (%p2018) target = $region120
        $region119: #{tpu_custom_call.1} parent=115 // pred_region
          %s2021 = sand.u32 %s309, 1
          %s2022 = scalar_lea.sflag [#allocation8], %s2021
          %s2023 = sand.u32 %s309, 1
          %s2024 = smul.addr %s2023, 32
          %s2025 = scalar_lea.vmem [#allocation12], %s2024
          %2026 = dma.done %s2022, 512
        $region120: #{tpu_custom_call.1} parent=115 // pred_fallthru
          _
        // Predicated region
        $region121: #{tpu_custom_call.1} parent=115 // pred_check
          %p2027 = pneg %p352
        $region122: #{tpu_custom_call.1} parent=115 // pred_check_branch
          %2029 = sbr.rel (%p2027) target = $region124
        $region123: #{tpu_custom_call.1} parent=115 // pred_region
          %s2030 = sand.u32 %s37, 1
          %s2031 = scalar_lea.sflag [#allocation14], %s2030
          %s2032 = sand.u32 %s337, 1
          %s2033 = smul.addr %s2032, 32
          %s2034 = scalar_lea.vmem [#allocation13], %s2033
          %2035 = dma.done %s2031, 512
        $region124: #{tpu_custom_call.1} parent=115 // pred_fallthru
          _
      $region116: #{tpu_custom_call.1} parent=5 // pred_fallthru
        _
    $region6: #{tpu_custom_call.1} parent=1 // loop_footer
      %s35 = sadd.s32 1, %s31
    $region7: #{tpu_custom_call.1} parent=1 // loop_footer_branch
      %30 = sbr.rel target = $region3
    $region8: #{tpu_custom_call.1} parent=1 // loop_exit
      _
    %2036 = vsyncpa [#allocation7], 1
    %s2037 = scalar_lea.sflag [#allocation7], 1
    %2038 = vsyncpa %s2037, 1
    %2039 = vsyncpa [#allocation10], 1
    %2040 = vsyncpa [#allocation8], 1
    %s2041 = scalar_lea.sflag [#allocation8], 1
    %2042 = vsyncpa %s2041, 1
    %2043 = vsyncpa [#allocation14], 1
    %s2044 = scalar_lea.sflag [#allocation14], 1
    %2045 = vsyncpa %s2044, 1
    %2046 = vsyncpa [#allocation17], 1

</llo_original>
